<compile_context>
chip_gen: v5e
topology: v5e:2x2
jax: 0.10.0
libtpu: 0.0.40
codegen_flags: <defaults>
</compile_context>

<pallas_src>
import jax
import jax.numpy as jnp
from jax import lax
from jax.experimental import pallas as pl
from jax.experimental.pallas import tpu as pltpu

LANE = 128
TILE_I = 256        # shape-2 (output/softmax) row tile
TILE_J_PB = 256     # shape-1 reduction tile (matches 256-wide MXU on v6e/v7x)
TILE_J_T21 = 512    # lane-dense output tile width for the dense T21 map
TILE_EMB = 512      # row tile for the emb1 = phi1 @ C12^T stream kernel
TILE_N2 = 256       # shape-2 vertex count padded to a multiple of this
TILE_N1 = 512       # shape-1 vertex count padded to a multiple of this
BIG = 1e30          # sentinel squared distance for padded shape-1 vertices
_VMEM_LIMIT = 32 * 1024 * 1024   # safe on v7x's 64 MiB VMEM as well


def _round_up(x, m):
    return ((x + m - 1) // m) * m


def _cdiv(a, b):
    return -(-a // b)


def _pad2(x, rows, cols):
    r, c = x.shape
    return jnp.pad(x, ((0, rows - r), (0, cols - c)))


# ----------------------------------------------------------------------------
# Kernel 1: fused pull_back + C12 partial projection (online softmax)
# ----------------------------------------------------------------------------
def _pull_back_c12_kernel(e2s_ref, e1_ref, sq1_ref, f1a_ref, phi2_ref, m2_ref,
                          o_ref, m_sc, acc_sc):
    j = pl.program_id(1)

    @pl.when(j == 0)
    def _():
        m_sc[...] = jnp.full_like(m_sc, -jnp.inf)
        acc_sc[...] = jnp.zeros_like(acc_sc)

    # s_ij = (2*emb2_i.emb1_j - ||emb1_j||^2)/blur^2 ; the 2/blur^2 and 1/blur^2
    # factors are folded into e2s / sq1 by the wrapper; ||emb2_i||^2 is dropped
    # (row softmax is shift-invariant).  Score matmul stays f32 (blur-scaled).
    s = lax.dot_general(e2s_ref[...], e1_ref[...], (((1,), (1,)), ((), ())),
                        preferred_element_type=jnp.float32) - sq1_ref[...]
    m_new = jnp.maximum(m_sc[...], s.max(axis=-1, keepdims=True))
    alpha = jnp.exp(m_sc[...] - m_new)
    p = jnp.exp(s - m_new).astype(jnp.bfloat16)
    # f1a carries a trailing ones column, so acc[:, -1] accumulates the softmax
    # denominator inside the same (bf16 MXU, f32 acc) matmul.
    acc_sc[...] = alpha * acc_sc[...] + jnp.dot(
        p, f1a_ref[...], preferred_element_type=jnp.float32)
    m_sc[...] = m_new

    @pl.when(j == pl.num_programs(1) - 1)
    def _():
        acc = acc_sc[...]
        kp = acc.shape[1]
        denom = acc[:, kp - 1:kp]
        pb = acc / denom                                        # exact divide
        w = (m2_ref[...] * pb).astype(jnp.bfloat16)             # mass-weighted
        o_ref[...] = lax.dot_general(                           # phi2^T @ w
            phi2_ref[...], w, (((0,), (0,)), ((), ())),
            preferred_element_type=jnp.float32)


def fused_pull_back_c12(e2s, e1, sq1, f1_aug, phi2_bf16, mass2_col):
    """C12 = phi2^T @ (mass2 * softmax_rows(scores) @ f1), fused + tiled."""
    n2p, de = e2s.shape
    n1p = e1.shape[0]
    kp = f1_aug.shape[1]
    ni = n2p // TILE_I
    partial = pl.pallas_call(
        _pull_back_c12_kernel,
        out_shape=jax.ShapeDtypeStruct((ni, kp, kp), jnp.float32),
        grid_spec=pltpu.PrefetchScalarGridSpec(
            num_scalar_prefetch=0,
            grid=(ni, n1p // TILE_J_PB),
            in_specs=[
                pl.BlockSpec((TILE_I, de), lambda i, j: (i, 0)),
                pl.BlockSpec((TILE_J_PB, de), lambda i, j: (j, 0)),
                pl.BlockSpec((1, TILE_J_PB), lambda i, j: (0, j)),
                pl.BlockSpec((TILE_J_PB, kp), lambda i, j: (j, 0)),
                pl.BlockSpec((TILE_I, kp), lambda i, j: (i, 0)),
                pl.BlockSpec((TILE_I, 1), lambda i, j: (i, 0)),
            ],
            out_specs=pl.BlockSpec((None, kp, kp), lambda i, j: (i, 0, 0)),
            scratch_shapes=[pltpu.VMEM((TILE_I, 1), jnp.float32),
                            pltpu.VMEM((TILE_I, kp), jnp.float32)]),
        compiler_params=pltpu.CompilerParams(
            dimension_semantics=("parallel", "arbitrary"),
            vmem_limit_bytes=_VMEM_LIMIT),
    )(e2s, e1, sq1, f1_aug, phi2_bf16, mass2_col)
    # Per-row-tile partials are summed in XLA (tiny: ni x kp x kp); keeping the
    # i axis "parallel" lets v7x shard it across its two TensorCores.
    return jnp.sum(partial, axis=0)


# ----------------------------------------------------------------------------
# Kernel 2: emb1 = evects1 @ C12_scaled^T   (C12 pre-scaled by 1/k2)
# ----------------------------------------------------------------------------
def _emb_kernel(phi1_ref, c12_ref, o_ref):
    o_ref[...] = lax.dot_general(phi1_ref[...], c12_ref[...],
                                 (((1,), (1,)), ((), ())),
                                 preferred_element_type=jnp.float32)


def emb_from_c12(phi1, c12_scaled):
    n1p, kp = phi1.shape
    return pl.pallas_call(
        _emb_kernel,
        out_shape=jax.ShapeDtypeStruct((n1p, kp), jnp.float32),
        grid_spec=pltpu.PrefetchScalarGridSpec(
            num_scalar_prefetch=0,
            grid=(n1p // TILE_EMB,),
            in_specs=[pl.BlockSpec((TILE_EMB, kp), lambda i: (i, 0)),
                      pl.BlockSpec((kp, kp), lambda i: (0, 0))],
            out_specs=pl.BlockSpec((TILE_EMB, kp), lambda i: (i, 0))),
        compiler_params=pltpu.CompilerParams(
            dimension_semantics=("parallel",),
            vmem_limit_bytes=_VMEM_LIMIT),
    )(phi1, c12_scaled)


# ----------------------------------------------------------------------------
# Kernels 3+4: dense T21 via two passes (row LSE, then exp(s - lse)) so the
# output map is tiled over both N2 and N1 (no full-N1-resident block).
# ----------------------------------------------------------------------------
def _lse_kernel(e2s_ref, e1_ref, sq1_ref, o_ref, m_sc, l_sc):
    j = pl.program_id(1)

    @pl.when(j == 0)
    def _():
        m_sc[...] = jnp.full_like(m_sc, -jnp.inf)
        l_sc[...] = jnp.zeros_like(l_sc)

    s = lax.dot_general(e2s_ref[...], e1_ref[...], (((1,), (1,)), ((), ())),
                        preferred_element_type=jnp.float32) - sq1_ref[...]
    m_new = jnp.maximum(m_sc[...], s.max(axis=-1, keepdims=True))
    l_sc[...] = jnp.exp(m_sc[...] - m_new) * l_sc[...] + \
        jnp.exp(s - m_new).sum(axis=-1, keepdims=True)
    m_sc[...] = m_new

    @pl.when(j == pl.num_programs(1) - 1)
    def _():
        o_ref[...] = m_sc[...] + jnp.log(l_sc[...])


def _t21_tile_kernel(e2s_ref, e1_ref, sq1_ref, lse_ref, o_ref):
    s = lax.dot_general(e2s_ref[...], e1_ref[...], (((1,), (1,)), ((), ())),
                        preferred_element_type=jnp.float32) - sq1_ref[...]
    o_ref[...] = jnp.exp(s - lse_ref[...])   # normalized via LSE subtraction


def _t21_normalize_call(e2s, e1, sq1, lse, out_rows, out_cols, ti, tj):
    de = e2s.shape[1]
    return pl.pallas_call(
        _t21_tile_kernel,
        out_shape=jax.ShapeDtypeStruct((out_rows, out_cols), jnp.float32),
        grid_spec=pltpu.PrefetchScalarGridSpec(
            num_scalar_prefetch=0,
            grid=(_cdiv(out_rows, ti), _cdiv(out_cols, tj)),
            in_specs=[pl.BlockSpec((ti, de), lambda i, j: (i, 0)),
                      pl.BlockSpec((tj, de), lambda i, j: (j, 0)),
                      pl.BlockSpec((1, tj), lambda i, j: (0, j)),
                      pl.BlockSpec((ti, 1), lambda i, j: (i, 0))],
            out_specs=pl.BlockSpec((ti, tj), lambda i, j: (i, j))),
        compiler_params=pltpu.CompilerParams(
            dimension_semantics=("parallel", "parallel"),
            vmem_limit_bytes=_VMEM_LIMIT),
    )(e2s, e1, sq1, lse)


def dense_t21(e2s, e1, sq1, n2, n1):
    n2p, de = e2s.shape
    n1p = e1.shape[0]
    lse = pl.pallas_call(
        _lse_kernel,
        out_shape=jax.ShapeDtypeStruct((n2p, 1), jnp.float32),
        grid_spec=pltpu.PrefetchScalarGridSpec(
            num_scalar_prefetch=0,
            grid=(n2p // TILE_I, n1p // TILE_J_PB),
            in_specs=[pl.BlockSpec((TILE_I, de), lambda i, j: (i, 0)),
                      pl.BlockSpec((TILE_J_PB, de), lambda i, j: (j, 0)),
                      pl.BlockSpec((1, TILE_J_PB), lambda i, j: (0, j))],
            out_specs=pl.BlockSpec((TILE_I, 1), lambda i, j: (i, 0)),
            scratch_shapes=[pltpu.VMEM((TILE_I, 1), jnp.float32),
                            pltpu.VMEM((TILE_I, 1), jnp.float32)]),
        compiler_params=pltpu.CompilerParams(
            dimension_semantics=("parallel", "arbitrary"),
            vmem_limit_bytes=_VMEM_LIMIT),
    )(e2s, e1, sq1)

    # Normalize pass: write the map at its EXACT (n2, n1) shape (lane-dense
    # 512-wide output tiles; ragged last blocks masked by Pallas) -> no
    # post-kernel [:n2, :n1] crop copy.  Small dims use full-dim blocks.
    if n2 >= TILE_I:
        ti, e2s_r, lse_r = TILE_I, e2s, lse
    else:
        ti, e2s_r, lse_r = n2, e2s[:n2], lse[:n2]
    if n1 >= TILE_J_T21:
        tj, e1_r, sq1_r = TILE_J_T21, e1, sq1
    else:
        tj, e1_r, sq1_r = n1, e1[:n1], sq1[:, :n1]
    try:
        return _t21_normalize_call(e2s_r, e1_r, sq1_r, lse_r, n2, n1, ti, tj)
    except Exception:
        # Fallback for Pallas versions without ragged (non-divisible) output
        # block support: padded output + crop (extra HBM copy).
        full = _t21_normalize_call(e2s, e1, sq1, lse, n2p, n1p,
                                   TILE_I, TILE_J_T21)
        return full[:n2, :n1]


# ----------------------------------------------------------------------------
# Module
# ----------------------------------------------------------------------------
class KernelZoomOut:
    """JAX/Pallas port of DiffZo's KernelZoomOut (default KernelDistMap path)."""

    def __init__(self, k_init=20, nit=2, step=10, blur=0.01, init_blur=1.0,
                 normalize=False, nn_only=False, precise=False, n_inner=1):
        # TODO(synk): nn_only / precise branches (EmbP2PMap / EmbPreciseMap)
        # are not implemented; only the default KernelDistMap path is supported.
        if nn_only or precise:
            raise NotImplementedError("nn_only / precise paths not supported")
        self.k_init = int(k_init)
        self.nit = int(nit)
        self.step = int(step)
        self.blur = float(blur)
        self.init_blur = float(init_blur)
        self.normalize = bool(normalize)
        self.n_inner = int(n_inner)

    @property
    def k_final(self):
        return self.k_init + self.nit * self.step

    def forward(self, F1, F2, evects1, evects2, mass2, return_T21=True,
                return_init=False):
        F1 = jnp.asarray(F1, jnp.float32)
        F2 = jnp.asarray(F2, jnp.float32)
        evects1 = jnp.asarray(evects1, jnp.float32)
        evects2 = jnp.asarray(evects2, jnp.float32)
        mass2 = jnp.asarray(mass2, jnp.float32)

        n1, d = F1.shape
        n2 = F2.shape[0]
        k_used = min(evects1.shape[1], evects2.shape[1], self.k_final)

        n1p = _round_up(n1, TILE_N1)
        n2p = _round_up(n2, TILE_N2)
        dp = _round_up(d, LANE)
        # Fixed lane-friendly spectral width (one compile for all ZoomOut
        # iterations); +1 reserves the trailing ones-column of f1.
        kp = _round_up(self.k_final + 1, LANE)

        f1p = _pad2(F1, n1p, dp)
        f2p = _pad2(F2, n2p, dp)
        phi1p = _pad2(evects1[:, :k_used], n1p, kp)
        phi2p = _pad2(evects2[:, :k_used], n2p, kp)
        mass2p = _pad2(mass2.reshape(-1, 1), n2p, 1)   # padded rows: mass 0

        # One-time bf16 operands (no per-iteration re-materialization of masked
        # eigenvector copies); k-masking is applied to the (kp, kp) C12 output.
        phi1_aug = phi1p.at[:, kp - 1].set(1.0).astype(jnp.bfloat16)
        phi2_bf16 = phi2p.astype(jnp.bfloat16)

        col = jnp.arange(kp)
        row1_valid = jnp.arange(n1p) < n1

        def col_mask(k):
            return (col < k).astype(jnp.float32)[None, :]

        def rc_mask(k):
            m = (col < k).astype(jnp.float32)
            return m[:, None] * m[None, :]

        def soft_map_operands(emb1, emb2, blur):
            if self.normalize:
                emb1 = emb1 / (jnp.linalg.norm(emb1, axis=-1, keepdims=True) + 1e-12)
                emb2 = emb2 / (jnp.linalg.norm(emb2, axis=-1, keepdims=True) + 1e-12)
            inv_b2 = 1.0 / (blur * blur)
            # Blur scaling folded into the operands once (O(N*D) in XLA)
            # instead of per (TILE_I x TILE_J) score tile inside the kernels.
            e2s = emb2 * (2.0 * inv_b2)
            sq1 = jnp.sum(emb1 * emb1, axis=-1) * inv_b2
            sq1 = jnp.where(row1_valid, sq1, BIG)[None, :]   # kill padded rows
            return e2s, emb1, sq1

        def compute_c12(emb1, emb2, blur, k):
            e2s, e1, sq1 = soft_map_operands(emb1, emb2, blur)
            c12 = fused_pull_back_c12(e2s, e1, sq1, phi1_aug, phi2_bf16, mass2p)
            # Zero rows/cols >= k (removes higher eigenfunctions, the padding
            # and the spurious denominator ones-column) -- tiny (kp, kp) op.
            return c12 * rc_mask(k)

        def embeddings(c12_pad, k):
            # emb1 = evects1[:, :k] @ C12^T / k at padded width; C12's rows and
            # cols >= k are zero, so emb1's columns >= k come out zero.
            emb1 = emb_from_c12(phi1p, c12_pad * (1.0 / k))
            emb2 = phi2p * (1.0 / k)
            if self.normalize:
                emb2 = emb2 * col_mask(k)   # exact norms in the normalize path
            return emb1, emb2

        k_curr = self.k_init
        c12 = compute_c12(f1p, f2p, self.init_blur, k_curr)
        c12_init = c12
        k_of_c12 = k_curr
        for _ in range(self.nit):
            k_curr = k_curr + self.step
            for _ in range(self.n_inner):
                emb1, emb2 = embeddings(c12, k_of_c12)
                c12 = compute_c12(emb1, emb2, self.blur, k_curr)
                k_of_c12 = k_curr

        c12_out = c12[:k_of_c12, :k_of_c12]
        c12_init_out = c12_init[:self.k_init, :self.k_init]

        if not return_T21:
            return [c12_init_out, c12_out] if return_init else c12_out

        emb1, emb2 = embeddings(c12, k_of_c12)
        e2s, e1, sq1 = soft_map_operands(emb1, emb2, self.blur)
        t21 = dense_t21(e2s, e1, sq1, n2, n1)

        if return_init:
            return ([c12_init_out, c12_out], t21)
        return (c12_out, t21)


# ----------------------------------------------------------------------------
# Pure-JAX f32 reference (for numerical validation of the kernels)
# ----------------------------------------------------------------------------
def _ref_softmap(emb1, emb2, blur, normalize=False):
    if normalize:
        emb1 = emb1 / (jnp.linalg.norm(emb1, axis=-1, keepdims=True) + 1e-12)
        emb2 = emb2 / (jnp.linalg.norm(emb2, axis=-1, keepdims=True) + 1e-12)
    d2 = (jnp.sum(emb2 * emb2, -1)[:, None] + jnp.sum(emb1 * emb1, -1)[None, :]
          - 2.0 * emb2 @ emb1.T)
    return jax.nn.softmax(-d2 / (blur * blur), axis=-1)


def _ref_forward(F1, F2, ev1, ev2, m2, k_init, nit, step, blur, init_blur,
                 n_inner=1):
    def c12_of(T, k):
        return ev2[:, :k].T @ (m2[:, None] * (T @ ev1[:, :k]))

    def t21_of(C):
        k2, k1 = C.shape
        emb1 = ev1[:, :k1] @ C.T / k2
        emb2 = ev2[:, :k2] / k2
        return _ref_softmap(emb1, emb2, blur)

    T = _ref_softmap(F1, F2, init_blur)
    k = k_init
    C = c12_of(T, k)
    C_init = C
    for _ in range(nit):
        k = k + step
        for _ in range(n_inner):
            T = t21_of(C)
            C = c12_of(T, k)
    T = t21_of(C)
    return C_init, C, T


if __name__ == "__main__":
    key = jax.random.PRNGKey(0)
    kF1, kF2, kE1, kE2, kM = jax.random.split(key, 5)

    # Non-multiple-of-tile vertex counts exercise the padding / ragged paths:
    #  N2=272 -> ragged 256-row output tail; N1=700 -> padded reduction tiles
    #  (incl. a fully-padded trailing tile) + ragged 512-column output tail.
    N1, N2, D, K = 700, 272, 32, 48
    F1 = jax.random.normal(kF1, (N1, D), jnp.float32)
    F2 = jax.random.normal(kF2, (N2, D), jnp.float32)
    evects1 = jax.random.normal(kE1, (N1, K), jnp.float32)
    evects2 = jax.random.normal(kE2, (N2, K), jnp.float32)
    mass2 = jax.random.uniform(kM, (N2,), jnp.float32, 0.5, 1.5) / N2

    model = KernelZoomOut(k_init=20, nit=2, step=10, blur=0.01, init_blur=1.0)
    (C12_init, C12), T21 = model.forward(F1, F2, evects1, evects2, mass2,
                                         return_T21=True, return_init=True)
    C12_init, C12, T21 = jax.block_until_ready((C12_init, C12, T21))

    # ---- structural checks --------------------------------------------------
    assert C12.shape == (model.k_final, model.k_final), C12.shape
    assert C12_init.shape == (model.k_init, model.k_init), C12_init.shape
    assert T21.shape == (N2, N1), T21.shape
    assert bool(jnp.all(jnp.isfinite(C12)))
    assert bool(jnp.all(jnp.isfinite(T21)))
    assert bool(jnp.all(T21 >= 0.0))
    # Soft-map rows are softmax-normalized -> sum to 1 over the valid columns.
    assert bool(jnp.allclose(jnp.sum(T21, axis=-1), 1.0, atol=1e-3))

    # ---- numerical checks against a pure-JAX f32 reference ------------------
    C12_init_ref, C12_ref, _ = _ref_forward(
        F1, F2, evects1, evects2, mass2, model.k_init, model.nit, model.step,
        model.blur, model.init_blur, model.n_inner)

    # Fused pull-back + projection kernel (init step, diffuse softmax).
    err_init = float(jnp.max(jnp.abs(C12_init - C12_init_ref)))
    assert err_init < 1e-2, f"C12_init max abs err {err_init}"

    # Full pipeline sanity (loose: the blur=0.01 soft map is near-argmax, so
    # tiny perturbations can redistribute borderline rows between pipelines).
    rel_f = float(jnp.linalg.norm(C12 - C12_ref) /
                  (jnp.linalg.norm(C12_ref) + 1e-12))
    assert rel_f < 0.5, f"C12 relative Frobenius err {rel_f}"

    # Dense-T21 (LSE + normalize) and emb kernels vs. the reference soft map
    # built from the kernel's own final C12 (isolates kernel-level error).
    kf = model.k_final
    emb1_r = evects1[:, :kf] @ C12.T / kf
    emb2_r = evects2[:, :kf] / kf
    T21_ref = _ref_softmap(emb1_r, emb2_r, model.blur)
    err_t21 = float(jnp.max(jnp.abs(T21 - T21_ref)))
    assert err_t21 < 5e-3, f"T21 max abs err {err_t21}"

    print("KERNEL_OK")
</pallas_src>

<mosaic_0001>
module attributes {stable_mosaic.version = 11 : i64} {
  func.func @_pull_back_c12_kernel(%arg0: i32, %arg1: i32, %arg2: memref<256x128xf32, #tpu.memory_space<vmem>>, %arg3: memref<256x128xf32, #tpu.memory_space<vmem>>, %arg4: memref<1x256xf32, #tpu.memory_space<vmem>>, %arg5: memref<256x128xbf16, #tpu.memory_space<vmem>>, %arg6: memref<256x128xbf16, #tpu.memory_space<vmem>>, %arg7: memref<256x1xf32, #tpu.memory_space<vmem>>, %arg8: memref<1x128x128xf32, #tpu.memory_space<vmem>>, %arg9: memref<256x1xf32, #tpu.memory_space<vmem>>, %arg10: memref<256x128xf32, #tpu.memory_space<vmem>>) attributes {dimension_semantics = [#tpu.dimension_semantics<parallel>, #tpu.dimension_semantics<arbitrary>], iteration_bounds = array<i64: 2, 4>, scalar_prefetch = 0 : i64, scratch_operands = 2 : i64, tpu.core_type = #tpu.core_type<tc>, window_params = [{transform_indices = @transform_0, window_bounds = array<i64: 256, 128>}, {transform_indices = @transform_1, window_bounds = array<i64: 256, 128>}, {transform_indices = @transform_2, window_bounds = array<i64: 1, 256>}, {transform_indices = @transform_3, window_bounds = array<i64: 256, 128>}, {transform_indices = @transform_4, window_bounds = array<i64: 256, 128>}, {transform_indices = @transform_5, window_bounds = array<i64: 256, 1>}, {transform_indices = @transform_6, window_bounds = array<i64: 1, 128, 128>}]} {
    %c0_i32 = arith.constant 0 : i32
    %0 = arith.cmpi eq, %arg1, %c0_i32 : i32
    %1 = arith.extui %0 : i1 to i32
    %c0_i32_0 = arith.constant 0 : i32
    %2 = arith.cmpi ne, %1, %c0_i32_0 : i32
    scf.if %2 {
      %cst_21 = arith.constant 0xFF800000 : f32
      %31 = vector.broadcast %cst_21 : f32 to vector<256x1xf32>
      %c0_22 = arith.constant 0 : index
      %c0_23 = arith.constant 0 : index
      %32 = vector.load %arg9[%c0_22, %c0_23] : memref<256x1xf32, #tpu.memory_space<vmem>>, vector<256x1xf32>
      tpu.vector_store %arg9[%c0_22, %c0_23], %31 {strides = array<i32>} : memref<256x1xf32, #tpu.memory_space<vmem>>, vector<256x1xf32>,
      %cst_24 = arith.constant 0.000000e+00 : f32
      %33 = vector.broadcast %cst_24 : f32 to vector<256x128xf32>
      %c0_25 = arith.constant 0 : index
      %c0_26 = arith.constant 0 : index
      %34 = vector.load %arg10[%c0_25, %c0_26] : memref<256x128xf32, #tpu.memory_space<vmem>>, vector<256x128xf32>
      tpu.vector_store %arg10[%c0_25, %c0_26], %33 {strides = array<i32>} : memref<256x128xf32, #tpu.memory_space<vmem>>, vector<256x128xf32>,
    } else {
    }
    %c0 = arith.constant 0 : index
    %c0_1 = arith.constant 0 : index
    %3 = vector.load %arg2[%c0, %c0_1] : memref<256x128xf32, #tpu.memory_space<vmem>>, vector<256x128xf32>
    %c0_2 = arith.constant 0 : index
    %c0_3 = arith.constant 0 : index
    %4 = vector.load %arg3[%c0_2, %c0_3] : memref<256x128xf32, #tpu.memory_space<vmem>>, vector<256x128xf32>
    %cst = arith.constant dense<0.000000e+00> : vector<256x256xf32>
    %5 = tpu.matmul %3, %4, %cst {dimension_numbers = #tpu.dot_dimension_numbers<[1], [1], [0], [0], [0, 0, 1, 0], [], []>} : vector<256x128xf32>, vector<256x128xf32>, vector<256x256xf32> -> vector<256x256xf32>
    %c0_4 = arith.constant 0 : index
    %c0_5 = arith.constant 0 : index
    %6 = vector.load %arg4[%c0_4, %c0_5] : memref<1x256xf32, #tpu.memory_space<vmem>>, vector<1x256xf32>
    %7 = vector.broadcast %6 : vector<1x256xf32> to vector<256x256xf32>
    %8 = arith.subf %5, %7 : vector<256x256xf32>
    %c0_6 = arith.constant 0 : index
    %c0_7 = arith.constant 0 : index
    %9 = vector.load %arg9[%c0_6, %c0_7] : memref<256x1xf32, #tpu.memory_space<vmem>>, vector<256x1xf32>
    %cst_8 = arith.constant dense<0xFF800000> : vector<256xf32>
    %10 = vector.multi_reduction <maximumf>, %8, %cst_8 [1] : vector<256x256xf32> to vector<256xf32>
    %11 = vector.shape_cast %10 : vector<256xf32> to vector<256x1xf32>
    %12 = arith.maximumf %9, %11 : vector<256x1xf32>
    %c0_9 = arith.constant 0 : index
    %c0_10 = arith.constant 0 : index
    %13 = vector.load %arg9[%c0_9, %c0_10] : memref<256x1xf32, #tpu.memory_space<vmem>>, vector<256x1xf32>
    %14 = arith.subf %13, %12 : vector<256x1xf32>
    %15 = math.exp %14 : vector<256x1xf32>
    %16 = vector.broadcast %12 : vector<256x1xf32> to vector<256x256xf32>
    %17 = arith.subf %8, %16 : vector<256x256xf32>
    %18 = math.exp %17 : vector<256x256xf32>
    %19 = arith.truncf %18 : vector<256x256xf32> to vector<256x256xbf16>
    %c0_11 = arith.constant 0 : index
    %c0_12 = arith.constant 0 : index
    %20 = vector.load %arg10[%c0_11, %c0_12] : memref<256x128xf32, #tpu.memory_space<vmem>>, vector<256x128xf32>
    %21 = vector.broadcast %15 : vector<256x1xf32> to vector<256x128xf32>
    %22 = arith.mulf %21, %20 : vector<256x128xf32>
    %c0_13 = arith.constant 0 : index
    %c0_14 = arith.constant 0 : index
    %23 = vector.load %arg5[%c0_13, %c0_14] : memref<256x128xbf16, #tpu.memory_space<vmem>>, vector<256x128xbf16>
    %cst_15 = arith.constant dense<0.000000e+00> : vector<256x128xf32>
    %24 = tpu.matmul %19, %23, %cst_15 {dimension_numbers = #tpu.dot_dimension_numbers<[1], [0], [0], [1], [0, 0, 1, 1], [], []>} : vector<256x256xbf16>, vector<256x128xbf16>, vector<256x128xf32> -> vector<256x128xf32>
    %25 = arith.addf %22, %24 : vector<256x128xf32>
    %c0_16 = arith.constant 0 : index
    %c0_17 = arith.constant 0 : index
    %26 = vector.load %arg10[%c0_16, %c0_17] : memref<256x128xf32, #tpu.memory_space<vmem>>, vector<256x128xf32>
    tpu.vector_store %arg10[%c0_16, %c0_17], %25 {strides = array<i32>} : memref<256x128xf32, #tpu.memory_space<vmem>>, vector<256x128xf32>,
    %c0_18 = arith.constant 0 : index
    %c0_19 = arith.constant 0 : index
    %27 = vector.load %arg9[%c0_18, %c0_19] : memref<256x1xf32, #tpu.memory_space<vmem>>, vector<256x1xf32>
    tpu.vector_store %arg9[%c0_18, %c0_19], %12 {strides = array<i32>} : memref<256x1xf32, #tpu.memory_space<vmem>>, vector<256x1xf32>,
    %c3_i32 = arith.constant 3 : i32
    %28 = arith.cmpi eq, %arg1, %c3_i32 : i32
    %29 = arith.extui %28 : i1 to i32
    %c0_i32_20 = arith.constant 0 : i32
    %30 = arith.cmpi ne, %29, %c0_i32_20 : i32
    scf.if %30 {
      %c0_21 = arith.constant 0 : index
      %c0_22 = arith.constant 0 : index
      %31 = vector.load %arg10[%c0_21, %c0_22] : memref<256x128xf32, #tpu.memory_space<vmem>>, vector<256x128xf32>
      %32 = vector.extract_strided_slice %31 {offsets = [0, 127], sizes = [256, 1], strides = [1, 1]} : vector<256x128xf32> to vector<256x1xf32>
      %33 = vector.broadcast %32 : vector<256x1xf32> to vector<256x128xf32>
      %34 = arith.divf %31, %33 : vector<256x128xf32>
      %c0_23 = arith.constant 0 : index
      %c0_24 = arith.constant 0 : index
      %35 = vector.load %arg7[%c0_23, %c0_24] : memref<256x1xf32, #tpu.memory_space<vmem>>, vector<256x1xf32>
      %36 = vector.broadcast %35 : vector<256x1xf32> to vector<256x128xf32>
      %37 = arith.mulf %36, %34 : vector<256x128xf32>
      %38 = arith.truncf %37 : vector<256x128xf32> to vector<256x128xbf16>
      %c0_25 = arith.constant 0 : index
      %c0_26 = arith.constant 0 : index
      %39 = vector.load %arg6[%c0_25, %c0_26] : memref<256x128xbf16, #tpu.memory_space<vmem>>, vector<256x128xbf16>
      %cst_27 = arith.constant dense<0.000000e+00> : vector<128x128xf32>
      %40 = tpu.matmul %39, %38, %cst_27 {dimension_numbers = #tpu.dot_dimension_numbers<[0], [0], [1], [1], [0, 1, 1, 1], [], []>} : vector<256x128xbf16>, vector<256x128xbf16>, vector<128x128xf32> -> vector<128x128xf32>
      %c0_28 = arith.constant 0 : index
      %c0_29 = arith.constant 0 : index
      %c0_30 = arith.constant 0 : index
      %41 = vector.load %arg8[%c0_28, %c0_29, %c0_30] : memref<1x128x128xf32, #tpu.memory_space<vmem>>, vector<1x128x128xf32>
      %42 = vector.shape_cast %41 : vector<1x128x128xf32> to vector<128x128xf32>
      %43 = vector.shape_cast %40 : vector<128x128xf32> to vector<1x128x128xf32>
      tpu.vector_store %arg8[%c0_28, %c0_29, %c0_30], %43 {strides = array<i32>} : memref<1x128x128xf32, #tpu.memory_space<vmem>>, vector<1x128x128xf32>,
    } else {
    }
    return
  }
  func.func @transform_0(%arg0: i32, %arg1: i32) -> (i32, i32) {
    %c0_i32 = arith.constant 0 : i32
    %c0_i32_0 = arith.constant 0 : i32
    return %arg0, %c0_i32 : i32, i32
  }
  func.func @transform_1(%arg0: i32, %arg1: i32) -> (i32, i32) {
    %c0_i32 = arith.constant 0 : i32
    %c0_i32_0 = arith.constant 0 : i32
    return %arg1, %c0_i32 : i32, i32
  }
  func.func @transform_2(%arg0: i32, %arg1: i32) -> (i32, i32) {
    %c0_i32 = arith.constant 0 : i32
    %c0_i32_0 = arith.constant 0 : i32
    return %c0_i32, %arg1 : i32, i32
  }
  func.func @transform_3(%arg0: i32, %arg1: i32) -> (i32, i32) {
    %c0_i32 = arith.constant 0 : i32
    %c0_i32_0 = arith.constant 0 : i32
    return %arg1, %c0_i32 : i32, i32
  }
  func.func @transform_4(%arg0: i32, %arg1: i32) -> (i32, i32) {
    %c0_i32 = arith.constant 0 : i32
    %c0_i32_0 = arith.constant 0 : i32
    return %arg0, %c0_i32 : i32, i32
  }
  func.func @transform_5(%arg0: i32, %arg1: i32) -> (i32, i32) {
    %c0_i32 = arith.constant 0 : i32
    %c0_i32_0 = arith.constant 0 : i32
    return %arg0, %c0_i32 : i32, i32
  }
  func.func @transform_6(%arg0: i32, %arg1: i32) -> (i32, i32, i32) {
    %c0_i32 = arith.constant 0 : i32
    %c0_i32_0 = arith.constant 0 : i32
    %c0_i32_1 = arith.constant 0 : i32
    return %arg0, %c0_i32, %c0_i32_0 : i32, i32, i32
  }
}

</mosaic_0001>

<llo_original>
// kernel: tpu_custom_call.1
$region0: #{tpu_custom_call.1}
  #allocation0 [shape = 'u32[]', space=smem, size = 0x4, offset = 0x4, fixed_abs, tag = 'smem constant byte address 0x4 - core index']
  #allocation1 [shape = 'u32[72,128]{1,0:T(1,128)}', space=vmem, size = 0x9000, scoped, tag = 'internal scratch']
  #allocation2 [shape = 'f32[256,1]{1,0:T(8,128)}', space=vmem, size = 0x20000, scoped, tag = 'scratch operand']
  #allocation3 [shape = 'f32[256,128]{1,0:T(8,128)}', space=vmem, size = 0x20000, scoped, tag = 'scratch operand']
  %s0 = inlined_call_operand.vmem [shape: f32[512,128], index: 0, kind: input, shape index: {}]
  %s1 = inlined_call_operand.hbm [shape: f32[1024,128], index: 1, kind: input, shape index: {}]
  %s2 = inlined_call_operand.hbm [shape: f32[1,1024], index: 2, kind: input, shape index: {}]
  %s3 = inlined_call_operand.hbm [shape: bf16[1024,128], index: 3, kind: input, shape index: {}]
  %s4 = inlined_call_operand.hbm [shape: bf16[512,128], index: 4, kind: input, shape index: {}]
  %s5 = inlined_call_operand.vmem [shape: f32[512,1], index: 5, kind: input, shape index: {}]
  %s6 = inlined_call_operand.hbm [shape: f32[2,128,128], index: 6, kind: output, shape index: {}]
  %s7 = sld [smem:[#allocation0]]
  $region81: #{tpu_custom_call.1} parent=0
    _
  %s9 = ssub.s32 1, %s7
  %s10 = scalar_select 0, %s9, %s7
  $region1: #{tpu_custom_call.1} parent=0
    #allocation4 [shape = 'u8[262144]{0}', space=vmem, size = 0x40000, scoped, tag = 'input window, operand 1']
    #allocation5 [shape = 's32[2]{0}', space=sflag, size = 0x8, scoped, tag = 'scoped memory for tpu_custom_call.1']
    #allocation6 [shape = 's32[2]{0}', space=sflag, size = 0x8, scoped, tag = 'scoped memory for tpu_custom_call.1']
    #allocation7 [shape = 'u8[2048]{0}', space=vmem, size = 0x800, scoped, tag = 'input window, operand 2']
    #allocation8 [shape = 's32[2]{0}', space=sflag, size = 0x8, scoped, tag = 'scoped memory for tpu_custom_call.1']
    #allocation9 [shape = 'u8[131072]{0}', space=vmem, size = 0x20000, scoped, tag = 'input window, operand 3']
    #allocation10 [shape = 'u8[131072]{0}', space=vmem, size = 0x20000, scoped, tag = 'input window, operand 4']
    #allocation11 [shape = 's32[2]{0}', space=sflag, size = 0x8, scoped, tag = 'scoped memory for tpu_custom_call.1']
    #allocation12 [shape = 'u8[131072]{0}', space=vmem, size = 0x20000, scoped, tag = 'output window, operand 0']
    %11 = vsyncpa [#allocation5], 0
    %s12 = scalar_lea.sflag [#allocation5], 1
    %13 = vsyncpa %s12, 0
    %14 = vsyncpa [#allocation8], 0
    %s15 = scalar_lea.sflag [#allocation8], 1
    %16 = vsyncpa %s15, 0
    %17 = vsyncpa [#allocation11], 0
    %s18 = scalar_lea.sflag [#allocation11], 1
    %19 = vsyncpa %s18, 0
    %20 = vsyncpa [#allocation6], 0
    %s21 = scalar_lea.sflag [#allocation6], 1
    %22 = vsyncpa %s21, 0
    loop: start=0, step=1, limit=10
    $region2: #{tpu_custom_call.1} parent=1 // loop_pre_header
      _
    $region3: #{tpu_custom_call.1} parent=1 // loop_header
      %s24 = sphi 0, %s28
      %p25 = scmp.ge.s32.totalorder %s24, 10
      %s31 = sphi 0, %s43
      %s32 = sphi 0, %s39
      %s33 = sphi 0, %s31
      %s34 = sphi 0, %s32
      %s35 = sphi 0, %s33
      %s36 = sphi 0, %s34
      %s46 = sphi 0, %s48
      %s49 = sphi 0, %s46
      %s50 = sphi 0, %s49
      %s66 = sphi 0, %s50
      %s72 = sphi 0, %s74
      %s75 = sphi 0, %s72
      %s76 = sphi 0, %s75
      %s92 = sphi 0, %s76
      %s98 = sphi 0, %s100
      %s101 = sphi 0, %s98
      %s102 = sphi 0, %s101
      %s118 = sphi 0, %s102
      %s124 = sphi 0, %s126
      %s127 = sphi 0, %s124
      %s128 = sphi 0, %s127
      %s144 = sphi 0, %s128
      %s150 = sphi 0, %s152
      %s153 = sphi 0, %s150
      %s154 = sphi 0, %s153
      %s170 = sphi 0, %s154
      %s176 = sphi 0, %s178
      %s179 = sphi 0, %s176
      %s180 = sphi 0, %s179
      %s196 = sphi 0, %s180
      %s202 = sphi 0, %s204
      %s205 = sphi 0, %s202
      %s206 = sphi 0, %s205
      %s222 = sphi 0, %s206
    $region4: #{tpu_custom_call.1} parent=1 // loop_header_branch
      %27 = sbr.rel (%p25) target = $region8
    $region5: #{tpu_custom_call.1} parent=1 // loop_body
      %s29 = ssub.s32 %s24, 1
      %s30 = ssub.s32 %s24, 2
      %s37 = sadd.s32 1, %s32
      %p38 = scmp.ge.s32.totalorder %s37, 4
      %s39 = scalar_select %p38, 0, %s37
      %s40 = sadd.s32 1, %s31
      %s41 = scalar_select %p38, %s40, %s31
      %p42 = scmp.ge.s32.totalorder %s41, 2
      %s43 = scalar_select %p42, 0, %s41
      %s44 = ssub.s32 %s31, %s43
      %p45 = scmp.eq.s32.totalorder %s44, 0
      %s47 = sadd.s32 %s46, 1
      %s48 = scalar_select %p45, %s46, %s47
      %p51 = pneg %p45
      %p52 = scmp.eq.s32.totalorder %s24, 7
      %p53 = por %p51, %p52
      %p54 = scmp.ne.s32.totalorder %s46, %s49
      %p55 = scmp.eq.s32.totalorder %s24, 0
      %p56 = por %p54, %p55
      %p57 = scmp.ne.s32.totalorder %s46, %s49
      %p58 = scmp.eq.s32.totalorder %s29, 7
      %p59 = por %p57, %p58
      %p60 = scmp.ne.s32.totalorder %s49, %s50
      %p61 = scmp.eq.s32.totalorder %s29, 0
      %p62 = por %p60, %p61
      %p63 = scmp.ne.s32.totalorder %s49, %s50
      %p64 = scmp.eq.s32.totalorder %s30, 7
      %p65 = por %p63, %p64
      %p67 = scmp.ne.s32.totalorder %s50, %s66
      %p68 = scmp.eq.s32.totalorder %s30, 0
      %p69 = por %p67, %p68
      %s70 = ssub.s32 %s32, %s39
      %p71 = scmp.eq.s32.totalorder %s70, 0
      %s73 = sadd.s32 %s72, 1
      %s74 = scalar_select %p71, %s72, %s73
      %p77 = pneg %p71
      %p78 = scmp.eq.s32.totalorder %s24, 7
      %p79 = por %p77, %p78
      %p80 = scmp.ne.s32.totalorder %s72, %s75
      %p81 = scmp.eq.s32.totalorder %s24, 0
      %p82 = por %p80, %p81
      %p83 = scmp.ne.s32.totalorder %s72, %s75
      %p84 = scmp.eq.s32.totalorder %s29, 7
      %p85 = por %p83, %p84
      %p86 = scmp.ne.s32.totalorder %s75, %s76
      %p87 = scmp.eq.s32.totalorder %s29, 0
      %p88 = por %p86, %p87
      %p89 = scmp.ne.s32.totalorder %s75, %s76
      %p90 = scmp.eq.s32.totalorder %s30, 7
      %p91 = por %p89, %p90
      %p93 = scmp.ne.s32.totalorder %s76, %s92
      %p94 = scmp.eq.s32.totalorder %s30, 0
      %p95 = por %p93, %p94
      %s96 = ssub.s32 %s32, %s39
      %p97 = scmp.eq.s32.totalorder %s96, 0
      %s99 = sadd.s32 %s98, 1
      %s100 = scalar_select %p97, %s98, %s99
      %p103 = pneg %p97
      %p104 = scmp.eq.s32.totalorder %s24, 7
      %p105 = por %p103, %p104
      %p106 = scmp.ne.s32.totalorder %s98, %s101
      %p107 = scmp.eq.s32.totalorder %s24, 0
      %p108 = por %p106, %p107
      %p109 = scmp.ne.s32.totalorder %s98, %s101
      %p110 = scmp.eq.s32.totalorder %s29, 7
      %p111 = por %p109, %p110
      %p112 = scmp.ne.s32.totalorder %s101, %s102
      %p113 = scmp.eq.s32.totalorder %s29, 0
      %p114 = por %p112, %p113
      %p115 = scmp.ne.s32.totalorder %s101, %s102
      %p116 = scmp.eq.s32.totalorder %s30, 7
      %p117 = por %p115, %p116
      %p119 = scmp.ne.s32.totalorder %s102, %s118
      %p120 = scmp.eq.s32.totalorder %s30, 0
      %p121 = por %p119, %p120
      %s122 = ssub.s32 %s32, %s39
      %p123 = scmp.eq.s32.totalorder %s122, 0
      %s125 = sadd.s32 %s124, 1
      %s126 = scalar_select %p123, %s124, %s125
      %p129 = pneg %p123
      %p130 = scmp.eq.s32.totalorder %s24, 7
      %p131 = por %p129, %p130
      %p132 = scmp.ne.s32.totalorder %s124, %s127
      %p133 = scmp.eq.s32.totalorder %s24, 0
      %p134 = por %p132, %p133
      %p135 = scmp.ne.s32.totalorder %s124, %s127
      %p136 = scmp.eq.s32.totalorder %s29, 7
      %p137 = por %p135, %p136
      %p138 = scmp.ne.s32.totalorder %s127, %s128
      %p139 = scmp.eq.s32.totalorder %s29, 0
      %p140 = por %p138, %p139
      %p141 = scmp.ne.s32.totalorder %s127, %s128
      %p142 = scmp.eq.s32.totalorder %s30, 7
      %p143 = por %p141, %p142
      %p145 = scmp.ne.s32.totalorder %s128, %s144
      %p146 = scmp.eq.s32.totalorder %s30, 0
      %p147 = por %p145, %p146
      %s148 = ssub.s32 %s31, %s43
      %p149 = scmp.eq.s32.totalorder %s148, 0
      %s151 = sadd.s32 %s150, 1
      %s152 = scalar_select %p149, %s150, %s151
      %p155 = pneg %p149
      %p156 = scmp.eq.s32.totalorder %s24, 7
      %p157 = por %p155, %p156
      %p158 = scmp.ne.s32.totalorder %s150, %s153
      %p159 = scmp.eq.s32.totalorder %s24, 0
      %p160 = por %p158, %p159
      %p161 = scmp.ne.s32.totalorder %s150, %s153
      %p162 = scmp.eq.s32.totalorder %s29, 7
      %p163 = por %p161, %p162
      %p164 = scmp.ne.s32.totalorder %s153, %s154
      %p165 = scmp.eq.s32.totalorder %s29, 0
      %p166 = por %p164, %p165
      %p167 = scmp.ne.s32.totalorder %s153, %s154
      %p168 = scmp.eq.s32.totalorder %s30, 7
      %p169 = por %p167, %p168
      %p171 = scmp.ne.s32.totalorder %s154, %s170
      %p172 = scmp.eq.s32.totalorder %s30, 0
      %p173 = por %p171, %p172
      %s174 = ssub.s32 %s31, %s43
      %p175 = scmp.eq.s32.totalorder %s174, 0
      %s177 = sadd.s32 %s176, 1
      %s178 = scalar_select %p175, %s176, %s177
      %p181 = pneg %p175
      %p182 = scmp.eq.s32.totalorder %s24, 7
      %p183 = por %p181, %p182
      %p184 = scmp.ne.s32.totalorder %s176, %s179
      %p185 = scmp.eq.s32.totalorder %s24, 0
      %p186 = por %p184, %p185
      %p187 = scmp.ne.s32.totalorder %s176, %s179
      %p188 = scmp.eq.s32.totalorder %s29, 7
      %p189 = por %p187, %p188
      %p190 = scmp.ne.s32.totalorder %s179, %s180
      %p191 = scmp.eq.s32.totalorder %s29, 0
      %p192 = por %p190, %p191
      %p193 = scmp.ne.s32.totalorder %s179, %s180
      %p194 = scmp.eq.s32.totalorder %s30, 7
      %p195 = por %p193, %p194
      %p197 = scmp.ne.s32.totalorder %s180, %s196
      %p198 = scmp.eq.s32.totalorder %s30, 0
      %p199 = por %p197, %p198
      %s200 = ssub.s32 %s31, %s43
      %p201 = scmp.eq.s32.totalorder %s200, 0
      %s203 = sadd.s32 %s202, 1
      %s204 = scalar_select %p201, %s202, %s203
      %p207 = pneg %p201
      %p208 = scmp.eq.s32.totalorder %s24, 7
      %p209 = por %p207, %p208
      %p210 = scmp.ne.s32.totalorder %s202, %s205
      %p211 = scmp.eq.s32.totalorder %s24, 0
      %p212 = por %p210, %p211
      %p213 = scmp.ne.s32.totalorder %s202, %s205
      %p214 = scmp.eq.s32.totalorder %s29, 7
      %p215 = por %p213, %p214
      %p216 = scmp.ne.s32.totalorder %s205, %s206
      %p217 = scmp.eq.s32.totalorder %s29, 0
      %p218 = por %p216, %p217
      %p219 = scmp.ne.s32.totalorder %s205, %s206
      %p220 = scmp.eq.s32.totalorder %s30, 7
      %p221 = por %p219, %p220
      %p223 = scmp.ne.s32.totalorder %s206, %s222
      %p224 = scmp.eq.s32.totalorder %s30, 0
      %p225 = por %p223, %p224
      %p226 = scmp.le.s32.totalorder 1, %s24
      %p227 = scmp.lt.s32.totalorder %s24, 9
      %p228 = pnand %p226, %p227
      %p229 = pneg %p228
      // Predicated region
      $region9: #{tpu_custom_call.1} parent=5 // pred_check
        _
      $region10: #{tpu_custom_call.1} parent=5 // pred_check_branch
        %231 = sbr.rel (%p228) target = $region12
      $region11: #{tpu_custom_call.1} parent=5 // pred_region
        %s232 = ssub.s32 %s24, 1
      $region12: #{tpu_custom_call.1} parent=5 // pred_fallthru
        _
      %p233 = scmp.lt.s32.totalorder %s24, 8
      // Predicated region
      $region13: #{tpu_custom_call.1} parent=5 // pred_check
        %p234 = pneg %p233
      $region14: #{tpu_custom_call.1} parent=5 // pred_check_branch
        %236 = sbr.rel (%p234) target = $region16
      $region15: #{tpu_custom_call.1} parent=5 // pred_region
        // Predicated region
        $region17: #{tpu_custom_call.1} parent=15 // pred_check
          %p237 = pneg %p56
        $region18: #{tpu_custom_call.1} parent=15 // pred_check_branch
          %239 = sbr.rel (%p237) target = $region20
        $region19: #{tpu_custom_call.1} parent=15 // pred_region
          %s240 = smul.u32 32, %s31
          %p241 = scmp.lt.s32.totalorder %s240, 63
          %s242 = scalar_select %p241, %s240, 63
          %s243 = smul.addr %s242, 8
          %s244 = scalar_lea.vmem %s0, %s243
          %s245 = smul.u32 32, %s31
        $region20: #{tpu_custom_call.1} parent=15 // pred_fallthru
          _
        // Predicated region
        $region21: #{tpu_custom_call.1} parent=15 // pred_check
          %p246 = pneg %p82
        $region22: #{tpu_custom_call.1} parent=15 // pred_check_branch
          %248 = sbr.rel (%p246) target = $region24
        $region23: #{tpu_custom_call.1} parent=15 // pred_region
          %s249 = sand.u32 %s72, 1
          %s250 = scalar_lea.sflag [#allocation5], %s249
          %s251 = sand.u32 %s72, 1
          %s252 = smul.addr %s251, 256
          %s253 = scalar_lea.vmem [#allocation4], %s252
          %s254 = smul.u32 32, %s32
          %256 = vsyncadd %s250, 0
          %s257 = smul.addr %s254, 8
          %s258 = scalar_lea.hbm %s1, %s257
          %s259 = sshll.u32 %s258, 4
          %s260 = int_to_ptr.hbm [resolvable:$true] %s259
          %s261 = sshll.u32 %s253, 4
          %s262 = int_to_ptr.vmem [resolvable:$true] %s261
          %267 = dma.hbm_to_vmem [thread:$0]  %s260, 4096, %s262, %s250, 128, 128, 8
        $region24: #{tpu_custom_call.1} parent=15 // pred_fallthru
          _
        // Predicated region
        $region25: #{tpu_custom_call.1} parent=15 // pred_check
          %p268 = pneg %p108
        $region26: #{tpu_custom_call.1} parent=15 // pred_check_branch
          %270 = sbr.rel (%p268) target = $region28
        $region27: #{tpu_custom_call.1} parent=15 // pred_region
          %s271 = sand.u32 %s24, 1
          %s272 = scalar_lea.sflag [#allocation8], %s271
          %s273 = sand.u32 %s98, 1
          %s274 = smul.addr %s273, 2
          %s275 = scalar_lea.vmem [#allocation7], %s274
          %s276 = smul.u32 2, %s32
          %278 = vsyncadd %s272, 0
          %s279 = scalar_lea.hbm %s2, %s276
          %s281 = sshll.u32 %s279, 4
          %s282 = int_to_ptr.hbm [resolvable:$true] %s281
          %s283 = sshll.u32 %s275, 4
          %s284 = int_to_ptr.vmem [resolvable:$true] %s283
          %286 = dma.hbm_to_vmem [thread:$0]  %s282, 32, %s284, %s272
        $region28: #{tpu_custom_call.1} parent=15 // pred_fallthru
          _
        // Predicated region
        $region29: #{tpu_custom_call.1} parent=15 // pred_check
          %p287 = pneg %p134
        $region30: #{tpu_custom_call.1} parent=15 // pred_check_branch
          %289 = sbr.rel (%p287) target = $region32
        $region31: #{tpu_custom_call.1} parent=15 // pred_region
          %s290 = sand.u32 %s24, 1
          %s291 = scalar_lea.sflag [#allocation8], %s290
          %s292 = sand.u32 %s124, 1
          %s293 = smul.addr %s292, 128
          %s294 = scalar_lea.vmem [#allocation9], %s293
          %s295 = smul.u32 32, %s32
          %297 = vsyncadd %s291, 0
          %s298 = smul.addr %s295, 4
          %s299 = scalar_lea.hbm %s3, %s298
          %s300 = sshll.u32 %s299, 4
          %s301 = int_to_ptr.hbm [resolvable:$true] %s300
          %s302 = sshll.u32 %s294, 4
          %s303 = int_to_ptr.vmem [resolvable:$true] %s302
          %308 = dma.hbm_to_vmem [thread:$0]  %s301, 2048, %s303, %s291, 64, 64, 4
        $region32: #{tpu_custom_call.1} parent=15 // pred_fallthru
          _
        // Predicated region
        $region33: #{tpu_custom_call.1} parent=15 // pred_check
          %p309 = pneg %p160
        $region34: #{tpu_custom_call.1} parent=15 // pred_check_branch
          %311 = sbr.rel (%p309) target = $region36
        $region35: #{tpu_custom_call.1} parent=15 // pred_region
          %s312 = sand.u32 %s150, 1
          %s313 = scalar_lea.sflag [#allocation11], %s312
          %s314 = sand.u32 %s150, 1
          %s315 = smul.addr %s314, 128
          %s316 = scalar_lea.vmem [#allocation10], %s315
          %s317 = smul.u32 32, %s31
          %319 = vsyncadd %s313, 0
          %s320 = smul.addr %s317, 4
          %s321 = scalar_lea.hbm %s4, %s320
          %s322 = sshll.u32 %s321, 4
          %s323 = int_to_ptr.hbm [resolvable:$true] %s322
          %s324 = sshll.u32 %s316, 4
          %s325 = int_to_ptr.vmem [resolvable:$true] %s324
          %330 = dma.hbm_to_vmem [thread:$0]  %s323, 2048, %s325, %s313, 64, 64, 4
        $region36: #{tpu_custom_call.1} parent=15 // pred_fallthru
          _
        // Predicated region
        $region37: #{tpu_custom_call.1} parent=15 // pred_check
          %p331 = pneg %p186
        $region38: #{tpu_custom_call.1} parent=15 // pred_check_branch
          %333 = sbr.rel (%p331) target = $region40
        $region39: #{tpu_custom_call.1} parent=15 // pred_region
          %s334 = smul.u32 32, %s31
          %p335 = scmp.lt.s32.totalorder %s334, 63
          %s336 = scalar_select %p335, %s334, 63
          %s337 = smul.addr %s336, 8
          %s338 = scalar_lea.vmem %s5, %s337
          %s339 = smul.u32 32, %s31
        $region40: #{tpu_custom_call.1} parent=15 // pred_fallthru
          _
      $region16: #{tpu_custom_call.1} parent=5 // pred_fallthru
        _
      %p340 = scmp.le.s32.totalorder 1, %s24
      %p341 = scmp.lt.s32.totalorder %s24, 9
      %p342 = pnand %p340, %p341
      %p343 = pneg %p342
      // Predicated region
      $region41: #{tpu_custom_call.1} parent=5 // pred_check
        _
      $region42: #{tpu_custom_call.1} parent=5 // pred_check_branch
        %345 = sbr.rel (%p342) target = $region44
      $region43: #{tpu_custom_call.1} parent=5 // pred_region
        %s346 = ssub.s32 %s24, 1
        %s347 = sand.u32 %s75, 1
        %s348 = scalar_lea.sflag [#allocation5], %s347
        %s349 = sand.u32 %s75, 1
        %s350 = smul.addr %s349, 256
        %s351 = scalar_lea.vmem [#allocation4], %s350
        // Predicated region
        $region45: #{tpu_custom_call.1} parent=43 // pred_check
          %p352 = pneg %p88
        $region46: #{tpu_custom_call.1} parent=43 // pred_check_branch
          %354 = sbr.rel (%p352) target = $region48
        $region47: #{tpu_custom_call.1} parent=43 // pred_region
          %356 = dma.done %s348, 4096
        $region48: #{tpu_custom_call.1} parent=43 // pred_fallthru
          _
        %s357 = sand.u32 %s29, 1
        %s358 = scalar_lea.sflag [#allocation8], %s357
        %s359 = sand.u32 %s101, 1
        %s360 = smul.addr %s359, 2
        %s361 = scalar_lea.vmem [#allocation7], %s360
        // Predicated region
        $region49: #{tpu_custom_call.1} parent=43 // pred_check
          %p362 = pneg %p114
        $region50: #{tpu_custom_call.1} parent=43 // pred_check_branch
          %364 = sbr.rel (%p362) target = $region52
        $region51: #{tpu_custom_call.1} parent=43 // pred_region
          %366 = dma.done %s358, 32
        $region52: #{tpu_custom_call.1} parent=43 // pred_fallthru
          _
        %s367 = sand.u32 %s29, 1
        %s368 = scalar_lea.sflag [#allocation8], %s367
        %s369 = sand.u32 %s127, 1
        %s370 = smul.addr %s369, 128
        %s371 = scalar_lea.vmem [#allocation9], %s370
        // Predicated region
        $region53: #{tpu_custom_call.1} parent=43 // pred_check
          %p372 = pneg %p140
        $region54: #{tpu_custom_call.1} parent=43 // pred_check_branch
          %374 = sbr.rel (%p372) target = $region56
        $region55: #{tpu_custom_call.1} parent=43 // pred_region
          %376 = dma.done %s368, 2048
        $region56: #{tpu_custom_call.1} parent=43 // pred_fallthru
          _
        %s377 = sand.u32 %s153, 1
        %s378 = scalar_lea.sflag [#allocation11], %s377
        %s379 = sand.u32 %s153, 1
        %s380 = smul.addr %s379, 128
        %s381 = scalar_lea.vmem [#allocation10], %s380
        // Predicated region
        $region57: #{tpu_custom_call.1} parent=43 // pred_check
          %p382 = pneg %p166
        $region58: #{tpu_custom_call.1} parent=43 // pred_check_branch
          %384 = sbr.rel (%p382) target = $region60
        $region59: #{tpu_custom_call.1} parent=43 // pred_region
          %386 = dma.done %s378, 2048
        $region60: #{tpu_custom_call.1} parent=43 // pred_fallthru
          _
        %s387 = smul.u32 32, %s33
        %p388 = scmp.lt.s32.totalorder %s387, 63
        %s389 = scalar_select %p388, %s387, 63
        %s390 = smul.addr %s389, 8
        %s391 = scalar_lea.vmem %s0, %s390
        %p392 = pneg %p62
        %p393 = pneg %p59
        %s394 = sand.u32 %s75, 1
        %s395 = scalar_lea.sflag [#allocation5], %s394
        %s396 = sand.u32 %s75, 1
        %s397 = smul.addr %s396, 256
        %s398 = scalar_lea.vmem [#allocation4], %s397
        %p399 = pneg %p88
        %p400 = pneg %p85
        %s401 = sand.u32 %s29, 1
        %s402 = scalar_lea.sflag [#allocation8], %s401
        %s403 = sand.u32 %s101, 1
        %s404 = smul.addr %s403, 2
        %s405 = scalar_lea.vmem [#allocation7], %s404
        %p406 = pneg %p114
        %p407 = pneg %p111
        %s408 = sand.u32 %s29, 1
        %s409 = scalar_lea.sflag [#allocation8], %s408
        %s410 = sand.u32 %s127, 1
        %s411 = smul.addr %s410, 128
        %s412 = scalar_lea.vmem [#allocation9], %s411
        %p413 = pneg %p140
        %p414 = pneg %p137
        %s415 = sand.u32 %s153, 1
        %s416 = scalar_lea.sflag [#allocation11], %s415
        %s417 = sand.u32 %s153, 1
        %s418 = smul.addr %s417, 128
        %s419 = scalar_lea.vmem [#allocation10], %s418
        %p420 = pneg %p166
        %p421 = pneg %p163
        %s422 = smul.u32 32, %s33
        %p423 = scmp.lt.s32.totalorder %s422, 63
        %s424 = scalar_select %p423, %s422, 63
        %s425 = smul.addr %s424, 8
        %s426 = scalar_lea.vmem %s5, %s425
        %p427 = pneg %p192
        %p428 = pneg %p189
        %p429 = pneg %p218
        %p430 = pneg %p215
        %s431 = sand.u32 %s205, 1
        %s432 = scalar_lea.sflag [#allocation6], %s431
        %s433 = sand.u32 %s205, 1
        %s434 = smul.addr %s433, 128
        %s435 = scalar_lea.vmem [#allocation12], %s434
        %s436 = smul.u32 32, %s33
        %p437 = scmp.lt.s32.totalorder %s436, 63
        %s438 = scalar_select %p437, %s436, 63
        %s439 = smul.addr %s438, 8
        %s440 = scalar_lea.vmem %s0, %s439
        %s441 = smul.u32 32, %s33
        %s442 = smul.u32 32, %s34
        %s443 = smul.u32 2, %s34
        %s444 = smul.u32 32, %s34
        %s445 = smul.u32 32, %s33
        %s446 = smul.u32 32, %s33
        %p447 = scmp.lt.s32.totalorder %s446, 63
        %s448 = scalar_select %p447, %s446, 63
        %s449 = smul.addr %s448, 8
        %s450 = scalar_lea.vmem %s5, %s449
        %s451 = smul.u32 32, %s33
        %p452 = scmp.eq.s32.totalorder %s34, 0
        // Predicated region
        $region61: #{tpu_custom_call.1} parent=43 // pred_check
          %p453 = pneg %p452
        $region62: #{tpu_custom_call.1} parent=43 // pred_check_branch
          %455 = sbr.rel (%p453) target = $region64
        $region63: #{tpu_custom_call.1} parent=43 // pred_region
          %vm456 = vcmask 7168
          %457 = vst.msk [vmem:[#allocation2] sm:$0xff] %vm456, -inf
          %458 = vst.msk [vmem:[#allocation2 + $0x8] sm:$0xff] %vm456, -inf
          %459 = vst.msk [vmem:[#allocation2 + $0x10] sm:$0xff] %vm456, -inf
          %460 = vst.msk [vmem:[#allocation2 + $0x18] sm:$0xff] %vm456, -inf
          %461 = vst.msk [vmem:[#allocation2 + $0x20] sm:$0xff] %vm456, -inf
          %462 = vst.msk [vmem:[#allocation2 + $0x28] sm:$0xff] %vm456, -inf
          %463 = vst.msk [vmem:[#allocation2 + $0x30] sm:$0xff] %vm456, -inf
          %464 = vst.msk [vmem:[#allocation2 + $0x38] sm:$0xff] %vm456, -inf
          %465 = vst.msk [vmem:[#allocation2 + $0x40] sm:$0xff] %vm456, -inf
          %466 = vst.msk [vmem:[#allocation2 + $0x48] sm:$0xff] %vm456, -inf
          %467 = vst.msk [vmem:[#allocation2 + $0x50] sm:$0xff] %vm456, -inf
          %468 = vst.msk [vmem:[#allocation2 + $0x58] sm:$0xff] %vm456, -inf
          %469 = vst.msk [vmem:[#allocation2 + $0x60] sm:$0xff] %vm456, -inf
          %470 = vst.msk [vmem:[#allocation2 + $0x68] sm:$0xff] %vm456, -inf
          %471 = vst.msk [vmem:[#allocation2 + $0x70] sm:$0xff] %vm456, -inf
          %472 = vst.msk [vmem:[#allocation2 + $0x78] sm:$0xff] %vm456, -inf
          %473 = vst.msk [vmem:[#allocation2 + $0x80] sm:$0xff] %vm456, -inf
          %474 = vst.msk [vmem:[#allocation2 + $0x88] sm:$0xff] %vm456, -inf
          %475 = vst.msk [vmem:[#allocation2 + $0x90] sm:$0xff] %vm456, -inf
          %476 = vst.msk [vmem:[#allocation2 + $0x98] sm:$0xff] %vm456, -inf
          %477 = vst.msk [vmem:[#allocation2 + $0xa0] sm:$0xff] %vm456, -inf
          %478 = vst.msk [vmem:[#allocation2 + $0xa8] sm:$0xff] %vm456, -inf
          %479 = vst.msk [vmem:[#allocation2 + $0xb0] sm:$0xff] %vm456, -inf
          %480 = vst.msk [vmem:[#allocation2 + $0xb8] sm:$0xff] %vm456, -inf
          %481 = vst.msk [vmem:[#allocation2 + $0xc0] sm:$0xff] %vm456, -inf
          %482 = vst.msk [vmem:[#allocation2 + $0xc8] sm:$0xff] %vm456, -inf
          %483 = vst.msk [vmem:[#allocation2 + $0xd0] sm:$0xff] %vm456, -inf
          %484 = vst.msk [vmem:[#allocation2 + $0xd8] sm:$0xff] %vm456, -inf
          %485 = vst.msk [vmem:[#allocation2 + $0xe0] sm:$0xff] %vm456, -inf
          %486 = vst.msk [vmem:[#allocation2 + $0xe8] sm:$0xff] %vm456, -inf
          %487 = vst.msk [vmem:[#allocation2 + $0xf0] sm:$0xff] %vm456, -inf
          %488 = vst.msk [vmem:[#allocation2 + $0xf8] sm:$0xff] %vm456, -inf
          %489 = vst [vmem:[#allocation3] sm:$0xff] 0.0
          %490 = vst [vmem:[#allocation3 + $0x8] sm:$0xff] 0.0
          %491 = vst [vmem:[#allocation3 + $0x10] sm:$0xff] 0.0
          %492 = vst [vmem:[#allocation3 + $0x18] sm:$0xff] 0.0
          %493 = vst [vmem:[#allocation3 + $0x20] sm:$0xff] 0.0
          %494 = vst [vmem:[#allocation3 + $0x28] sm:$0xff] 0.0
          %495 = vst [vmem:[#allocation3 + $0x30] sm:$0xff] 0.0
          %496 = vst [vmem:[#allocation3 + $0x38] sm:$0xff] 0.0
          %497 = vst [vmem:[#allocation3 + $0x40] sm:$0xff] 0.0
          %498 = vst [vmem:[#allocation3 + $0x48] sm:$0xff] 0.0
          %499 = vst [vmem:[#allocation3 + $0x50] sm:$0xff] 0.0
          %500 = vst [vmem:[#allocation3 + $0x58] sm:$0xff] 0.0
          %501 = vst [vmem:[#allocation3 + $0x60] sm:$0xff] 0.0
          %502 = vst [vmem:[#allocation3 + $0x68] sm:$0xff] 0.0
          %503 = vst [vmem:[#allocation3 + $0x70] sm:$0xff] 0.0
          %504 = vst [vmem:[#allocation3 + $0x78] sm:$0xff] 0.0
          %505 = vst [vmem:[#allocation3 + $0x80] sm:$0xff] 0.0
          %506 = vst [vmem:[#allocation3 + $0x88] sm:$0xff] 0.0
          %507 = vst [vmem:[#allocation3 + $0x90] sm:$0xff] 0.0
          %508 = vst [vmem:[#allocation3 + $0x98] sm:$0xff] 0.0
          %509 = vst [vmem:[#allocation3 + $0xa0] sm:$0xff] 0.0
          %510 = vst [vmem:[#allocation3 + $0xa8] sm:$0xff] 0.0
          %511 = vst [vmem:[#allocation3 + $0xb0] sm:$0xff] 0.0
          %512 = vst [vmem:[#allocation3 + $0xb8] sm:$0xff] 0.0
          %513 = vst [vmem:[#allocation3 + $0xc0] sm:$0xff] 0.0
          %514 = vst [vmem:[#allocation3 + $0xc8] sm:$0xff] 0.0
          %515 = vst [vmem:[#allocation3 + $0xd0] sm:$0xff] 0.0
          %516 = vst [vmem:[#allocation3 + $0xd8] sm:$0xff] 0.0
          %517 = vst [vmem:[#allocation3 + $0xe0] sm:$0xff] 0.0
          %518 = vst [vmem:[#allocation3 + $0xe8] sm:$0xff] 0.0
          %519 = vst [vmem:[#allocation3 + $0xf0] sm:$0xff] 0.0
          %520 = vst [vmem:[#allocation3 + $0xf8] sm:$0xff] 0.0
        $region64: #{tpu_custom_call.1} parent=43 // pred_fallthru
          _
        %v521 = vld [vmem:[%s440] sm:$0xff]
        %v522 = vld [vmem:[%s440 + $0x8] sm:$0xff]
        %v523 = vld [vmem:[%s440 + $0x10] sm:$0xff]
        %v524 = vld [vmem:[%s440 + $0x18] sm:$0xff]
        %v525 = vld [vmem:[%s440 + $0x20] sm:$0xff]
        %v526 = vld [vmem:[%s440 + $0x28] sm:$0xff]
        %v527 = vld [vmem:[%s440 + $0x30] sm:$0xff]
        %v528 = vld [vmem:[%s440 + $0x38] sm:$0xff]
        %v529 = vld [vmem:[%s440 + $0x40] sm:$0xff]
        %v530 = vld [vmem:[%s440 + $0x48] sm:$0xff]
        %v531 = vld [vmem:[%s440 + $0x50] sm:$0xff]
        %v532 = vld [vmem:[%s440 + $0x58] sm:$0xff]
        %v533 = vld [vmem:[%s440 + $0x60] sm:$0xff]
        %v534 = vld [vmem:[%s440 + $0x68] sm:$0xff]
        %v535 = vld [vmem:[%s440 + $0x70] sm:$0xff]
        %v536 = vld [vmem:[%s440 + $0x78] sm:$0xff]
        %v537 = vld [vmem:[%s440 + $0x80] sm:$0xff]
        %v538 = vld [vmem:[%s440 + $0x88] sm:$0xff]
        %v539 = vld [vmem:[%s440 + $0x90] sm:$0xff]
        %v540 = vld [vmem:[%s440 + $0x98] sm:$0xff]
        %v541 = vld [vmem:[%s440 + $0xa0] sm:$0xff]
        %v542 = vld [vmem:[%s440 + $0xa8] sm:$0xff]
        %v543 = vld [vmem:[%s440 + $0xb0] sm:$0xff]
        %v544 = vld [vmem:[%s440 + $0xb8] sm:$0xff]
        %v545 = vld [vmem:[%s440 + $0xc0] sm:$0xff]
        %v546 = vld [vmem:[%s440 + $0xc8] sm:$0xff]
        %v547 = vld [vmem:[%s440 + $0xd0] sm:$0xff]
        %v548 = vld [vmem:[%s440 + $0xd8] sm:$0xff]
        %v549 = vld [vmem:[%s440 + $0xe0] sm:$0xff]
        %v550 = vld [vmem:[%s440 + $0xe8] sm:$0xff]
        %v551 = vld [vmem:[%s440 + $0xf0] sm:$0xff]
        %v552 = vld [vmem:[%s440 + $0xf8] sm:$0xff]
        %v553 = vld [vmem:[%s351] sm:$0xff]
        %v554 = vld [vmem:[%s351 + $0x8] sm:$0xff]
        %v555 = vld [vmem:[%s351 + $0x10] sm:$0xff]
        %v556 = vld [vmem:[%s351 + $0x18] sm:$0xff]
        %v557 = vld [vmem:[%s351 + $0x20] sm:$0xff]
        %v558 = vld [vmem:[%s351 + $0x28] sm:$0xff]
        %v559 = vld [vmem:[%s351 + $0x30] sm:$0xff]
        %v560 = vld [vmem:[%s351 + $0x38] sm:$0xff]
        %v561 = vld [vmem:[%s351 + $0x40] sm:$0xff]
        %v562 = vld [vmem:[%s351 + $0x48] sm:$0xff]
        %v563 = vld [vmem:[%s351 + $0x50] sm:$0xff]
        %v564 = vld [vmem:[%s351 + $0x58] sm:$0xff]
        %v565 = vld [vmem:[%s351 + $0x60] sm:$0xff]
        %v566 = vld [vmem:[%s351 + $0x68] sm:$0xff]
        %v567 = vld [vmem:[%s351 + $0x70] sm:$0xff]
        %v568 = vld [vmem:[%s351 + $0x78] sm:$0xff]
        %v569 = vld [vmem:[%s351 + $0x80] sm:$0xff]
        %v570 = vld [vmem:[%s351 + $0x88] sm:$0xff]
        %v571 = vld [vmem:[%s351 + $0x90] sm:$0xff]
        %v572 = vld [vmem:[%s351 + $0x98] sm:$0xff]
        %v573 = vld [vmem:[%s351 + $0xa0] sm:$0xff]
        %v574 = vld [vmem:[%s351 + $0xa8] sm:$0xff]
        %v575 = vld [vmem:[%s351 + $0xb0] sm:$0xff]
        %v576 = vld [vmem:[%s351 + $0xb8] sm:$0xff]
        %v577 = vld [vmem:[%s351 + $0xc0] sm:$0xff]
        %v578 = vld [vmem:[%s351 + $0xc8] sm:$0xff]
        %v579 = vld [vmem:[%s351 + $0xd0] sm:$0xff]
        %v580 = vld [vmem:[%s351 + $0xd8] sm:$0xff]
        %v581 = vld [vmem:[%s351 + $0xe0] sm:$0xff]
        %v582 = vld [vmem:[%s351 + $0xe8] sm:$0xff]
        %v583 = vld [vmem:[%s351 + $0xf0] sm:$0xff]
        %v584 = vld [vmem:[%s351 + $0xf8] sm:$0xff]
        %585 = vmatpush.xpose.msra.mxu0 %v568
        %586 = vmatpush.xpose.msra.mxu0 %v567
        %587 = vmatpush.xpose.msra.mxu0 %v566
        %588 = vmatpush.xpose.msra.mxu0 %v565
        %589 = vmatpush.xpose.msra.mxu0 %v564
        %590 = vmatpush.xpose.msra.mxu0 %v563
        %591 = vmatpush.xpose.msra.mxu0 %v562
        %592 = vmatpush.xpose.msra.mxu0 %v561
        %593 = vmatpush.xpose.msra.mxu0 %v560
        %594 = vmatpush.xpose.msra.mxu0 %v559
        %595 = vmatpush.xpose.msra.mxu0 %v558
        %596 = vmatpush.xpose.msra.mxu0 %v557
        %597 = vmatpush.xpose.msra.mxu0 %v556
        %598 = vmatpush.xpose.msra.mxu0 %v555
        %599 = vmatpush.xpose.msra.mxu0 %v554
        %600 = vmatpush.xpose.msra.mxu0 %v553
        %601 = vmatmul.f32.gmra.mxu0 %v521
        %v602 = vpop.f32.mrf.mxu0
        %v603 = vadd.f32 0.0, %v602
        %604 = vmatmul.f32.gmra.mxu0 %v522
        %v605 = vpop.f32.mrf.mxu0
        %v606 = vadd.f32 0.0, %v605
        %607 = vmatmul.f32.gmra.mxu0 %v523
        %v608 = vpop.f32.mrf.mxu0
        %v609 = vadd.f32 0.0, %v608
        %610 = vmatmul.f32.gmra.mxu0 %v524
        %v611 = vpop.f32.mrf.mxu0
        %v612 = vadd.f32 0.0, %v611
        %613 = vmatmul.f32.gmra.mxu0 %v525
        %v614 = vpop.f32.mrf.mxu0
        %v615 = vadd.f32 0.0, %v614
        %616 = vmatmul.f32.gmra.mxu0 %v526
        %v617 = vpop.f32.mrf.mxu0
        %v618 = vadd.f32 0.0, %v617
        %619 = vmatmul.f32.gmra.mxu0 %v527
        %v620 = vpop.f32.mrf.mxu0
        %v621 = vadd.f32 0.0, %v620
        %622 = vmatmul.f32.gmra.mxu0 %v528
        %v623 = vpop.f32.mrf.mxu0
        %v624 = vadd.f32 0.0, %v623
        %625 = vmatmul.f32.gmra.mxu0 %v529
        %v626 = vpop.f32.mrf.mxu0
        %v627 = vadd.f32 0.0, %v626
        %628 = vmatmul.f32.gmra.mxu0 %v530
        %v629 = vpop.f32.mrf.mxu0
        %v630 = vadd.f32 0.0, %v629
        %631 = vmatmul.f32.gmra.mxu0 %v531
        %v632 = vpop.f32.mrf.mxu0
        %v633 = vadd.f32 0.0, %v632
        %634 = vmatmul.f32.gmra.mxu0 %v532
        %v635 = vpop.f32.mrf.mxu0
        %v636 = vadd.f32 0.0, %v635
        %637 = vmatmul.f32.gmra.mxu0 %v533
        %v638 = vpop.f32.mrf.mxu0
        %v639 = vadd.f32 0.0, %v638
        %640 = vmatmul.f32.gmra.mxu0 %v534
        %v641 = vpop.f32.mrf.mxu0
        %v642 = vadd.f32 0.0, %v641
        %643 = vmatmul.f32.gmra.mxu0 %v535
        %v644 = vpop.f32.mrf.mxu0
        %v645 = vadd.f32 0.0, %v644
        %646 = vmatmul.f32.gmra.mxu0 %v536
        %v647 = vpop.f32.mrf.mxu0
        %v648 = vadd.f32 0.0, %v647
        %649 = vmatmul.f32.gmra.mxu0 %v537
        %v650 = vpop.f32.mrf.mxu0
        %v651 = vadd.f32 0.0, %v650
        %652 = vmatmul.f32.gmra.mxu0 %v538
        %v653 = vpop.f32.mrf.mxu0
        %v654 = vadd.f32 0.0, %v653
        %655 = vmatmul.f32.gmra.mxu0 %v539
        %v656 = vpop.f32.mrf.mxu0
        %v657 = vadd.f32 0.0, %v656
        %658 = vmatmul.f32.gmra.mxu0 %v540
        %v659 = vpop.f32.mrf.mxu0
        %v660 = vadd.f32 0.0, %v659
        %661 = vmatmul.f32.gmra.mxu0 %v541
        %v662 = vpop.f32.mrf.mxu0
        %v663 = vadd.f32 0.0, %v662
        %664 = vmatmul.f32.gmra.mxu0 %v542
        %v665 = vpop.f32.mrf.mxu0
        %v666 = vadd.f32 0.0, %v665
        %667 = vmatmul.f32.gmra.mxu0 %v543
        %v668 = vpop.f32.mrf.mxu0
        %v669 = vadd.f32 0.0, %v668
        %670 = vmatmul.f32.gmra.mxu0 %v544
        %v671 = vpop.f32.mrf.mxu0
        %v672 = vadd.f32 0.0, %v671
        %673 = vmatmul.f32.gmra.mxu0 %v545
        %v674 = vpop.f32.mrf.mxu0
        %v675 = vadd.f32 0.0, %v674
        %676 = vmatmul.f32.gmra.mxu0 %v546
        %v677 = vpop.f32.mrf.mxu0
        %v678 = vadd.f32 0.0, %v677
        %679 = vmatmul.f32.gmra.mxu0 %v547
        %v680 = vpop.f32.mrf.mxu0
        %v681 = vadd.f32 0.0, %v680
        %682 = vmatmul.f32.gmra.mxu0 %v548
        %v683 = vpop.f32.mrf.mxu0
        %v684 = vadd.f32 0.0, %v683
        %685 = vmatmul.f32.gmra.mxu0 %v549
        %v686 = vpop.f32.mrf.mxu0
        %v687 = vadd.f32 0.0, %v686
        %688 = vmatmul.f32.gmra.mxu0 %v550
        %v689 = vpop.f32.mrf.mxu0
        %v690 = vadd.f32 0.0, %v689
        %691 = vmatmul.f32.gmra.mxu0 %v551
        %v692 = vpop.f32.mrf.mxu0
        %v693 = vadd.f32 0.0, %v692
        %694 = vmatmul.f32.gmra.mxu0 %v552
        %v695 = vpop.f32.mrf.mxu0
        %v696 = vadd.f32 0.0, %v695
        %697 = vdwg.mxu0
        %698 = vmatpush.xpose.msra.mxu0 %v584
        %699 = vmatpush.xpose.msra.mxu0 %v583
        %700 = vmatpush.xpose.msra.mxu0 %v582
        %701 = vmatpush.xpose.msra.mxu0 %v581
        %702 = vmatpush.xpose.msra.mxu0 %v580
        %703 = vmatpush.xpose.msra.mxu0 %v579
        %704 = vmatpush.xpose.msra.mxu0 %v578
        %705 = vmatpush.xpose.msra.mxu0 %v577
        %706 = vmatpush.xpose.msra.mxu0 %v576
        %707 = vmatpush.xpose.msra.mxu0 %v575
        %708 = vmatpush.xpose.msra.mxu0 %v574
        %709 = vmatpush.xpose.msra.mxu0 %v573
        %710 = vmatpush.xpose.msra.mxu0 %v572
        %711 = vmatpush.xpose.msra.mxu0 %v571
        %712 = vmatpush.xpose.msra.mxu0 %v570
        %713 = vmatpush.xpose.msra.mxu0 %v569
        %714 = vmatmul.f32.gmra.mxu0 %v521
        %v715 = vpop.f32.mrf.mxu0
        %v716 = vadd.f32 0.0, %v715
        %717 = vmatmul.f32.gmra.mxu0 %v522
        %v718 = vpop.f32.mrf.mxu0
        %v719 = vadd.f32 0.0, %v718
        %720 = vmatmul.f32.gmra.mxu0 %v523
        %v721 = vpop.f32.mrf.mxu0
        %v722 = vadd.f32 0.0, %v721
        %723 = vmatmul.f32.gmra.mxu0 %v524
        %v724 = vpop.f32.mrf.mxu0
        %v725 = vadd.f32 0.0, %v724
        %726 = vmatmul.f32.gmra.mxu0 %v525
        %v727 = vpop.f32.mrf.mxu0
        %v728 = vadd.f32 0.0, %v727
        %729 = vmatmul.f32.gmra.mxu0 %v526
        %v730 = vpop.f32.mrf.mxu0
        %v731 = vadd.f32 0.0, %v730
        %732 = vmatmul.f32.gmra.mxu0 %v527
        %v733 = vpop.f32.mrf.mxu0
        %v734 = vadd.f32 0.0, %v733
        %735 = vmatmul.f32.gmra.mxu0 %v528
        %v736 = vpop.f32.mrf.mxu0
        %v737 = vadd.f32 0.0, %v736
        %738 = vmatmul.f32.gmra.mxu0 %v529
        %v739 = vpop.f32.mrf.mxu0
        %v740 = vadd.f32 0.0, %v739
        %741 = vmatmul.f32.gmra.mxu0 %v530
        %v742 = vpop.f32.mrf.mxu0
        %v743 = vadd.f32 0.0, %v742
        %744 = vmatmul.f32.gmra.mxu0 %v531
        %v745 = vpop.f32.mrf.mxu0
        %v746 = vadd.f32 0.0, %v745
        %747 = vmatmul.f32.gmra.mxu0 %v532
        %v748 = vpop.f32.mrf.mxu0
        %v749 = vadd.f32 0.0, %v748
        %750 = vmatmul.f32.gmra.mxu0 %v533
        %v751 = vpop.f32.mrf.mxu0
        %v752 = vadd.f32 0.0, %v751
        %753 = vmatmul.f32.gmra.mxu0 %v534
        %v754 = vpop.f32.mrf.mxu0
        %v755 = vadd.f32 0.0, %v754
        %756 = vmatmul.f32.gmra.mxu0 %v535
        %v757 = vpop.f32.mrf.mxu0
        %v758 = vadd.f32 0.0, %v757
        %759 = vmatmul.f32.gmra.mxu0 %v536
        %v760 = vpop.f32.mrf.mxu0
        %v761 = vadd.f32 0.0, %v760
        %762 = vmatmul.f32.gmra.mxu0 %v537
        %v763 = vpop.f32.mrf.mxu0
        %v764 = vadd.f32 0.0, %v763
        %765 = vmatmul.f32.gmra.mxu0 %v538
        %v766 = vpop.f32.mrf.mxu0
        %v767 = vadd.f32 0.0, %v766
        %768 = vmatmul.f32.gmra.mxu0 %v539
        %v769 = vpop.f32.mrf.mxu0
        %v770 = vadd.f32 0.0, %v769
        %771 = vmatmul.f32.gmra.mxu0 %v540
        %v772 = vpop.f32.mrf.mxu0
        %v773 = vadd.f32 0.0, %v772
        %774 = vmatmul.f32.gmra.mxu0 %v541
        %v775 = vpop.f32.mrf.mxu0
        %v776 = vadd.f32 0.0, %v775
        %777 = vmatmul.f32.gmra.mxu0 %v542
        %v778 = vpop.f32.mrf.mxu0
        %v779 = vadd.f32 0.0, %v778
        %780 = vmatmul.f32.gmra.mxu0 %v543
        %v781 = vpop.f32.mrf.mxu0
        %v782 = vadd.f32 0.0, %v781
        %783 = vmatmul.f32.gmra.mxu0 %v544
        %v784 = vpop.f32.mrf.mxu0
        %v785 = vadd.f32 0.0, %v784
        %786 = vmatmul.f32.gmra.mxu0 %v545
        %v787 = vpop.f32.mrf.mxu0
        %v788 = vadd.f32 0.0, %v787
        %789 = vmatmul.f32.gmra.mxu0 %v546
        %v790 = vpop.f32.mrf.mxu0
        %v791 = vadd.f32 0.0, %v790
        %792 = vmatmul.f32.gmra.mxu0 %v547
        %v793 = vpop.f32.mrf.mxu0
        %v794 = vadd.f32 0.0, %v793
        %795 = vmatmul.f32.gmra.mxu0 %v548
        %v796 = vpop.f32.mrf.mxu0
        %v797 = vadd.f32 0.0, %v796
        %798 = vmatmul.f32.gmra.mxu0 %v549
        %v799 = vpop.f32.mrf.mxu0
        %v800 = vadd.f32 0.0, %v799
        %801 = vmatmul.f32.gmra.mxu0 %v550
        %v802 = vpop.f32.mrf.mxu0
        %v803 = vadd.f32 0.0, %v802
        %804 = vmatmul.f32.gmra.mxu0 %v551
        %v805 = vpop.f32.mrf.mxu0
        %v806 = vadd.f32 0.0, %v805
        %807 = vmatmul.f32.gmra.mxu0 %v552
        %v808 = vpop.f32.mrf.mxu0
        %v809 = vadd.f32 0.0, %v808
        %810 = vdwg.mxu0
        %v811 = vld [vmem:[%s361] sm:$0x3]
        %v813 = vperm.slane %v811, 0
        %v814 = vperm.slane %v811, 1
        %v817 = vsub.f32 %v603, %v813
        %v818 = vsub.f32 %v716, %v814
        %v819 = vsub.f32 %v606, %v813
        %v820 = vsub.f32 %v719, %v814
        %v821 = vsub.f32 %v609, %v813
        %v822 = vsub.f32 %v722, %v814
        %v823 = vsub.f32 %v612, %v813
        %v824 = vsub.f32 %v725, %v814
        %v825 = vsub.f32 %v615, %v813
        %v826 = vsub.f32 %v728, %v814
        %v827 = vsub.f32 %v618, %v813
        %v828 = vsub.f32 %v731, %v814
        %v829 = vsub.f32 %v621, %v813
        %v830 = vsub.f32 %v734, %v814
        %v831 = vsub.f32 %v624, %v813
        %v832 = vsub.f32 %v737, %v814
        %v833 = vsub.f32 %v627, %v813
        %v834 = vsub.f32 %v740, %v814
        %v835 = vsub.f32 %v630, %v813
        %v836 = vsub.f32 %v743, %v814
        %v837 = vsub.f32 %v633, %v813
        %v838 = vsub.f32 %v746, %v814
        %v839 = vsub.f32 %v636, %v813
        %v840 = vsub.f32 %v749, %v814
        %v841 = vsub.f32 %v639, %v813
        %v842 = vsub.f32 %v752, %v814
        %v843 = vsub.f32 %v642, %v813
        %v844 = vsub.f32 %v755, %v814
        %v845 = vsub.f32 %v645, %v813
        %v846 = vsub.f32 %v758, %v814
        %v847 = vsub.f32 %v648, %v813
        %v848 = vsub.f32 %v761, %v814
        %v849 = vsub.f32 %v651, %v813
        %v850 = vsub.f32 %v764, %v814
        %v851 = vsub.f32 %v654, %v813
        %v852 = vsub.f32 %v767, %v814
        %v853 = vsub.f32 %v657, %v813
        %v854 = vsub.f32 %v770, %v814
        %v855 = vsub.f32 %v660, %v813
        %v856 = vsub.f32 %v773, %v814
        %v857 = vsub.f32 %v663, %v813
        %v858 = vsub.f32 %v776, %v814
        %v859 = vsub.f32 %v666, %v813
        %v860 = vsub.f32 %v779, %v814
        %v861 = vsub.f32 %v669, %v813
        %v862 = vsub.f32 %v782, %v814
        %v863 = vsub.f32 %v672, %v813
        %v864 = vsub.f32 %v785, %v814
        %v865 = vsub.f32 %v675, %v813
        %v866 = vsub.f32 %v788, %v814
        %v867 = vsub.f32 %v678, %v813
        %v868 = vsub.f32 %v791, %v814
        %v869 = vsub.f32 %v681, %v813
        %v870 = vsub.f32 %v794, %v814
        %v871 = vsub.f32 %v684, %v813
        %v872 = vsub.f32 %v797, %v814
        %v873 = vsub.f32 %v687, %v813
        %v874 = vsub.f32 %v800, %v814
        %v875 = vsub.f32 %v690, %v813
        %v876 = vsub.f32 %v803, %v814
        %v877 = vsub.f32 %v693, %v813
        %v878 = vsub.f32 %v806, %v814
        %v879 = vsub.f32 %v696, %v813
        %v880 = vsub.f32 %v809, %v814
        %v881 = vld [vmem:[#allocation2] sm:$0xff]
        %v882 = vld [vmem:[#allocation2 + $0x8] sm:$0xff]
        %v883 = vld [vmem:[#allocation2 + $0x10] sm:$0xff]
        %v884 = vld [vmem:[#allocation2 + $0x18] sm:$0xff]
        %v885 = vld [vmem:[#allocation2 + $0x20] sm:$0xff]
        %v886 = vld [vmem:[#allocation2 + $0x28] sm:$0xff]
        %v887 = vld [vmem:[#allocation2 + $0x30] sm:$0xff]
        %v888 = vld [vmem:[#allocation2 + $0x38] sm:$0xff]
        %v889 = vld [vmem:[#allocation2 + $0x40] sm:$0xff]
        %v890 = vld [vmem:[#allocation2 + $0x48] sm:$0xff]
        %v891 = vld [vmem:[#allocation2 + $0x50] sm:$0xff]
        %v892 = vld [vmem:[#allocation2 + $0x58] sm:$0xff]
        %v893 = vld [vmem:[#allocation2 + $0x60] sm:$0xff]
        %v894 = vld [vmem:[#allocation2 + $0x68] sm:$0xff]
        %v895 = vld [vmem:[#allocation2 + $0x70] sm:$0xff]
        %v896 = vld [vmem:[#allocation2 + $0x78] sm:$0xff]
        %v897 = vld [vmem:[#allocation2 + $0x80] sm:$0xff]
        %v898 = vld [vmem:[#allocation2 + $0x88] sm:$0xff]
        %v899 = vld [vmem:[#allocation2 + $0x90] sm:$0xff]
        %v900 = vld [vmem:[#allocation2 + $0x98] sm:$0xff]
        %v901 = vld [vmem:[#allocation2 + $0xa0] sm:$0xff]
        %v902 = vld [vmem:[#allocation2 + $0xa8] sm:$0xff]
        %v903 = vld [vmem:[#allocation2 + $0xb0] sm:$0xff]
        %v904 = vld [vmem:[#allocation2 + $0xb8] sm:$0xff]
        %v905 = vld [vmem:[#allocation2 + $0xc0] sm:$0xff]
        %v906 = vld [vmem:[#allocation2 + $0xc8] sm:$0xff]
        %v907 = vld [vmem:[#allocation2 + $0xd0] sm:$0xff]
        %v908 = vld [vmem:[#allocation2 + $0xd8] sm:$0xff]
        %v909 = vld [vmem:[#allocation2 + $0xe0] sm:$0xff]
        %v910 = vld [vmem:[#allocation2 + $0xe8] sm:$0xff]
        %v911 = vld [vmem:[#allocation2 + $0xf0] sm:$0xff]
        %v912 = vld [vmem:[#allocation2 + $0xf8] sm:$0xff]
        %v913 = vmax.f32 %v817, %v818
        %914 = vmax.xlane.f32.xlu0 %v913
        %v915 = vpop.xlane.xlu0 %914
        %v916 = vmax.f32 %v819, %v820
        %917 = vmax.xlane.f32.xlu0 %v916
        %v918 = vpop.xlane.xlu0 %917
        %v919 = vmax.f32 %v821, %v822
        %920 = vmax.xlane.f32.xlu0 %v919
        %v921 = vpop.xlane.xlu0 %920
        %v922 = vmax.f32 %v823, %v824
        %923 = vmax.xlane.f32.xlu0 %v922
        %v924 = vpop.xlane.xlu0 %923
        %v925 = vmax.f32 %v825, %v826
        %926 = vmax.xlane.f32.xlu0 %v925
        %v927 = vpop.xlane.xlu0 %926
        %v928 = vmax.f32 %v827, %v828
        %929 = vmax.xlane.f32.xlu0 %v928
        %v930 = vpop.xlane.xlu0 %929
        %v931 = vmax.f32 %v829, %v830
        %932 = vmax.xlane.f32.xlu0 %v931
        %v933 = vpop.xlane.xlu0 %932
        %v934 = vmax.f32 %v831, %v832
        %935 = vmax.xlane.f32.xlu0 %v934
        %v936 = vpop.xlane.xlu0 %935
        %v937 = vmax.f32 %v833, %v834
        %938 = vmax.xlane.f32.xlu0 %v937
        %v939 = vpop.xlane.xlu0 %938
        %v940 = vmax.f32 %v835, %v836
        %941 = vmax.xlane.f32.xlu0 %v940
        %v942 = vpop.xlane.xlu0 %941
        %v943 = vmax.f32 %v837, %v838
        %944 = vmax.xlane.f32.xlu0 %v943
        %v945 = vpop.xlane.xlu0 %944
        %v946 = vmax.f32 %v839, %v840
        %947 = vmax.xlane.f32.xlu0 %v946
        %v948 = vpop.xlane.xlu0 %947
        %v949 = vmax.f32 %v841, %v842
        %950 = vmax.xlane.f32.xlu0 %v949
        %v951 = vpop.xlane.xlu0 %950
        %v952 = vmax.f32 %v843, %v844
        %953 = vmax.xlane.f32.xlu0 %v952
        %v954 = vpop.xlane.xlu0 %953
        %v955 = vmax.f32 %v845, %v846
        %956 = vmax.xlane.f32.xlu0 %v955
        %v957 = vpop.xlane.xlu0 %956
        %v958 = vmax.f32 %v847, %v848
        %959 = vmax.xlane.f32.xlu0 %v958
        %v960 = vpop.xlane.xlu0 %959
        %v961 = vmax.f32 %v849, %v850
        %962 = vmax.xlane.f32.xlu0 %v961
        %v963 = vpop.xlane.xlu0 %962
        %v964 = vmax.f32 %v851, %v852
        %965 = vmax.xlane.f32.xlu0 %v964
        %v966 = vpop.xlane.xlu0 %965
        %v967 = vmax.f32 %v853, %v854
        %968 = vmax.xlane.f32.xlu0 %v967
        %v969 = vpop.xlane.xlu0 %968
        %v970 = vmax.f32 %v855, %v856
        %971 = vmax.xlane.f32.xlu0 %v970
        %v972 = vpop.xlane.xlu0 %971
        %v973 = vmax.f32 %v857, %v858
        %974 = vmax.xlane.f32.xlu0 %v973
        %v975 = vpop.xlane.xlu0 %974
        %v976 = vmax.f32 %v859, %v860
        %977 = vmax.xlane.f32.xlu0 %v976
        %v978 = vpop.xlane.xlu0 %977
        %v979 = vmax.f32 %v861, %v862
        %980 = vmax.xlane.f32.xlu0 %v979
        %v981 = vpop.xlane.xlu0 %980
        %v982 = vmax.f32 %v863, %v864
        %983 = vmax.xlane.f32.xlu0 %v982
        %v984 = vpop.xlane.xlu0 %983
        %v985 = vmax.f32 %v865, %v866
        %986 = vmax.xlane.f32.xlu0 %v985
        %v987 = vpop.xlane.xlu0 %986
        %v988 = vmax.f32 %v867, %v868
        %989 = vmax.xlane.f32.xlu0 %v988
        %v990 = vpop.xlane.xlu0 %989
        %v991 = vmax.f32 %v869, %v870
        %992 = vmax.xlane.f32.xlu0 %v991
        %v993 = vpop.xlane.xlu0 %992
        %v994 = vmax.f32 %v871, %v872
        %995 = vmax.xlane.f32.xlu0 %v994
        %v996 = vpop.xlane.xlu0 %995
        %v997 = vmax.f32 %v873, %v874
        %998 = vmax.xlane.f32.xlu0 %v997
        %v999 = vpop.xlane.xlu0 %998
        %v1000 = vmax.f32 %v875, %v876
        %1001 = vmax.xlane.f32.xlu0 %v1000
        %v1002 = vpop.xlane.xlu0 %1001
        %v1003 = vmax.f32 %v877, %v878
        %1004 = vmax.xlane.f32.xlu0 %v1003
        %v1005 = vpop.xlane.xlu0 %1004
        %v1006 = vmax.f32 %v879, %v880
        %1007 = vmax.xlane.f32.xlu0 %v1006
        %v1008 = vpop.xlane.xlu0 %1007
        %v1009 = vmax.f32 %v881, %v915
        %v1010 = vmax.f32 %v882, %v918
        %v1011 = vmax.f32 %v883, %v921
        %v1012 = vmax.f32 %v884, %v924
        %v1013 = vmax.f32 %v885, %v927
        %v1014 = vmax.f32 %v886, %v930
        %v1015 = vmax.f32 %v887, %v933
        %v1016 = vmax.f32 %v888, %v936
        %v1017 = vmax.f32 %v889, %v939
        %v1018 = vmax.f32 %v890, %v942
        %v1019 = vmax.f32 %v891, %v945
        %v1020 = vmax.f32 %v892, %v948
        %v1021 = vmax.f32 %v893, %v951
        %v1022 = vmax.f32 %v894, %v954
        %v1023 = vmax.f32 %v895, %v957
        %v1024 = vmax.f32 %v896, %v960
        %v1025 = vmax.f32 %v897, %v963
        %v1026 = vmax.f32 %v898, %v966
        %v1027 = vmax.f32 %v899, %v969
        %v1028 = vmax.f32 %v900, %v972
        %v1029 = vmax.f32 %v901, %v975
        %v1030 = vmax.f32 %v902, %v978
        %v1031 = vmax.f32 %v903, %v981
        %v1032 = vmax.f32 %v904, %v984
        %v1033 = vmax.f32 %v905, %v987
        %v1034 = vmax.f32 %v906, %v990
        %v1035 = vmax.f32 %v907, %v993
        %v1036 = vmax.f32 %v908, %v996
        %v1037 = vmax.f32 %v909, %v999
        %v1038 = vmax.f32 %v910, %v1002
        %v1039 = vmax.f32 %v911, %v1005
        %v1040 = vmax.f32 %v912, %v1008
        %v1041 = vsub.f32 %v881, %v1009
        %v1042 = vsub.f32 %v882, %v1010
        %v1043 = vsub.f32 %v883, %v1011
        %v1044 = vsub.f32 %v884, %v1012
        %v1045 = vsub.f32 %v885, %v1013
        %v1046 = vsub.f32 %v886, %v1014
        %v1047 = vsub.f32 %v887, %v1015
        %v1048 = vsub.f32 %v888, %v1016
        %v1049 = vsub.f32 %v889, %v1017
        %v1050 = vsub.f32 %v890, %v1018
        %v1051 = vsub.f32 %v891, %v1019
        %v1052 = vsub.f32 %v892, %v1020
        %v1053 = vsub.f32 %v893, %v1021
        %v1054 = vsub.f32 %v894, %v1022
        %v1055 = vsub.f32 %v895, %v1023
        %v1056 = vsub.f32 %v896, %v1024
        %v1057 = vsub.f32 %v897, %v1025
        %v1058 = vsub.f32 %v898, %v1026
        %v1059 = vsub.f32 %v899, %v1027
        %v1060 = vsub.f32 %v900, %v1028
        %v1061 = vsub.f32 %v901, %v1029
        %v1062 = vsub.f32 %v902, %v1030
        %v1063 = vsub.f32 %v903, %v1031
        %v1064 = vsub.f32 %v904, %v1032
        %v1065 = vsub.f32 %v905, %v1033
        %v1066 = vsub.f32 %v906, %v1034
        %v1067 = vsub.f32 %v907, %v1035
        %v1068 = vsub.f32 %v908, %v1036
        %v1069 = vsub.f32 %v909, %v1037
        %v1070 = vsub.f32 %v910, %v1038
        %v1071 = vsub.f32 %v911, %v1039
        %v1072 = vsub.f32 %v912, %v1040
        %v1073 = vmul.f32 %v1041, 1.442695
        %v1074 = vpow.pop %v1073
        %v1075 = vmul.f32 %v1042, 1.442695
        %v1076 = vpow.pop %v1075
        %v1077 = vmul.f32 %v1043, 1.442695
        %v1078 = vpow.pop %v1077
        %v1079 = vmul.f32 %v1044, 1.442695
        %v1080 = vpow.pop %v1079
        %v1081 = vmul.f32 %v1045, 1.442695
        %v1082 = vpow.pop %v1081
        %v1083 = vmul.f32 %v1046, 1.442695
        %v1084 = vpow.pop %v1083
        %v1085 = vmul.f32 %v1047, 1.442695
        %v1086 = vpow.pop %v1085
        %v1087 = vmul.f32 %v1048, 1.442695
        %v1088 = vpow.pop %v1087
        %v1089 = vmul.f32 %v1049, 1.442695
        %v1090 = vpow.pop %v1089
        %v1091 = vmul.f32 %v1050, 1.442695
        %v1092 = vpow.pop %v1091
        %v1093 = vmul.f32 %v1051, 1.442695
        %v1094 = vpow.pop %v1093
        %v1095 = vmul.f32 %v1052, 1.442695
        %v1096 = vpow.pop %v1095
        %v1097 = vmul.f32 %v1053, 1.442695
        %v1098 = vpow.pop %v1097
        %v1099 = vmul.f32 %v1054, 1.442695
        %v1100 = vpow.pop %v1099
        %v1101 = vmul.f32 %v1055, 1.442695
        %v1102 = vpow.pop %v1101
        %v1103 = vmul.f32 %v1056, 1.442695
        %v1104 = vpow.pop %v1103
        %v1105 = vmul.f32 %v1057, 1.442695
        %v1106 = vpow.pop %v1105
        %v1107 = vmul.f32 %v1058, 1.442695
        %v1108 = vpow.pop %v1107
        %v1109 = vmul.f32 %v1059, 1.442695
        %v1110 = vpow.pop %v1109
        %v1111 = vmul.f32 %v1060, 1.442695
        %v1112 = vpow.pop %v1111
        %v1113 = vmul.f32 %v1061, 1.442695
        %v1114 = vpow.pop %v1113
        %v1115 = vmul.f32 %v1062, 1.442695
        %v1116 = vpow.pop %v1115
        %v1117 = vmul.f32 %v1063, 1.442695
        %v1118 = vpow.pop %v1117
        %v1119 = vmul.f32 %v1064, 1.442695
        %v1120 = vpow.pop %v1119
        %v1121 = vmul.f32 %v1065, 1.442695
        %v1122 = vpow.pop %v1121
        %v1123 = vmul.f32 %v1066, 1.442695
        %v1124 = vpow.pop %v1123
        %v1125 = vmul.f32 %v1067, 1.442695
        %v1126 = vpow.pop %v1125
        %v1127 = vmul.f32 %v1068, 1.442695
        %v1128 = vpow.pop %v1127
        %v1129 = vmul.f32 %v1069, 1.442695
        %v1130 = vpow.pop %v1129
        %v1131 = vmul.f32 %v1070, 1.442695
        %v1132 = vpow.pop %v1131
        %v1133 = vmul.f32 %v1071, 1.442695
        %v1134 = vpow.pop %v1133
        %v1135 = vmul.f32 %v1072, 1.442695
        %v1136 = vpow.pop %v1135
        %1138 = vset.pattern.permute.xlu0 0
        %1139 = vperm.xlu0 %1138, %v1009
        %v1140 = vpop.permute.xlu0 %1139
        %1143 = vset.pattern.permute.xlu0 0
        %1144 = vperm.xlu0 %1143, %v1010
        %v1145 = vpop.permute.xlu0 %1144
        %1148 = vset.pattern.permute.xlu0 0
        %1149 = vperm.xlu0 %1148, %v1011
        %v1150 = vpop.permute.xlu0 %1149
        %1153 = vset.pattern.permute.xlu0 0
        %1154 = vperm.xlu0 %1153, %v1012
        %v1155 = vpop.permute.xlu0 %1154
        %1158 = vset.pattern.permute.xlu0 0
        %1159 = vperm.xlu0 %1158, %v1013
        %v1160 = vpop.permute.xlu0 %1159
        %1163 = vset.pattern.permute.xlu0 0
        %1164 = vperm.xlu0 %1163, %v1014
        %v1165 = vpop.permute.xlu0 %1164
        %1168 = vset.pattern.permute.xlu0 0
        %1169 = vperm.xlu0 %1168, %v1015
        %v1170 = vpop.permute.xlu0 %1169
        %1173 = vset.pattern.permute.xlu0 0
        %1174 = vperm.xlu0 %1173, %v1016
        %v1175 = vpop.permute.xlu0 %1174
        %1178 = vset.pattern.permute.xlu0 0
        %1179 = vperm.xlu0 %1178, %v1017
        %v1180 = vpop.permute.xlu0 %1179
        %1183 = vset.pattern.permute.xlu0 0
        %1184 = vperm.xlu0 %1183, %v1018
        %v1185 = vpop.permute.xlu0 %1184
        %1188 = vset.pattern.permute.xlu0 0
        %1189 = vperm.xlu0 %1188, %v1019
        %v1190 = vpop.permute.xlu0 %1189
        %1193 = vset.pattern.permute.xlu0 0
        %1194 = vperm.xlu0 %1193, %v1020
        %v1195 = vpop.permute.xlu0 %1194
        %1198 = vset.pattern.permute.xlu0 0
        %1199 = vperm.xlu0 %1198, %v1021
        %v1200 = vpop.permute.xlu0 %1199
        %1203 = vset.pattern.permute.xlu0 0
        %1204 = vperm.xlu0 %1203, %v1022
        %v1205 = vpop.permute.xlu0 %1204
        %1208 = vset.pattern.permute.xlu0 0
        %1209 = vperm.xlu0 %1208, %v1023
        %v1210 = vpop.permute.xlu0 %1209
        %1213 = vset.pattern.permute.xlu0 0
        %1214 = vperm.xlu0 %1213, %v1024
        %v1215 = vpop.permute.xlu0 %1214
        %1218 = vset.pattern.permute.xlu0 0
        %1219 = vperm.xlu0 %1218, %v1025
        %v1220 = vpop.permute.xlu0 %1219
        %1223 = vset.pattern.permute.xlu0 0
        %1224 = vperm.xlu0 %1223, %v1026
        %v1225 = vpop.permute.xlu0 %1224
        %1228 = vset.pattern.permute.xlu0 0
        %1229 = vperm.xlu0 %1228, %v1027
        %v1230 = vpop.permute.xlu0 %1229
        %1233 = vset.pattern.permute.xlu0 0
        %1234 = vperm.xlu0 %1233, %v1028
        %v1235 = vpop.permute.xlu0 %1234
        %1238 = vset.pattern.permute.xlu0 0
        %1239 = vperm.xlu0 %1238, %v1029
        %v1240 = vpop.permute.xlu0 %1239
        %1243 = vset.pattern.permute.xlu0 0
        %1244 = vperm.xlu0 %1243, %v1030
        %v1245 = vpop.permute.xlu0 %1244
        %1248 = vset.pattern.permute.xlu0 0
        %1249 = vperm.xlu0 %1248, %v1031
        %v1250 = vpop.permute.xlu0 %1249
        %1253 = vset.pattern.permute.xlu0 0
        %1254 = vperm.xlu0 %1253, %v1032
        %v1255 = vpop.permute.xlu0 %1254
        %1258 = vset.pattern.permute.xlu0 0
        %1259 = vperm.xlu0 %1258, %v1033
        %v1260 = vpop.permute.xlu0 %1259
        %1263 = vset.pattern.permute.xlu0 0
        %1264 = vperm.xlu0 %1263, %v1034
        %v1265 = vpop.permute.xlu0 %1264
        %1268 = vset.pattern.permute.xlu0 0
        %1269 = vperm.xlu0 %1268, %v1035
        %v1270 = vpop.permute.xlu0 %1269
        %1273 = vset.pattern.permute.xlu0 0
        %1274 = vperm.xlu0 %1273, %v1036
        %v1275 = vpop.permute.xlu0 %1274
        %1278 = vset.pattern.permute.xlu0 0
        %1279 = vperm.xlu0 %1278, %v1037
        %v1280 = vpop.permute.xlu0 %1279
        %1283 = vset.pattern.permute.xlu0 0
        %1284 = vperm.xlu0 %1283, %v1038
        %v1285 = vpop.permute.xlu0 %1284
        %1288 = vset.pattern.permute.xlu0 0
        %1289 = vperm.xlu0 %1288, %v1039
        %v1290 = vpop.permute.xlu0 %1289
        %1293 = vset.pattern.permute.xlu0 0
        %1294 = vperm.xlu0 %1293, %v1040
        %v1295 = vpop.permute.xlu0 %1294
        %v1297 = vsub.f32 %v817, %v1140
        %v1298 = vsub.f32 %v818, %v1140
        %v1299 = vsub.f32 %v819, %v1145
        %v1300 = vsub.f32 %v820, %v1145
        %v1301 = vsub.f32 %v821, %v1150
        %v1302 = vsub.f32 %v822, %v1150
        %v1303 = vsub.f32 %v823, %v1155
        %v1304 = vsub.f32 %v824, %v1155
        %v1305 = vsub.f32 %v825, %v1160
        %v1306 = vsub.f32 %v826, %v1160
        %v1307 = vsub.f32 %v827, %v1165
        %v1308 = vsub.f32 %v828, %v1165
        %v1309 = vsub.f32 %v829, %v1170
        %v1310 = vsub.f32 %v830, %v1170
        %v1311 = vsub.f32 %v831, %v1175
        %v1312 = vsub.f32 %v832, %v1175
        %v1313 = vsub.f32 %v833, %v1180
        %v1314 = vsub.f32 %v834, %v1180
        %v1315 = vsub.f32 %v835, %v1185
        %v1316 = vsub.f32 %v836, %v1185
        %v1317 = vsub.f32 %v837, %v1190
        %v1318 = vsub.f32 %v838, %v1190
        %v1319 = vsub.f32 %v839, %v1195
        %v1320 = vsub.f32 %v840, %v1195
        %v1321 = vsub.f32 %v841, %v1200
        %v1322 = vsub.f32 %v842, %v1200
        %v1323 = vsub.f32 %v843, %v1205
        %v1324 = vsub.f32 %v844, %v1205
        %v1325 = vsub.f32 %v845, %v1210
        %v1326 = vsub.f32 %v846, %v1210
        %v1327 = vsub.f32 %v847, %v1215
        %v1328 = vsub.f32 %v848, %v1215
        %v1329 = vsub.f32 %v849, %v1220
        %v1330 = vsub.f32 %v850, %v1220
        %v1331 = vsub.f32 %v851, %v1225
        %v1332 = vsub.f32 %v852, %v1225
        %v1333 = vsub.f32 %v853, %v1230
        %v1334 = vsub.f32 %v854, %v1230
        %v1335 = vsub.f32 %v855, %v1235
        %v1336 = vsub.f32 %v856, %v1235
        %v1337 = vsub.f32 %v857, %v1240
        %v1338 = vsub.f32 %v858, %v1240
        %v1339 = vsub.f32 %v859, %v1245
        %v1340 = vsub.f32 %v860, %v1245
        %v1341 = vsub.f32 %v861, %v1250
        %v1342 = vsub.f32 %v862, %v1250
        %v1343 = vsub.f32 %v863, %v1255
        %v1344 = vsub.f32 %v864, %v1255
        %v1345 = vsub.f32 %v865, %v1260
        %v1346 = vsub.f32 %v866, %v1260
        %v1347 = vsub.f32 %v867, %v1265
        %v1348 = vsub.f32 %v868, %v1265
        %v1349 = vsub.f32 %v869, %v1270
        %v1350 = vsub.f32 %v870, %v1270
        %v1351 = vsub.f32 %v871, %v1275
        %v1352 = vsub.f32 %v872, %v1275
        %v1353 = vsub.f32 %v873, %v1280
        %v1354 = vsub.f32 %v874, %v1280
        %v1355 = vsub.f32 %v875, %v1285
        %v1356 = vsub.f32 %v876, %v1285
        %v1357 = vsub.f32 %v877, %v1290
        %v1358 = vsub.f32 %v878, %v1290
        %v1359 = vsub.f32 %v879, %v1295
        %v1360 = vsub.f32 %v880, %v1295
        %v1361 = vmul.f32 %v1297, 1.442695
        %v1362 = vpow.pop %v1361
        %v1363 = vmul.f32 %v1298, 1.442695
        %v1364 = vpow.pop %v1363
        %v1365 = vmul.f32 %v1299, 1.442695
        %v1366 = vpow.pop %v1365
        %v1367 = vmul.f32 %v1300, 1.442695
        %v1368 = vpow.pop %v1367
        %v1369 = vmul.f32 %v1301, 1.442695
        %v1370 = vpow.pop %v1369
        %v1371 = vmul.f32 %v1302, 1.442695
        %v1372 = vpow.pop %v1371
        %v1373 = vmul.f32 %v1303, 1.442695
        %v1374 = vpow.pop %v1373
        %v1375 = vmul.f32 %v1304, 1.442695
        %v1376 = vpow.pop %v1375
        %v1377 = vmul.f32 %v1305, 1.442695
        %v1378 = vpow.pop %v1377
        %v1379 = vmul.f32 %v1306, 1.442695
        %v1380 = vpow.pop %v1379
        %v1381 = vmul.f32 %v1307, 1.442695
        %v1382 = vpow.pop %v1381
        %v1383 = vmul.f32 %v1308, 1.442695
        %v1384 = vpow.pop %v1383
        %v1385 = vmul.f32 %v1309, 1.442695
        %v1386 = vpow.pop %v1385
        %v1387 = vmul.f32 %v1310, 1.442695
        %v1388 = vpow.pop %v1387
        %v1389 = vmul.f32 %v1311, 1.442695
        %v1390 = vpow.pop %v1389
        %v1391 = vmul.f32 %v1312, 1.442695
        %v1392 = vpow.pop %v1391
        %v1393 = vmul.f32 %v1313, 1.442695
        %v1394 = vpow.pop %v1393
        %v1395 = vmul.f32 %v1314, 1.442695
        %v1396 = vpow.pop %v1395
        %v1397 = vmul.f32 %v1315, 1.442695
        %v1398 = vpow.pop %v1397
        %v1399 = vmul.f32 %v1316, 1.442695
        %v1400 = vpow.pop %v1399
        %v1401 = vmul.f32 %v1317, 1.442695
        %v1402 = vpow.pop %v1401
        %v1403 = vmul.f32 %v1318, 1.442695
        %v1404 = vpow.pop %v1403
        %v1405 = vmul.f32 %v1319, 1.442695
        %v1406 = vpow.pop %v1405
        %v1407 = vmul.f32 %v1320, 1.442695
        %v1408 = vpow.pop %v1407
        %v1409 = vmul.f32 %v1321, 1.442695
        %v1410 = vpow.pop %v1409
        %v1411 = vmul.f32 %v1322, 1.442695
        %v1412 = vpow.pop %v1411
        %v1413 = vmul.f32 %v1323, 1.442695
        %v1414 = vpow.pop %v1413
        %v1415 = vmul.f32 %v1324, 1.442695
        %v1416 = vpow.pop %v1415
        %v1417 = vmul.f32 %v1325, 1.442695
        %v1418 = vpow.pop %v1417
        %v1419 = vmul.f32 %v1326, 1.442695
        %v1420 = vpow.pop %v1419
        %v1421 = vmul.f32 %v1327, 1.442695
        %v1422 = vpow.pop %v1421
        %v1423 = vmul.f32 %v1328, 1.442695
        %v1424 = vpow.pop %v1423
        %v1425 = vmul.f32 %v1329, 1.442695
        %v1426 = vpow.pop %v1425
        %v1427 = vmul.f32 %v1330, 1.442695
        %v1428 = vpow.pop %v1427
        %v1429 = vmul.f32 %v1331, 1.442695
        %v1430 = vpow.pop %v1429
        %v1431 = vmul.f32 %v1332, 1.442695
        %v1432 = vpow.pop %v1431
        %v1433 = vmul.f32 %v1333, 1.442695
        %v1434 = vpow.pop %v1433
        %v1435 = vmul.f32 %v1334, 1.442695
        %v1436 = vpow.pop %v1435
        %v1437 = vmul.f32 %v1335, 1.442695
        %v1438 = vpow.pop %v1437
        %v1439 = vmul.f32 %v1336, 1.442695
        %v1440 = vpow.pop %v1439
        %v1441 = vmul.f32 %v1337, 1.442695
        %v1442 = vpow.pop %v1441
        %v1443 = vmul.f32 %v1338, 1.442695
        %v1444 = vpow.pop %v1443
        %v1445 = vmul.f32 %v1339, 1.442695
        %v1446 = vpow.pop %v1445
        %v1447 = vmul.f32 %v1340, 1.442695
        %v1448 = vpow.pop %v1447
        %v1449 = vmul.f32 %v1341, 1.442695
        %v1450 = vpow.pop %v1449
        %v1451 = vmul.f32 %v1342, 1.442695
        %v1452 = vpow.pop %v1451
        %v1453 = vmul.f32 %v1343, 1.442695
        %v1454 = vpow.pop %v1453
        %v1455 = vmul.f32 %v1344, 1.442695
        %v1456 = vpow.pop %v1455
        %v1457 = vmul.f32 %v1345, 1.442695
        %v1458 = vpow.pop %v1457
        %v1459 = vmul.f32 %v1346, 1.442695
        %v1460 = vpow.pop %v1459
        %v1461 = vmul.f32 %v1347, 1.442695
        %v1462 = vpow.pop %v1461
        %v1463 = vmul.f32 %v1348, 1.442695
        %v1464 = vpow.pop %v1463
        %v1465 = vmul.f32 %v1349, 1.442695
        %v1466 = vpow.pop %v1465
        %v1467 = vmul.f32 %v1350, 1.442695
        %v1468 = vpow.pop %v1467
        %v1469 = vmul.f32 %v1351, 1.442695
        %v1470 = vpow.pop %v1469
        %v1471 = vmul.f32 %v1352, 1.442695
        %v1472 = vpow.pop %v1471
        %v1473 = vmul.f32 %v1353, 1.442695
        %v1474 = vpow.pop %v1473
        %v1475 = vmul.f32 %v1354, 1.442695
        %v1476 = vpow.pop %v1475
        %v1477 = vmul.f32 %v1355, 1.442695
        %v1478 = vpow.pop %v1477
        %v1479 = vmul.f32 %v1356, 1.442695
        %v1480 = vpow.pop %v1479
        %v1481 = vmul.f32 %v1357, 1.442695
        %v1482 = vpow.pop %v1481
        %v1483 = vmul.f32 %v1358, 1.442695
        %v1484 = vpow.pop %v1483
        %v1485 = vmul.f32 %v1359, 1.442695
        %v1486 = vpow.pop %v1485
        %v1487 = vmul.f32 %v1360, 1.442695
        %v1488 = vpow.pop %v1487
        %v1489 = vpack.c.bf16 %v1366, %v1362
        %v1490 = vpack.c.bf16 %v1368, %v1364
        %v1491 = vpack.c.bf16 %v1374, %v1370
        %v1492 = vpack.c.bf16 %v1376, %v1372
        %v1493 = vpack.c.bf16 %v1382, %v1378
        %v1494 = vpack.c.bf16 %v1384, %v1380
        %v1495 = vpack.c.bf16 %v1390, %v1386
        %v1496 = vpack.c.bf16 %v1392, %v1388
        %v1497 = vpack.c.bf16 %v1398, %v1394
        %v1498 = vpack.c.bf16 %v1400, %v1396
        %v1499 = vpack.c.bf16 %v1406, %v1402
        %v1500 = vpack.c.bf16 %v1408, %v1404
        %v1501 = vpack.c.bf16 %v1414, %v1410
        %v1502 = vpack.c.bf16 %v1416, %v1412
        %v1503 = vpack.c.bf16 %v1422, %v1418
        %v1504 = vpack.c.bf16 %v1424, %v1420
        %v1505 = vpack.c.bf16 %v1430, %v1426
        %v1506 = vpack.c.bf16 %v1432, %v1428
        %v1507 = vpack.c.bf16 %v1438, %v1434
        %v1508 = vpack.c.bf16 %v1440, %v1436
        %v1509 = vpack.c.bf16 %v1446, %v1442
        %v1510 = vpack.c.bf16 %v1448, %v1444
        %v1511 = vpack.c.bf16 %v1454, %v1450
        %v1512 = vpack.c.bf16 %v1456, %v1452
        %v1513 = vpack.c.bf16 %v1462, %v1458
        %v1514 = vpack.c.bf16 %v1464, %v1460
        %v1515 = vpack.c.bf16 %v1470, %v1466
        %v1516 = vpack.c.bf16 %v1472, %v1468
        %v1517 = vpack.c.bf16 %v1478, %v1474
        %v1518 = vpack.c.bf16 %v1480, %v1476
        %v1519 = vpack.c.bf16 %v1486, %v1482
        %v1520 = vpack.c.bf16 %v1488, %v1484
        %v1521 = vld [vmem:[#allocation3] sm:$0xff]
        %v1522 = vld [vmem:[#allocation3 + $0x8] sm:$0xff]
        %v1523 = vld [vmem:[#allocation3 + $0x10] sm:$0xff]
        %v1524 = vld [vmem:[#allocation3 + $0x18] sm:$0xff]
        %v1525 = vld [vmem:[#allocation3 + $0x20] sm:$0xff]
        %v1526 = vld [vmem:[#allocation3 + $0x28] sm:$0xff]
        %v1527 = vld [vmem:[#allocation3 + $0x30] sm:$0xff]
        %v1528 = vld [vmem:[#allocation3 + $0x38] sm:$0xff]
        %v1529 = vld [vmem:[#allocation3 + $0x40] sm:$0xff]
        %v1530 = vld [vmem:[#allocation3 + $0x48] sm:$0xff]
        %v1531 = vld [vmem:[#allocation3 + $0x50] sm:$0xff]
        %v1532 = vld [vmem:[#allocation3 + $0x58] sm:$0xff]
        %v1533 = vld [vmem:[#allocation3 + $0x60] sm:$0xff]
        %v1534 = vld [vmem:[#allocation3 + $0x68] sm:$0xff]
        %v1535 = vld [vmem:[#allocation3 + $0x70] sm:$0xff]
        %v1536 = vld [vmem:[#allocation3 + $0x78] sm:$0xff]
        %v1537 = vld [vmem:[#allocation3 + $0x80] sm:$0xff]
        %v1538 = vld [vmem:[#allocation3 + $0x88] sm:$0xff]
        %v1539 = vld [vmem:[#allocation3 + $0x90] sm:$0xff]
        %v1540 = vld [vmem:[#allocation3 + $0x98] sm:$0xff]
        %v1541 = vld [vmem:[#allocation3 + $0xa0] sm:$0xff]
        %v1542 = vld [vmem:[#allocation3 + $0xa8] sm:$0xff]
        %v1543 = vld [vmem:[#allocation3 + $0xb0] sm:$0xff]
        %v1544 = vld [vmem:[#allocation3 + $0xb8] sm:$0xff]
        %v1545 = vld [vmem:[#allocation3 + $0xc0] sm:$0xff]
        %v1546 = vld [vmem:[#allocation3 + $0xc8] sm:$0xff]
        %v1547 = vld [vmem:[#allocation3 + $0xd0] sm:$0xff]
        %v1548 = vld [vmem:[#allocation3 + $0xd8] sm:$0xff]
        %v1549 = vld [vmem:[#allocation3 + $0xe0] sm:$0xff]
        %v1550 = vld [vmem:[#allocation3 + $0xe8] sm:$0xff]
        %v1551 = vld [vmem:[#allocation3 + $0xf0] sm:$0xff]
        %v1552 = vld [vmem:[#allocation3 + $0xf8] sm:$0xff]
        %1554 = vset.pattern.permute.xlu0 0
        %1555 = vperm.xlu0 %1554, %v1074
        %v1556 = vpop.permute.xlu0 %1555
        %1559 = vset.pattern.permute.xlu0 0
        %1560 = vperm.xlu0 %1559, %v1076
        %v1561 = vpop.permute.xlu0 %1560
        %1564 = vset.pattern.permute.xlu0 0
        %1565 = vperm.xlu0 %1564, %v1078
        %v1566 = vpop.permute.xlu0 %1565
        %1569 = vset.pattern.permute.xlu0 0
        %1570 = vperm.xlu0 %1569, %v1080
        %v1571 = vpop.permute.xlu0 %1570
        %1574 = vset.pattern.permute.xlu0 0
        %1575 = vperm.xlu0 %1574, %v1082
        %v1576 = vpop.permute.xlu0 %1575
        %1579 = vset.pattern.permute.xlu0 0
        %1580 = vperm.xlu0 %1579, %v1084
        %v1581 = vpop.permute.xlu0 %1580
        %1584 = vset.pattern.permute.xlu0 0
        %1585 = vperm.xlu0 %1584, %v1086
        %v1586 = vpop.permute.xlu0 %1585
        %1589 = vset.pattern.permute.xlu0 0
        %1590 = vperm.xlu0 %1589, %v1088
        %v1591 = vpop.permute.xlu0 %1590
        %1594 = vset.pattern.permute.xlu0 0
        %1595 = vperm.xlu0 %1594, %v1090
        %v1596 = vpop.permute.xlu0 %1595
        %1599 = vset.pattern.permute.xlu0 0
        %1600 = vperm.xlu0 %1599, %v1092
        %v1601 = vpop.permute.xlu0 %1600
        %1604 = vset.pattern.permute.xlu0 0
        %1605 = vperm.xlu0 %1604, %v1094
        %v1606 = vpop.permute.xlu0 %1605
        %1609 = vset.pattern.permute.xlu0 0
        %1610 = vperm.xlu0 %1609, %v1096
        %v1611 = vpop.permute.xlu0 %1610
        %1614 = vset.pattern.permute.xlu0 0
        %1615 = vperm.xlu0 %1614, %v1098
        %v1616 = vpop.permute.xlu0 %1615
        %1619 = vset.pattern.permute.xlu0 0
        %1620 = vperm.xlu0 %1619, %v1100
        %v1621 = vpop.permute.xlu0 %1620
        %1624 = vset.pattern.permute.xlu0 0
        %1625 = vperm.xlu0 %1624, %v1102
        %v1626 = vpop.permute.xlu0 %1625
        %1629 = vset.pattern.permute.xlu0 0
        %1630 = vperm.xlu0 %1629, %v1104
        %v1631 = vpop.permute.xlu0 %1630
        %1634 = vset.pattern.permute.xlu0 0
        %1635 = vperm.xlu0 %1634, %v1106
        %v1636 = vpop.permute.xlu0 %1635
        %1639 = vset.pattern.permute.xlu0 0
        %1640 = vperm.xlu0 %1639, %v1108
        %v1641 = vpop.permute.xlu0 %1640
        %1644 = vset.pattern.permute.xlu0 0
        %1645 = vperm.xlu0 %1644, %v1110
        %v1646 = vpop.permute.xlu0 %1645
        %1649 = vset.pattern.permute.xlu0 0
        %1650 = vperm.xlu0 %1649, %v1112
        %v1651 = vpop.permute.xlu0 %1650
        %1654 = vset.pattern.permute.xlu0 0
        %1655 = vperm.xlu0 %1654, %v1114
        %v1656 = vpop.permute.xlu0 %1655
        %1659 = vset.pattern.permute.xlu0 0
        %1660 = vperm.xlu0 %1659, %v1116
        %v1661 = vpop.permute.xlu0 %1660
        %1664 = vset.pattern.permute.xlu0 0
        %1665 = vperm.xlu0 %1664, %v1118
        %v1666 = vpop.permute.xlu0 %1665
        %1669 = vset.pattern.permute.xlu0 0
        %1670 = vperm.xlu0 %1669, %v1120
        %v1671 = vpop.permute.xlu0 %1670
        %1674 = vset.pattern.permute.xlu0 0
        %1675 = vperm.xlu0 %1674, %v1122
        %v1676 = vpop.permute.xlu0 %1675
        %1679 = vset.pattern.permute.xlu0 0
        %1680 = vperm.xlu0 %1679, %v1124
        %v1681 = vpop.permute.xlu0 %1680
        %1684 = vset.pattern.permute.xlu0 0
        %1685 = vperm.xlu0 %1684, %v1126
        %v1686 = vpop.permute.xlu0 %1685
        %1689 = vset.pattern.permute.xlu0 0
        %1690 = vperm.xlu0 %1689, %v1128
        %v1691 = vpop.permute.xlu0 %1690
        %1694 = vset.pattern.permute.xlu0 0
        %1695 = vperm.xlu0 %1694, %v1130
        %v1696 = vpop.permute.xlu0 %1695
        %1699 = vset.pattern.permute.xlu0 0
        %1700 = vperm.xlu0 %1699, %v1132
        %v1701 = vpop.permute.xlu0 %1700
        %1704 = vset.pattern.permute.xlu0 0
        %1705 = vperm.xlu0 %1704, %v1134
        %v1706 = vpop.permute.xlu0 %1705
        %1709 = vset.pattern.permute.xlu0 0
        %1710 = vperm.xlu0 %1709, %v1136
        %v1711 = vpop.permute.xlu0 %1710
        %v1713 = vmul.f32 %v1556, %v1521
        %v1714 = vmul.f32 %v1561, %v1522
        %v1715 = vmul.f32 %v1566, %v1523
        %v1716 = vmul.f32 %v1571, %v1524
        %v1717 = vmul.f32 %v1576, %v1525
        %v1718 = vmul.f32 %v1581, %v1526
        %v1719 = vmul.f32 %v1586, %v1527
        %v1720 = vmul.f32 %v1591, %v1528
        %v1721 = vmul.f32 %v1596, %v1529
        %v1722 = vmul.f32 %v1601, %v1530
        %v1723 = vmul.f32 %v1606, %v1531
        %v1724 = vmul.f32 %v1611, %v1532
        %v1725 = vmul.f32 %v1616, %v1533
        %v1726 = vmul.f32 %v1621, %v1534
        %v1727 = vmul.f32 %v1626, %v1535
        %v1728 = vmul.f32 %v1631, %v1536
        %v1729 = vmul.f32 %v1636, %v1537
        %v1730 = vmul.f32 %v1641, %v1538
        %v1731 = vmul.f32 %v1646, %v1539
        %v1732 = vmul.f32 %v1651, %v1540
        %v1733 = vmul.f32 %v1656, %v1541
        %v1734 = vmul.f32 %v1661, %v1542
        %v1735 = vmul.f32 %v1666, %v1543
        %v1736 = vmul.f32 %v1671, %v1544
        %v1737 = vmul.f32 %v1676, %v1545
        %v1738 = vmul.f32 %v1681, %v1546
        %v1739 = vmul.f32 %v1686, %v1547
        %v1740 = vmul.f32 %v1691, %v1548
        %v1741 = vmul.f32 %v1696, %v1549
        %v1742 = vmul.f32 %v1701, %v1550
        %v1743 = vmul.f32 %v1706, %v1551
        %v1744 = vmul.f32 %v1711, %v1552
        %v1745 = vld [vmem:[%s371] sm:$0xf]
        %v1746 = vld [vmem:[%s371 + $0x4] sm:$0xf]
        %v1747 = vld [vmem:[%s371 + $0x8] sm:$0xf]
        %v1748 = vld [vmem:[%s371 + $0xc] sm:$0xf]
        %v1749 = vld [vmem:[%s371 + $0x10] sm:$0xf]
        %v1750 = vld [vmem:[%s371 + $0x14] sm:$0xf]
        %v1751 = vld [vmem:[%s371 + $0x18] sm:$0xf]
        %v1752 = vld [vmem:[%s371 + $0x1c] sm:$0xf]
        %v1753 = vld [vmem:[%s371 + $0x20] sm:$0xf]
        %v1754 = vld [vmem:[%s371 + $0x24] sm:$0xf]
        %v1755 = vld [vmem:[%s371 + $0x28] sm:$0xf]
        %v1756 = vld [vmem:[%s371 + $0x2c] sm:$0xf]
        %v1757 = vld [vmem:[%s371 + $0x30] sm:$0xf]
        %v1758 = vld [vmem:[%s371 + $0x34] sm:$0xf]
        %v1759 = vld [vmem:[%s371 + $0x38] sm:$0xf]
        %v1760 = vld [vmem:[%s371 + $0x3c] sm:$0xf]
        %v1761 = vld [vmem:[%s371 + $0x40] sm:$0xf]
        %v1762 = vld [vmem:[%s371 + $0x44] sm:$0xf]
        %v1763 = vld [vmem:[%s371 + $0x48] sm:$0xf]
        %v1764 = vld [vmem:[%s371 + $0x4c] sm:$0xf]
        %v1765 = vld [vmem:[%s371 + $0x50] sm:$0xf]
        %v1766 = vld [vmem:[%s371 + $0x54] sm:$0xf]
        %v1767 = vld [vmem:[%s371 + $0x58] sm:$0xf]
        %v1768 = vld [vmem:[%s371 + $0x5c] sm:$0xf]
        %v1769 = vld [vmem:[%s371 + $0x60] sm:$0xf]
        %v1770 = vld [vmem:[%s371 + $0x64] sm:$0xf]
        %v1771 = vld [vmem:[%s371 + $0x68] sm:$0xf]
        %v1772 = vld [vmem:[%s371 + $0x6c] sm:$0xf]
        %v1773 = vld [vmem:[%s371 + $0x70] sm:$0xf]
        %v1774 = vld [vmem:[%s371 + $0x74] sm:$0xf]
        %v1775 = vld [vmem:[%s371 + $0x78] sm:$0xf]
        %v1776 = vld [vmem:[%s371 + $0x7c] sm:$0xf]
        %v1809 = vunpack.c.l.b16 %v1745
        %v1810 = vunpack.c.l.b16 %v1746
        %v1811 = vunpack.c.l.b16 %v1747
        %v1812 = vunpack.c.l.b16 %v1748
        %v1813 = vunpack.c.l.b16 %v1749
        %v1814 = vunpack.c.l.b16 %v1750
        %v1815 = vunpack.c.l.b16 %v1751
        %v1816 = vunpack.c.l.b16 %v1752
        %v1817 = vunpack.c.l.b16 %v1753
        %v1818 = vunpack.c.l.b16 %v1754
        %v1819 = vunpack.c.l.b16 %v1755
        %v1820 = vunpack.c.l.b16 %v1756
        %v1821 = vunpack.c.l.b16 %v1757
        %v1822 = vunpack.c.l.b16 %v1758
        %v1823 = vunpack.c.l.b16 %v1759
        %v1824 = vunpack.c.l.b16 %v1760
        %v1825 = vunpack.c.l.b16 %v1761
        %v1826 = vunpack.c.l.b16 %v1762
        %v1827 = vunpack.c.l.b16 %v1763
        %v1828 = vunpack.c.l.b16 %v1764
        %v1829 = vunpack.c.l.b16 %v1765
        %v1830 = vunpack.c.l.b16 %v1766
        %v1831 = vunpack.c.l.b16 %v1767
        %v1832 = vunpack.c.l.b16 %v1768
        %v1833 = vunpack.c.l.b16 %v1769
        %v1834 = vunpack.c.l.b16 %v1770
        %v1835 = vunpack.c.l.b16 %v1771
        %v1836 = vunpack.c.l.b16 %v1772
        %v1837 = vunpack.c.l.b16 %v1773
        %v1838 = vunpack.c.l.b16 %v1774
        %v1839 = vunpack.c.l.b16 %v1775
        %v1840 = vunpack.c.l.b16 %v1776
        %v1841 = vpack.c.b16 %v1810, %v1809
        %v1842 = vpack.c.b16 %v1812, %v1811
        %v1843 = vpack.c.b16 %v1814, %v1813
        %v1844 = vpack.c.b16 %v1816, %v1815
        %v1845 = vpack.c.b16 %v1818, %v1817
        %v1846 = vpack.c.b16 %v1820, %v1819
        %v1847 = vpack.c.b16 %v1822, %v1821
        %v1848 = vpack.c.b16 %v1824, %v1823
        %v1849 = vpack.c.b16 %v1826, %v1825
        %v1850 = vpack.c.b16 %v1828, %v1827
        %v1851 = vpack.c.b16 %v1830, %v1829
        %v1852 = vpack.c.b16 %v1832, %v1831
        %v1853 = vpack.c.b16 %v1834, %v1833
        %v1854 = vpack.c.b16 %v1836, %v1835
        %v1855 = vpack.c.b16 %v1838, %v1837
        %v1856 = vpack.c.b16 %v1840, %v1839
        %1873 = vmatpush.bf16.msra.mxu0 %v1848
        %1874 = vmatpush.bf16.msra.mxu0 %v1847
        %1875 = vmatpush.bf16.msra.mxu0 %v1846
        %1876 = vmatpush.bf16.msra.mxu0 %v1845
        %1877 = vmatpush.bf16.msra.mxu0 %v1844
        %1878 = vmatpush.bf16.msra.mxu0 %v1843
        %1879 = vmatpush.bf16.msra.mxu0 %v1842
        %1880 = vmatpush.bf16.msra.mxu0 %v1841
        %1881 = vmatmul.bf16.gmra.mxu0 %v1489
        %v1882 = vpop.f32.mrf.mxu0
        %v1883 = vadd.f32 0.0, %v1882
        %v1884 = vpop.f32.mrf.mxu0
        %v1885 = vadd.f32 0.0, %v1884
        %1886 = vmatmul.bf16.gmra.mxu0 %v1491
        %v1887 = vpop.f32.mrf.mxu0
        %v1888 = vadd.f32 0.0, %v1887
        %v1889 = vpop.f32.mrf.mxu0
        %v1890 = vadd.f32 0.0, %v1889
        %1891 = vmatmul.bf16.gmra.mxu0 %v1493
        %v1892 = vpop.f32.mrf.mxu0
        %v1893 = vadd.f32 0.0, %v1892
        %v1894 = vpop.f32.mrf.mxu0
        %v1895 = vadd.f32 0.0, %v1894
        %1896 = vmatmul.bf16.gmra.mxu0 %v1495
        %v1897 = vpop.f32.mrf.mxu0
        %v1898 = vadd.f32 0.0, %v1897
        %v1899 = vpop.f32.mrf.mxu0
        %v1900 = vadd.f32 0.0, %v1899
        %1901 = vmatmul.bf16.gmra.mxu0 %v1497
        %v1902 = vpop.f32.mrf.mxu0
        %v1903 = vadd.f32 0.0, %v1902
        %v1904 = vpop.f32.mrf.mxu0
        %v1905 = vadd.f32 0.0, %v1904
        %1906 = vmatmul.bf16.gmra.mxu0 %v1499
        %v1907 = vpop.f32.mrf.mxu0
        %v1908 = vadd.f32 0.0, %v1907
        %v1909 = vpop.f32.mrf.mxu0
        %v1910 = vadd.f32 0.0, %v1909
        %1911 = vmatmul.bf16.gmra.mxu0 %v1501
        %v1912 = vpop.f32.mrf.mxu0
        %v1913 = vadd.f32 0.0, %v1912
        %v1914 = vpop.f32.mrf.mxu0
        %v1915 = vadd.f32 0.0, %v1914
        %1916 = vmatmul.bf16.gmra.mxu0 %v1503
        %v1917 = vpop.f32.mrf.mxu0
        %v1918 = vadd.f32 0.0, %v1917
        %v1919 = vpop.f32.mrf.mxu0
        %v1920 = vadd.f32 0.0, %v1919
        %1921 = vmatmul.bf16.gmra.mxu0 %v1505
        %v1922 = vpop.f32.mrf.mxu0
        %v1923 = vadd.f32 0.0, %v1922
        %v1924 = vpop.f32.mrf.mxu0
        %v1925 = vadd.f32 0.0, %v1924
        %1926 = vmatmul.bf16.gmra.mxu0 %v1507
        %v1927 = vpop.f32.mrf.mxu0
        %v1928 = vadd.f32 0.0, %v1927
        %v1929 = vpop.f32.mrf.mxu0
        %v1930 = vadd.f32 0.0, %v1929
        %1931 = vmatmul.bf16.gmra.mxu0 %v1509
        %v1932 = vpop.f32.mrf.mxu0
        %v1933 = vadd.f32 0.0, %v1932
        %v1934 = vpop.f32.mrf.mxu0
        %v1935 = vadd.f32 0.0, %v1934
        %1936 = vmatmul.bf16.gmra.mxu0 %v1511
        %v1937 = vpop.f32.mrf.mxu0
        %v1938 = vadd.f32 0.0, %v1937
        %v1939 = vpop.f32.mrf.mxu0
        %v1940 = vadd.f32 0.0, %v1939
        %1941 = vmatmul.bf16.gmra.mxu0 %v1513
        %v1942 = vpop.f32.mrf.mxu0
        %v1943 = vadd.f32 0.0, %v1942
        %v1944 = vpop.f32.mrf.mxu0
        %v1945 = vadd.f32 0.0, %v1944
        %1946 = vmatmul.bf16.gmra.mxu0 %v1515
        %v1947 = vpop.f32.mrf.mxu0
        %v1948 = vadd.f32 0.0, %v1947
        %v1949 = vpop.f32.mrf.mxu0
        %v1950 = vadd.f32 0.0, %v1949
        %1951 = vmatmul.bf16.gmra.mxu0 %v1517
        %v1952 = vpop.f32.mrf.mxu0
        %v1953 = vadd.f32 0.0, %v1952
        %v1954 = vpop.f32.mrf.mxu0
        %v1955 = vadd.f32 0.0, %v1954
        %1956 = vmatmul.bf16.gmra.mxu0 %v1519
        %v1957 = vpop.f32.mrf.mxu0
        %v1958 = vadd.f32 0.0, %v1957
        %v1959 = vpop.f32.mrf.mxu0
        %v1960 = vadd.f32 0.0, %v1959
        %1961 = vdwg.mxu0
        %1962 = vmatpush.bf16.msra.mxu0 %v1856
        %1963 = vmatpush.bf16.msra.mxu0 %v1855
        %1964 = vmatpush.bf16.msra.mxu0 %v1854
        %1965 = vmatpush.bf16.msra.mxu0 %v1853
        %1966 = vmatpush.bf16.msra.mxu0 %v1852
        %1967 = vmatpush.bf16.msra.mxu0 %v1851
        %1968 = vmatpush.bf16.msra.mxu0 %v1850
        %1969 = vmatpush.bf16.msra.mxu0 %v1849
        %1970 = vmatmul.bf16.gmra.mxu0 %v1490
        %v1971 = vpop.f32.mrf.mxu0
        %v1972 = vadd.f32 %v1883, %v1971
        %v1973 = vpop.f32.mrf.mxu0
        %v1974 = vadd.f32 %v1885, %v1973
        %1975 = vmatmul.bf16.gmra.mxu0 %v1492
        %v1976 = vpop.f32.mrf.mxu0
        %v1977 = vadd.f32 %v1888, %v1976
        %v1978 = vpop.f32.mrf.mxu0
        %v1979 = vadd.f32 %v1890, %v1978
        %1980 = vmatmul.bf16.gmra.mxu0 %v1494
        %v1981 = vpop.f32.mrf.mxu0
        %v1982 = vadd.f32 %v1893, %v1981
        %v1983 = vpop.f32.mrf.mxu0
        %v1984 = vadd.f32 %v1895, %v1983
        %1985 = vmatmul.bf16.gmra.mxu0 %v1496
        %v1986 = vpop.f32.mrf.mxu0
        %v1987 = vadd.f32 %v1898, %v1986
        %v1988 = vpop.f32.mrf.mxu0
        %v1989 = vadd.f32 %v1900, %v1988
        %1990 = vmatmul.bf16.gmra.mxu0 %v1498
        %v1991 = vpop.f32.mrf.mxu0
        %v1992 = vadd.f32 %v1903, %v1991
        %v1993 = vpop.f32.mrf.mxu0
        %v1994 = vadd.f32 %v1905, %v1993
        %1995 = vmatmul.bf16.gmra.mxu0 %v1500
        %v1996 = vpop.f32.mrf.mxu0
        %v1997 = vadd.f32 %v1908, %v1996
        %v1998 = vpop.f32.mrf.mxu0
        %v1999 = vadd.f32 %v1910, %v1998
        %2000 = vmatmul.bf16.gmra.mxu0 %v1502
        %v2001 = vpop.f32.mrf.mxu0
        %v2002 = vadd.f32 %v1913, %v2001
        %v2003 = vpop.f32.mrf.mxu0
        %v2004 = vadd.f32 %v1915, %v2003
        %2005 = vmatmul.bf16.gmra.mxu0 %v1504
        %v2006 = vpop.f32.mrf.mxu0
        %v2007 = vadd.f32 %v1918, %v2006
        %v2008 = vpop.f32.mrf.mxu0
        %v2009 = vadd.f32 %v1920, %v2008
        %2010 = vmatmul.bf16.gmra.mxu0 %v1506
        %v2011 = vpop.f32.mrf.mxu0
        %v2012 = vadd.f32 %v1923, %v2011
        %v2013 = vpop.f32.mrf.mxu0
        %v2014 = vadd.f32 %v1925, %v2013
        %2015 = vmatmul.bf16.gmra.mxu0 %v1508
        %v2016 = vpop.f32.mrf.mxu0
        %v2017 = vadd.f32 %v1928, %v2016
        %v2018 = vpop.f32.mrf.mxu0
        %v2019 = vadd.f32 %v1930, %v2018
        %2020 = vmatmul.bf16.gmra.mxu0 %v1510
        %v2021 = vpop.f32.mrf.mxu0
        %v2022 = vadd.f32 %v1933, %v2021
        %v2023 = vpop.f32.mrf.mxu0
        %v2024 = vadd.f32 %v1935, %v2023
        %2025 = vmatmul.bf16.gmra.mxu0 %v1512
        %v2026 = vpop.f32.mrf.mxu0
        %v2027 = vadd.f32 %v1938, %v2026
        %v2028 = vpop.f32.mrf.mxu0
        %v2029 = vadd.f32 %v1940, %v2028
        %2030 = vmatmul.bf16.gmra.mxu0 %v1514
        %v2031 = vpop.f32.mrf.mxu0
        %v2032 = vadd.f32 %v1943, %v2031
        %v2033 = vpop.f32.mrf.mxu0
        %v2034 = vadd.f32 %v1945, %v2033
        %2035 = vmatmul.bf16.gmra.mxu0 %v1516
        %v2036 = vpop.f32.mrf.mxu0
        %v2037 = vadd.f32 %v1948, %v2036
        %v2038 = vpop.f32.mrf.mxu0
        %v2039 = vadd.f32 %v1950, %v2038
        %2040 = vmatmul.bf16.gmra.mxu0 %v1518
        %v2041 = vpop.f32.mrf.mxu0
        %v2042 = vadd.f32 %v1953, %v2041
        %v2043 = vpop.f32.mrf.mxu0
        %v2044 = vadd.f32 %v1955, %v2043
        %2045 = vmatmul.bf16.gmra.mxu0 %v1520
        %v2046 = vpop.f32.mrf.mxu0
        %v2047 = vadd.f32 %v1958, %v2046
        %v2048 = vpop.f32.mrf.mxu0
        %v2049 = vadd.f32 %v1960, %v2048
        %2050 = vdwg.mxu0
        %v2051 = vadd.f32 %v1713, %v1972
        %v2052 = vadd.f32 %v1714, %v1974
        %v2053 = vadd.f32 %v1715, %v1977
        %v2054 = vadd.f32 %v1716, %v1979
        %v2055 = vadd.f32 %v1717, %v1982
        %v2056 = vadd.f32 %v1718, %v1984
        %v2057 = vadd.f32 %v1719, %v1987
        %v2058 = vadd.f32 %v1720, %v1989
        %v2059 = vadd.f32 %v1721, %v1992
        %v2060 = vadd.f32 %v1722, %v1994
        %v2061 = vadd.f32 %v1723, %v1997
        %v2062 = vadd.f32 %v1724, %v1999
        %v2063 = vadd.f32 %v1725, %v2002
        %v2064 = vadd.f32 %v1726, %v2004
        %v2065 = vadd.f32 %v1727, %v2007
        %v2066 = vadd.f32 %v1728, %v2009
        %v2067 = vadd.f32 %v1729, %v2012
        %v2068 = vadd.f32 %v1730, %v2014
        %v2069 = vadd.f32 %v1731, %v2017
        %v2070 = vadd.f32 %v1732, %v2019
        %v2071 = vadd.f32 %v1733, %v2022
        %v2072 = vadd.f32 %v1734, %v2024
        %v2073 = vadd.f32 %v1735, %v2027
        %v2074 = vadd.f32 %v1736, %v2029
        %v2075 = vadd.f32 %v1737, %v2032
        %v2076 = vadd.f32 %v1738, %v2034
        %v2077 = vadd.f32 %v1739, %v2037
        %v2078 = vadd.f32 %v1740, %v2039
        %v2079 = vadd.f32 %v1741, %v2042
        %v2080 = vadd.f32 %v1742, %v2044
        %v2081 = vadd.f32 %v1743, %v2047
        %v2082 = vadd.f32 %v1744, %v2049
        %2083 = vst [vmem:[#allocation3] sm:$0xff] %v2051
        %2084 = vst [vmem:[#allocation3 + $0x8] sm:$0xff] %v2052
        %2085 = vst [vmem:[#allocation3 + $0x10] sm:$0xff] %v2053
        %2086 = vst [vmem:[#allocation3 + $0x18] sm:$0xff] %v2054
        %2087 = vst [vmem:[#allocation3 + $0x20] sm:$0xff] %v2055
        %2088 = vst [vmem:[#allocation3 + $0x28] sm:$0xff] %v2056
        %2089 = vst [vmem:[#allocation3 + $0x30] sm:$0xff] %v2057
        %2090 = vst [vmem:[#allocation3 + $0x38] sm:$0xff] %v2058
        %2091 = vst [vmem:[#allocation3 + $0x40] sm:$0xff] %v2059
        %2092 = vst [vmem:[#allocation3 + $0x48] sm:$0xff] %v2060
        %2093 = vst [vmem:[#allocation3 + $0x50] sm:$0xff] %v2061
        %2094 = vst [vmem:[#allocation3 + $0x58] sm:$0xff] %v2062
        %2095 = vst [vmem:[#allocation3 + $0x60] sm:$0xff] %v2063
        %2096 = vst [vmem:[#allocation3 + $0x68] sm:$0xff] %v2064
        %2097 = vst [vmem:[#allocation3 + $0x70] sm:$0xff] %v2065
        %2098 = vst [vmem:[#allocation3 + $0x78] sm:$0xff] %v2066
        %2099 = vst [vmem:[#allocation3 + $0x80] sm:$0xff] %v2067
        %2100 = vst [vmem:[#allocation3 + $0x88] sm:$0xff] %v2068
        %2101 = vst [vmem:[#allocation3 + $0x90] sm:$0xff] %v2069
        %2102 = vst [vmem:[#allocation3 + $0x98] sm:$0xff] %v2070
        %2103 = vst [vmem:[#allocation3 + $0xa0] sm:$0xff] %v2071
        %2104 = vst [vmem:[#allocation3 + $0xa8] sm:$0xff] %v2072
        %2105 = vst [vmem:[#allocation3 + $0xb0] sm:$0xff] %v2073
        %2106 = vst [vmem:[#allocation3 + $0xb8] sm:$0xff] %v2074
        %2107 = vst [vmem:[#allocation3 + $0xc0] sm:$0xff] %v2075
        %2108 = vst [vmem:[#allocation3 + $0xc8] sm:$0xff] %v2076
        %2109 = vst [vmem:[#allocation3 + $0xd0] sm:$0xff] %v2077
        %2110 = vst [vmem:[#allocation3 + $0xd8] sm:$0xff] %v2078
        %2111 = vst [vmem:[#allocation3 + $0xe0] sm:$0xff] %v2079
        %2112 = vst [vmem:[#allocation3 + $0xe8] sm:$0xff] %v2080
        %2113 = vst [vmem:[#allocation3 + $0xf0] sm:$0xff] %v2081
        %2114 = vst [vmem:[#allocation3 + $0xf8] sm:$0xff] %v2082
        %vm2115 = vcmask 7168
        %2116 = vst.msk [vmem:[#allocation2] sm:$0xff] %vm2115, %v1009
        %2117 = vst.msk [vmem:[#allocation2 + $0x8] sm:$0xff] %vm2115, %v1010
        %2118 = vst.msk [vmem:[#allocation2 + $0x10] sm:$0xff] %vm2115, %v1011
        %2119 = vst.msk [vmem:[#allocation2 + $0x18] sm:$0xff] %vm2115, %v1012
        %2120 = vst.msk [vmem:[#allocation2 + $0x20] sm:$0xff] %vm2115, %v1013
        %2121 = vst.msk [vmem:[#allocation2 + $0x28] sm:$0xff] %vm2115, %v1014
        %2122 = vst.msk [vmem:[#allocation2 + $0x30] sm:$0xff] %vm2115, %v1015
        %2123 = vst.msk [vmem:[#allocation2 + $0x38] sm:$0xff] %vm2115, %v1016
        %2124 = vst.msk [vmem:[#allocation2 + $0x40] sm:$0xff] %vm2115, %v1017
        %2125 = vst.msk [vmem:[#allocation2 + $0x48] sm:$0xff] %vm2115, %v1018
        %2126 = vst.msk [vmem:[#allocation2 + $0x50] sm:$0xff] %vm2115, %v1019
        %2127 = vst.msk [vmem:[#allocation2 + $0x58] sm:$0xff] %vm2115, %v1020
        %2128 = vst.msk [vmem:[#allocation2 + $0x60] sm:$0xff] %vm2115, %v1021
        %2129 = vst.msk [vmem:[#allocation2 + $0x68] sm:$0xff] %vm2115, %v1022
        %2130 = vst.msk [vmem:[#allocation2 + $0x70] sm:$0xff] %vm2115, %v1023
        %2131 = vst.msk [vmem:[#allocation2 + $0x78] sm:$0xff] %vm2115, %v1024
        %2132 = vst.msk [vmem:[#allocation2 + $0x80] sm:$0xff] %vm2115, %v1025
        %2133 = vst.msk [vmem:[#allocation2 + $0x88] sm:$0xff] %vm2115, %v1026
        %2134 = vst.msk [vmem:[#allocation2 + $0x90] sm:$0xff] %vm2115, %v1027
        %2135 = vst.msk [vmem:[#allocation2 + $0x98] sm:$0xff] %vm2115, %v1028
        %2136 = vst.msk [vmem:[#allocation2 + $0xa0] sm:$0xff] %vm2115, %v1029
        %2137 = vst.msk [vmem:[#allocation2 + $0xa8] sm:$0xff] %vm2115, %v1030
        %2138 = vst.msk [vmem:[#allocation2 + $0xb0] sm:$0xff] %vm2115, %v1031
        %2139 = vst.msk [vmem:[#allocation2 + $0xb8] sm:$0xff] %vm2115, %v1032
        %2140 = vst.msk [vmem:[#allocation2 + $0xc0] sm:$0xff] %vm2115, %v1033
        %2141 = vst.msk [vmem:[#allocation2 + $0xc8] sm:$0xff] %vm2115, %v1034
        %2142 = vst.msk [vmem:[#allocation2 + $0xd0] sm:$0xff] %vm2115, %v1035
        %2143 = vst.msk [vmem:[#allocation2 + $0xd8] sm:$0xff] %vm2115, %v1036
        %2144 = vst.msk [vmem:[#allocation2 + $0xe0] sm:$0xff] %vm2115, %v1037
        %2145 = vst.msk [vmem:[#allocation2 + $0xe8] sm:$0xff] %vm2115, %v1038
        %2146 = vst.msk [vmem:[#allocation2 + $0xf0] sm:$0xff] %vm2115, %v1039
        %2147 = vst.msk [vmem:[#allocation2 + $0xf8] sm:$0xff] %vm2115, %v1040
        %p2148 = scmp.eq.s32.totalorder %s34, 3
        // Predicated region
        $region65: #{tpu_custom_call.1} parent=43 // pred_check
          %p2149 = pneg %p2148
        $region66: #{tpu_custom_call.1} parent=43 // pred_check_branch
          %2151 = sbr.rel (%p2149) target = $region68
        $region67: #{tpu_custom_call.1} parent=43 // pred_region
          %v2152 = vld [vmem:[#allocation3] sm:$0xff]
          %v2153 = vld [vmem:[#allocation3 + $0x8] sm:$0xff]
          %v2154 = vld [vmem:[#allocation3 + $0x10] sm:$0xff]
          %v2155 = vld [vmem:[#allocation3 + $0x18] sm:$0xff]
          %v2156 = vld [vmem:[#allocation3 + $0x20] sm:$0xff]
          %v2157 = vld [vmem:[#allocation3 + $0x28] sm:$0xff]
          %v2158 = vld [vmem:[#allocation3 + $0x30] sm:$0xff]
          %v2159 = vld [vmem:[#allocation3 + $0x38] sm:$0xff]
          %v2160 = vld [vmem:[#allocation3 + $0x40] sm:$0xff]
          %v2161 = vld [vmem:[#allocation3 + $0x48] sm:$0xff]
          %v2162 = vld [vmem:[#allocation3 + $0x50] sm:$0xff]
          %v2163 = vld [vmem:[#allocation3 + $0x58] sm:$0xff]
          %v2164 = vld [vmem:[#allocation3 + $0x60] sm:$0xff]
          %v2165 = vld [vmem:[#allocation3 + $0x68] sm:$0xff]
          %v2166 = vld [vmem:[#allocation3 + $0x70] sm:$0xff]
          %v2167 = vld [vmem:[#allocation3 + $0x78] sm:$0xff]
          %v2168 = vld [vmem:[#allocation3 + $0x80] sm:$0xff]
          %v2169 = vld [vmem:[#allocation3 + $0x88] sm:$0xff]
          %v2170 = vld [vmem:[#allocation3 + $0x90] sm:$0xff]
          %v2171 = vld [vmem:[#allocation3 + $0x98] sm:$0xff]
          %v2172 = vld [vmem:[#allocation3 + $0xa0] sm:$0xff]
          %v2173 = vld [vmem:[#allocation3 + $0xa8] sm:$0xff]
          %v2174 = vld [vmem:[#allocation3 + $0xb0] sm:$0xff]
          %v2175 = vld [vmem:[#allocation3 + $0xb8] sm:$0xff]
          %v2176 = vld [vmem:[#allocation3 + $0xc0] sm:$0xff]
          %v2177 = vld [vmem:[#allocation3 + $0xc8] sm:$0xff]
          %v2178 = vld [vmem:[#allocation3 + $0xd0] sm:$0xff]
          %v2179 = vld [vmem:[#allocation3 + $0xd8] sm:$0xff]
          %v2180 = vld [vmem:[#allocation3 + $0xe0] sm:$0xff]
          %v2181 = vld [vmem:[#allocation3 + $0xe8] sm:$0xff]
          %v2182 = vld [vmem:[#allocation3 + $0xf0] sm:$0xff]
          %v2183 = vld [vmem:[#allocation3 + $0xf8] sm:$0xff]
          %2185 = vset.pattern.permute.xlu0 127
          %2186 = vperm.xlu0 %2185, %v2152
          %v2187 = vpop.permute.xlu0 %2186
          %2190 = vset.pattern.permute.xlu0 127
          %2191 = vperm.xlu0 %2190, %v2153
          %v2192 = vpop.permute.xlu0 %2191
          %2195 = vset.pattern.permute.xlu0 127
          %2196 = vperm.xlu0 %2195, %v2154
          %v2197 = vpop.permute.xlu0 %2196
          %2200 = vset.pattern.permute.xlu0 127
          %2201 = vperm.xlu0 %2200, %v2155
          %v2202 = vpop.permute.xlu0 %2201
          %2205 = vset.pattern.permute.xlu0 127
          %2206 = vperm.xlu0 %2205, %v2156
          %v2207 = vpop.permute.xlu0 %2206
          %2210 = vset.pattern.permute.xlu0 127
          %2211 = vperm.xlu0 %2210, %v2157
          %v2212 = vpop.permute.xlu0 %2211
          %2215 = vset.pattern.permute.xlu0 127
          %2216 = vperm.xlu0 %2215, %v2158
          %v2217 = vpop.permute.xlu0 %2216
          %2220 = vset.pattern.permute.xlu0 127
          %2221 = vperm.xlu0 %2220, %v2159
          %v2222 = vpop.permute.xlu0 %2221
          %2225 = vset.pattern.permute.xlu0 127
          %2226 = vperm.xlu0 %2225, %v2160
          %v2227 = vpop.permute.xlu0 %2226
          %2230 = vset.pattern.permute.xlu0 127
          %2231 = vperm.xlu0 %2230, %v2161
          %v2232 = vpop.permute.xlu0 %2231
          %2235 = vset.pattern.permute.xlu0 127
          %2236 = vperm.xlu0 %2235, %v2162
          %v2237 = vpop.permute.xlu0 %2236
          %2240 = vset.pattern.permute.xlu0 127
          %2241 = vperm.xlu0 %2240, %v2163
          %v2242 = vpop.permute.xlu0 %2241
          %2245 = vset.pattern.permute.xlu0 127
          %2246 = vperm.xlu0 %2245, %v2164
          %v2247 = vpop.permute.xlu0 %2246
          %2250 = vset.pattern.permute.xlu0 127
          %2251 = vperm.xlu0 %2250, %v2165
          %v2252 = vpop.permute.xlu0 %2251
          %2255 = vset.pattern.permute.xlu0 127
          %2256 = vperm.xlu0 %2255, %v2166
          %v2257 = vpop.permute.xlu0 %2256
          %2260 = vset.pattern.permute.xlu0 127
          %2261 = vperm.xlu0 %2260, %v2167
          %v2262 = vpop.permute.xlu0 %2261
          %2265 = vset.pattern.permute.xlu0 127
          %2266 = vperm.xlu0 %2265, %v2168
          %v2267 = vpop.permute.xlu0 %2266
          %2270 = vset.pattern.permute.xlu0 127
          %2271 = vperm.xlu0 %2270, %v2169
          %v2272 = vpop.permute.xlu0 %2271
          %2275 = vset.pattern.permute.xlu0 127
          %2276 = vperm.xlu0 %2275, %v2170
          %v2277 = vpop.permute.xlu0 %2276
          %2280 = vset.pattern.permute.xlu0 127
          %2281 = vperm.xlu0 %2280, %v2171
          %v2282 = vpop.permute.xlu0 %2281
          %2285 = vset.pattern.permute.xlu0 127
          %2286 = vperm.xlu0 %2285, %v2172
          %v2287 = vpop.permute.xlu0 %2286
          %2290 = vset.pattern.permute.xlu0 127
          %2291 = vperm.xlu0 %2290, %v2173
          %v2292 = vpop.permute.xlu0 %2291
          %2295 = vset.pattern.permute.xlu0 127
          %2296 = vperm.xlu0 %2295, %v2174
          %v2297 = vpop.permute.xlu0 %2296
          %2300 = vset.pattern.permute.xlu0 127
          %2301 = vperm.xlu0 %2300, %v2175
          %v2302 = vpop.permute.xlu0 %2301
          %2305 = vset.pattern.permute.xlu0 127
          %2306 = vperm.xlu0 %2305, %v2176
          %v2307 = vpop.permute.xlu0 %2306
          %2310 = vset.pattern.permute.xlu0 127
          %2311 = vperm.xlu0 %2310, %v2177
          %v2312 = vpop.permute.xlu0 %2311
          %2315 = vset.pattern.permute.xlu0 127
          %2316 = vperm.xlu0 %2315, %v2178
          %v2317 = vpop.permute.xlu0 %2316
          %2320 = vset.pattern.permute.xlu0 127
          %2321 = vperm.xlu0 %2320, %v2179
          %v2322 = vpop.permute.xlu0 %2321
          %2325 = vset.pattern.permute.xlu0 127
          %2326 = vperm.xlu0 %2325, %v2180
          %v2327 = vpop.permute.xlu0 %2326
          %2330 = vset.pattern.permute.xlu0 127
          %2331 = vperm.xlu0 %2330, %v2181
          %v2332 = vpop.permute.xlu0 %2331
          %2335 = vset.pattern.permute.xlu0 127
          %2336 = vperm.xlu0 %2335, %v2182
          %v2337 = vpop.permute.xlu0 %2336
          %2340 = vset.pattern.permute.xlu0 127
          %2341 = vperm.xlu0 %2340, %v2183
          %v2342 = vpop.permute.xlu0 %2341
          %v2344 = vrcp.pop %v2187
          %v2345 = vmul.f32 %v2187, %v2344
          %v2346 = vsub.f32 1.0, %v2345
          %v2347 = vmul.f32 %v2344, %v2346
          %v2348 = vadd.f32 %v2344, %v2347
          %vm2349 = vweird.f32 %v2187
          %vm2350 = vweird.f32 %v2344
          %vm2351 = vmor %vm2349, %vm2350
          %v2352 = vsel %vm2351, %v2344, %v2348
          %v2353 = vand.u32 2147483647, %v2187
          %vm2354 = vcmp.eq.f32.partialorder %v2353, 8.507059e+37
          %v2355 = vand.u32 %v2187, 2147483648
          %v2356 = vor.u32 1.1754944e-38, %v2355
          %v2357 = vsel %vm2354, %v2356, %v2352
          %v2358 = vmul.f32 %v2152, %v2357
          %v2359 = vrcp.pop %v2192
          %v2360 = vmul.f32 %v2192, %v2359
          %v2361 = vsub.f32 1.0, %v2360
          %v2362 = vmul.f32 %v2359, %v2361
          %v2363 = vadd.f32 %v2359, %v2362
          %vm2364 = vweird.f32 %v2192
          %vm2365 = vweird.f32 %v2359
          %vm2366 = vmor %vm2364, %vm2365
          %v2367 = vsel %vm2366, %v2359, %v2363
          %v2368 = vand.u32 2147483647, %v2192
          %vm2369 = vcmp.eq.f32.partialorder %v2368, 8.507059e+37
          %v2370 = vand.u32 %v2192, 2147483648
          %v2371 = vor.u32 1.1754944e-38, %v2370
          %v2372 = vsel %vm2369, %v2371, %v2367
          %v2373 = vmul.f32 %v2153, %v2372
          %v2374 = vrcp.pop %v2197
          %v2375 = vmul.f32 %v2197, %v2374
          %v2376 = vsub.f32 1.0, %v2375
          %v2377 = vmul.f32 %v2374, %v2376
          %v2378 = vadd.f32 %v2374, %v2377
          %vm2379 = vweird.f32 %v2197
          %vm2380 = vweird.f32 %v2374
          %vm2381 = vmor %vm2379, %vm2380
          %v2382 = vsel %vm2381, %v2374, %v2378
          %v2383 = vand.u32 2147483647, %v2197
          %vm2384 = vcmp.eq.f32.partialorder %v2383, 8.507059e+37
          %v2385 = vand.u32 %v2197, 2147483648
          %v2386 = vor.u32 1.1754944e-38, %v2385
          %v2387 = vsel %vm2384, %v2386, %v2382
          %v2388 = vmul.f32 %v2154, %v2387
          %v2389 = vrcp.pop %v2202
          %v2390 = vmul.f32 %v2202, %v2389
          %v2391 = vsub.f32 1.0, %v2390
          %v2392 = vmul.f32 %v2389, %v2391
          %v2393 = vadd.f32 %v2389, %v2392
          %vm2394 = vweird.f32 %v2202
          %vm2395 = vweird.f32 %v2389
          %vm2396 = vmor %vm2394, %vm2395
          %v2397 = vsel %vm2396, %v2389, %v2393
          %v2398 = vand.u32 2147483647, %v2202
          %vm2399 = vcmp.eq.f32.partialorder %v2398, 8.507059e+37
          %v2400 = vand.u32 %v2202, 2147483648
          %v2401 = vor.u32 1.1754944e-38, %v2400
          %v2402 = vsel %vm2399, %v2401, %v2397
          %v2403 = vmul.f32 %v2155, %v2402
          %v2404 = vrcp.pop %v2207
          %v2405 = vmul.f32 %v2207, %v2404
          %v2406 = vsub.f32 1.0, %v2405
          %v2407 = vmul.f32 %v2404, %v2406
          %v2408 = vadd.f32 %v2404, %v2407
          %vm2409 = vweird.f32 %v2207
          %vm2410 = vweird.f32 %v2404
          %vm2411 = vmor %vm2409, %vm2410
          %v2412 = vsel %vm2411, %v2404, %v2408
          %v2413 = vand.u32 2147483647, %v2207
          %vm2414 = vcmp.eq.f32.partialorder %v2413, 8.507059e+37
          %v2415 = vand.u32 %v2207, 2147483648
          %v2416 = vor.u32 1.1754944e-38, %v2415
          %v2417 = vsel %vm2414, %v2416, %v2412
          %v2418 = vmul.f32 %v2156, %v2417
          %v2419 = vrcp.pop %v2212
          %v2420 = vmul.f32 %v2212, %v2419
          %v2421 = vsub.f32 1.0, %v2420
          %v2422 = vmul.f32 %v2419, %v2421
          %v2423 = vadd.f32 %v2419, %v2422
          %vm2424 = vweird.f32 %v2212
          %vm2425 = vweird.f32 %v2419
          %vm2426 = vmor %vm2424, %vm2425
          %v2427 = vsel %vm2426, %v2419, %v2423
          %v2428 = vand.u32 2147483647, %v2212
          %vm2429 = vcmp.eq.f32.partialorder %v2428, 8.507059e+37
          %v2430 = vand.u32 %v2212, 2147483648
          %v2431 = vor.u32 1.1754944e-38, %v2430
          %v2432 = vsel %vm2429, %v2431, %v2427
          %v2433 = vmul.f32 %v2157, %v2432
          %v2434 = vrcp.pop %v2217
          %v2435 = vmul.f32 %v2217, %v2434
          %v2436 = vsub.f32 1.0, %v2435
          %v2437 = vmul.f32 %v2434, %v2436
          %v2438 = vadd.f32 %v2434, %v2437
          %vm2439 = vweird.f32 %v2217
          %vm2440 = vweird.f32 %v2434
          %vm2441 = vmor %vm2439, %vm2440
          %v2442 = vsel %vm2441, %v2434, %v2438
          %v2443 = vand.u32 2147483647, %v2217
          %vm2444 = vcmp.eq.f32.partialorder %v2443, 8.507059e+37
          %v2445 = vand.u32 %v2217, 2147483648
          %v2446 = vor.u32 1.1754944e-38, %v2445
          %v2447 = vsel %vm2444, %v2446, %v2442
          %v2448 = vmul.f32 %v2158, %v2447
          %v2449 = vrcp.pop %v2222
          %v2450 = vmul.f32 %v2222, %v2449
          %v2451 = vsub.f32 1.0, %v2450
          %v2452 = vmul.f32 %v2449, %v2451
          %v2453 = vadd.f32 %v2449, %v2452
          %vm2454 = vweird.f32 %v2222
          %vm2455 = vweird.f32 %v2449
          %vm2456 = vmor %vm2454, %vm2455
          %v2457 = vsel %vm2456, %v2449, %v2453
          %v2458 = vand.u32 2147483647, %v2222
          %vm2459 = vcmp.eq.f32.partialorder %v2458, 8.507059e+37
          %v2460 = vand.u32 %v2222, 2147483648
          %v2461 = vor.u32 1.1754944e-38, %v2460
          %v2462 = vsel %vm2459, %v2461, %v2457
          %v2463 = vmul.f32 %v2159, %v2462
          %v2464 = vrcp.pop %v2227
          %v2465 = vmul.f32 %v2227, %v2464
          %v2466 = vsub.f32 1.0, %v2465
          %v2467 = vmul.f32 %v2464, %v2466
          %v2468 = vadd.f32 %v2464, %v2467
          %vm2469 = vweird.f32 %v2227
          %vm2470 = vweird.f32 %v2464
          %vm2471 = vmor %vm2469, %vm2470
          %v2472 = vsel %vm2471, %v2464, %v2468
          %v2473 = vand.u32 2147483647, %v2227
          %vm2474 = vcmp.eq.f32.partialorder %v2473, 8.507059e+37
          %v2475 = vand.u32 %v2227, 2147483648
          %v2476 = vor.u32 1.1754944e-38, %v2475
          %v2477 = vsel %vm2474, %v2476, %v2472
          %v2478 = vmul.f32 %v2160, %v2477
          %v2479 = vrcp.pop %v2232
          %v2480 = vmul.f32 %v2232, %v2479
          %v2481 = vsub.f32 1.0, %v2480
          %v2482 = vmul.f32 %v2479, %v2481
          %v2483 = vadd.f32 %v2479, %v2482
          %vm2484 = vweird.f32 %v2232
          %vm2485 = vweird.f32 %v2479
          %vm2486 = vmor %vm2484, %vm2485
          %v2487 = vsel %vm2486, %v2479, %v2483
          %v2488 = vand.u32 2147483647, %v2232
          %vm2489 = vcmp.eq.f32.partialorder %v2488, 8.507059e+37
          %v2490 = vand.u32 %v2232, 2147483648
          %v2491 = vor.u32 1.1754944e-38, %v2490
          %v2492 = vsel %vm2489, %v2491, %v2487
          %v2493 = vmul.f32 %v2161, %v2492
          %v2494 = vrcp.pop %v2237
          %v2495 = vmul.f32 %v2237, %v2494
          %v2496 = vsub.f32 1.0, %v2495
          %v2497 = vmul.f32 %v2494, %v2496
          %v2498 = vadd.f32 %v2494, %v2497
          %vm2499 = vweird.f32 %v2237
          %vm2500 = vweird.f32 %v2494
          %vm2501 = vmor %vm2499, %vm2500
          %v2502 = vsel %vm2501, %v2494, %v2498
          %v2503 = vand.u32 2147483647, %v2237
          %vm2504 = vcmp.eq.f32.partialorder %v2503, 8.507059e+37
          %v2505 = vand.u32 %v2237, 2147483648
          %v2506 = vor.u32 1.1754944e-38, %v2505
          %v2507 = vsel %vm2504, %v2506, %v2502
          %v2508 = vmul.f32 %v2162, %v2507
          %v2509 = vrcp.pop %v2242
          %v2510 = vmul.f32 %v2242, %v2509
          %v2511 = vsub.f32 1.0, %v2510
          %v2512 = vmul.f32 %v2509, %v2511
          %v2513 = vadd.f32 %v2509, %v2512
          %vm2514 = vweird.f32 %v2242
          %vm2515 = vweird.f32 %v2509
          %vm2516 = vmor %vm2514, %vm2515
          %v2517 = vsel %vm2516, %v2509, %v2513
          %v2518 = vand.u32 2147483647, %v2242
          %vm2519 = vcmp.eq.f32.partialorder %v2518, 8.507059e+37
          %v2520 = vand.u32 %v2242, 2147483648
          %v2521 = vor.u32 1.1754944e-38, %v2520
          %v2522 = vsel %vm2519, %v2521, %v2517
          %v2523 = vmul.f32 %v2163, %v2522
          %v2524 = vrcp.pop %v2247
          %v2525 = vmul.f32 %v2247, %v2524
          %v2526 = vsub.f32 1.0, %v2525
          %v2527 = vmul.f32 %v2524, %v2526
          %v2528 = vadd.f32 %v2524, %v2527
          %vm2529 = vweird.f32 %v2247
          %vm2530 = vweird.f32 %v2524
          %vm2531 = vmor %vm2529, %vm2530
          %v2532 = vsel %vm2531, %v2524, %v2528
          %v2533 = vand.u32 2147483647, %v2247
          %vm2534 = vcmp.eq.f32.partialorder %v2533, 8.507059e+37
          %v2535 = vand.u32 %v2247, 2147483648
          %v2536 = vor.u32 1.1754944e-38, %v2535
          %v2537 = vsel %vm2534, %v2536, %v2532
          %v2538 = vmul.f32 %v2164, %v2537
          %v2539 = vrcp.pop %v2252
          %v2540 = vmul.f32 %v2252, %v2539
          %v2541 = vsub.f32 1.0, %v2540
          %v2542 = vmul.f32 %v2539, %v2541
          %v2543 = vadd.f32 %v2539, %v2542
          %vm2544 = vweird.f32 %v2252
          %vm2545 = vweird.f32 %v2539
          %vm2546 = vmor %vm2544, %vm2545
          %v2547 = vsel %vm2546, %v2539, %v2543
          %v2548 = vand.u32 2147483647, %v2252
          %vm2549 = vcmp.eq.f32.partialorder %v2548, 8.507059e+37
          %v2550 = vand.u32 %v2252, 2147483648
          %v2551 = vor.u32 1.1754944e-38, %v2550
          %v2552 = vsel %vm2549, %v2551, %v2547
          %v2553 = vmul.f32 %v2165, %v2552
          %v2554 = vrcp.pop %v2257
          %v2555 = vmul.f32 %v2257, %v2554
          %v2556 = vsub.f32 1.0, %v2555
          %v2557 = vmul.f32 %v2554, %v2556
          %v2558 = vadd.f32 %v2554, %v2557
          %vm2559 = vweird.f32 %v2257
          %vm2560 = vweird.f32 %v2554
          %vm2561 = vmor %vm2559, %vm2560
          %v2562 = vsel %vm2561, %v2554, %v2558
          %v2563 = vand.u32 2147483647, %v2257
          %vm2564 = vcmp.eq.f32.partialorder %v2563, 8.507059e+37
          %v2565 = vand.u32 %v2257, 2147483648
          %v2566 = vor.u32 1.1754944e-38, %v2565
          %v2567 = vsel %vm2564, %v2566, %v2562
          %v2568 = vmul.f32 %v2166, %v2567
          %v2569 = vrcp.pop %v2262
          %v2570 = vmul.f32 %v2262, %v2569
          %v2571 = vsub.f32 1.0, %v2570
          %v2572 = vmul.f32 %v2569, %v2571
          %v2573 = vadd.f32 %v2569, %v2572
          %vm2574 = vweird.f32 %v2262
          %vm2575 = vweird.f32 %v2569
          %vm2576 = vmor %vm2574, %vm2575
          %v2577 = vsel %vm2576, %v2569, %v2573
          %v2578 = vand.u32 2147483647, %v2262
          %vm2579 = vcmp.eq.f32.partialorder %v2578, 8.507059e+37
          %v2580 = vand.u32 %v2262, 2147483648
          %v2581 = vor.u32 1.1754944e-38, %v2580
          %v2582 = vsel %vm2579, %v2581, %v2577
          %v2583 = vmul.f32 %v2167, %v2582
          %v2584 = vrcp.pop %v2267
          %v2585 = vmul.f32 %v2267, %v2584
          %v2586 = vsub.f32 1.0, %v2585
          %v2587 = vmul.f32 %v2584, %v2586
          %v2588 = vadd.f32 %v2584, %v2587
          %vm2589 = vweird.f32 %v2267
          %vm2590 = vweird.f32 %v2584
          %vm2591 = vmor %vm2589, %vm2590
          %v2592 = vsel %vm2591, %v2584, %v2588
          %v2593 = vand.u32 2147483647, %v2267
          %vm2594 = vcmp.eq.f32.partialorder %v2593, 8.507059e+37
          %v2595 = vand.u32 %v2267, 2147483648
          %v2596 = vor.u32 1.1754944e-38, %v2595
          %v2597 = vsel %vm2594, %v2596, %v2592
          %v2598 = vmul.f32 %v2168, %v2597
          %v2599 = vrcp.pop %v2272
          %v2600 = vmul.f32 %v2272, %v2599
          %v2601 = vsub.f32 1.0, %v2600
          %v2602 = vmul.f32 %v2599, %v2601
          %v2603 = vadd.f32 %v2599, %v2602
          %vm2604 = vweird.f32 %v2272
          %vm2605 = vweird.f32 %v2599
          %vm2606 = vmor %vm2604, %vm2605
          %v2607 = vsel %vm2606, %v2599, %v2603
          %v2608 = vand.u32 2147483647, %v2272
          %vm2609 = vcmp.eq.f32.partialorder %v2608, 8.507059e+37
          %v2610 = vand.u32 %v2272, 2147483648
          %v2611 = vor.u32 1.1754944e-38, %v2610
          %v2612 = vsel %vm2609, %v2611, %v2607
          %v2613 = vmul.f32 %v2169, %v2612
          %v2614 = vrcp.pop %v2277
          %v2615 = vmul.f32 %v2277, %v2614
          %v2616 = vsub.f32 1.0, %v2615
          %v2617 = vmul.f32 %v2614, %v2616
          %v2618 = vadd.f32 %v2614, %v2617
          %vm2619 = vweird.f32 %v2277
          %vm2620 = vweird.f32 %v2614
          %vm2621 = vmor %vm2619, %vm2620
          %v2622 = vsel %vm2621, %v2614, %v2618
          %v2623 = vand.u32 2147483647, %v2277
          %vm2624 = vcmp.eq.f32.partialorder %v2623, 8.507059e+37
          %v2625 = vand.u32 %v2277, 2147483648
          %v2626 = vor.u32 1.1754944e-38, %v2625
          %v2627 = vsel %vm2624, %v2626, %v2622
          %v2628 = vmul.f32 %v2170, %v2627
          %v2629 = vrcp.pop %v2282
          %v2630 = vmul.f32 %v2282, %v2629
          %v2631 = vsub.f32 1.0, %v2630
          %v2632 = vmul.f32 %v2629, %v2631
          %v2633 = vadd.f32 %v2629, %v2632
          %vm2634 = vweird.f32 %v2282
          %vm2635 = vweird.f32 %v2629
          %vm2636 = vmor %vm2634, %vm2635
          %v2637 = vsel %vm2636, %v2629, %v2633
          %v2638 = vand.u32 2147483647, %v2282
          %vm2639 = vcmp.eq.f32.partialorder %v2638, 8.507059e+37
          %v2640 = vand.u32 %v2282, 2147483648
          %v2641 = vor.u32 1.1754944e-38, %v2640
          %v2642 = vsel %vm2639, %v2641, %v2637
          %v2643 = vmul.f32 %v2171, %v2642
          %v2644 = vrcp.pop %v2287
          %v2645 = vmul.f32 %v2287, %v2644
          %v2646 = vsub.f32 1.0, %v2645
          %v2647 = vmul.f32 %v2644, %v2646
          %v2648 = vadd.f32 %v2644, %v2647
          %vm2649 = vweird.f32 %v2287
          %vm2650 = vweird.f32 %v2644
          %vm2651 = vmor %vm2649, %vm2650
          %v2652 = vsel %vm2651, %v2644, %v2648
          %v2653 = vand.u32 2147483647, %v2287
          %vm2654 = vcmp.eq.f32.partialorder %v2653, 8.507059e+37
          %v2655 = vand.u32 %v2287, 2147483648
          %v2656 = vor.u32 1.1754944e-38, %v2655
          %v2657 = vsel %vm2654, %v2656, %v2652
          %v2658 = vmul.f32 %v2172, %v2657
          %v2659 = vrcp.pop %v2292
          %v2660 = vmul.f32 %v2292, %v2659
          %v2661 = vsub.f32 1.0, %v2660
          %v2662 = vmul.f32 %v2659, %v2661
          %v2663 = vadd.f32 %v2659, %v2662
          %vm2664 = vweird.f32 %v2292
          %vm2665 = vweird.f32 %v2659
          %vm2666 = vmor %vm2664, %vm2665
          %v2667 = vsel %vm2666, %v2659, %v2663
          %v2668 = vand.u32 2147483647, %v2292
          %vm2669 = vcmp.eq.f32.partialorder %v2668, 8.507059e+37
          %v2670 = vand.u32 %v2292, 2147483648
          %v2671 = vor.u32 1.1754944e-38, %v2670
          %v2672 = vsel %vm2669, %v2671, %v2667
          %v2673 = vmul.f32 %v2173, %v2672
          %v2674 = vrcp.pop %v2297
          %v2675 = vmul.f32 %v2297, %v2674
          %v2676 = vsub.f32 1.0, %v2675
          %v2677 = vmul.f32 %v2674, %v2676
          %v2678 = vadd.f32 %v2674, %v2677
          %vm2679 = vweird.f32 %v2297
          %vm2680 = vweird.f32 %v2674
          %vm2681 = vmor %vm2679, %vm2680
          %v2682 = vsel %vm2681, %v2674, %v2678
          %v2683 = vand.u32 2147483647, %v2297
          %vm2684 = vcmp.eq.f32.partialorder %v2683, 8.507059e+37
          %v2685 = vand.u32 %v2297, 2147483648
          %v2686 = vor.u32 1.1754944e-38, %v2685
          %v2687 = vsel %vm2684, %v2686, %v2682
          %v2688 = vmul.f32 %v2174, %v2687
          %v2689 = vrcp.pop %v2302
          %v2690 = vmul.f32 %v2302, %v2689
          %v2691 = vsub.f32 1.0, %v2690
          %v2692 = vmul.f32 %v2689, %v2691
          %v2693 = vadd.f32 %v2689, %v2692
          %vm2694 = vweird.f32 %v2302
          %vm2695 = vweird.f32 %v2689
          %vm2696 = vmor %vm2694, %vm2695
          %v2697 = vsel %vm2696, %v2689, %v2693
          %v2698 = vand.u32 2147483647, %v2302
          %vm2699 = vcmp.eq.f32.partialorder %v2698, 8.507059e+37
          %v2700 = vand.u32 %v2302, 2147483648
          %v2701 = vor.u32 1.1754944e-38, %v2700
          %v2702 = vsel %vm2699, %v2701, %v2697
          %v2703 = vmul.f32 %v2175, %v2702
          %v2704 = vrcp.pop %v2307
          %v2705 = vmul.f32 %v2307, %v2704
          %v2706 = vsub.f32 1.0, %v2705
          %v2707 = vmul.f32 %v2704, %v2706
          %v2708 = vadd.f32 %v2704, %v2707
          %vm2709 = vweird.f32 %v2307
          %vm2710 = vweird.f32 %v2704
          %vm2711 = vmor %vm2709, %vm2710
          %v2712 = vsel %vm2711, %v2704, %v2708
          %v2713 = vand.u32 2147483647, %v2307
          %vm2714 = vcmp.eq.f32.partialorder %v2713, 8.507059e+37
          %v2715 = vand.u32 %v2307, 2147483648
          %v2716 = vor.u32 1.1754944e-38, %v2715
          %v2717 = vsel %vm2714, %v2716, %v2712
          %v2718 = vmul.f32 %v2176, %v2717
          %v2719 = vrcp.pop %v2312
          %v2720 = vmul.f32 %v2312, %v2719
          %v2721 = vsub.f32 1.0, %v2720
          %v2722 = vmul.f32 %v2719, %v2721
          %v2723 = vadd.f32 %v2719, %v2722
          %vm2724 = vweird.f32 %v2312
          %vm2725 = vweird.f32 %v2719
          %vm2726 = vmor %vm2724, %vm2725
          %v2727 = vsel %vm2726, %v2719, %v2723
          %v2728 = vand.u32 2147483647, %v2312
          %vm2729 = vcmp.eq.f32.partialorder %v2728, 8.507059e+37
          %v2730 = vand.u32 %v2312, 2147483648
          %v2731 = vor.u32 1.1754944e-38, %v2730
          %v2732 = vsel %vm2729, %v2731, %v2727
          %v2733 = vmul.f32 %v2177, %v2732
          %v2734 = vrcp.pop %v2317
          %v2735 = vmul.f32 %v2317, %v2734
          %v2736 = vsub.f32 1.0, %v2735
          %v2737 = vmul.f32 %v2734, %v2736
          %v2738 = vadd.f32 %v2734, %v2737
          %vm2739 = vweird.f32 %v2317
          %vm2740 = vweird.f32 %v2734
          %vm2741 = vmor %vm2739, %vm2740
          %v2742 = vsel %vm2741, %v2734, %v2738
          %v2743 = vand.u32 2147483647, %v2317
          %vm2744 = vcmp.eq.f32.partialorder %v2743, 8.507059e+37
          %v2745 = vand.u32 %v2317, 2147483648
          %v2746 = vor.u32 1.1754944e-38, %v2745
          %v2747 = vsel %vm2744, %v2746, %v2742
          %v2748 = vmul.f32 %v2178, %v2747
          %v2749 = vrcp.pop %v2322
          %v2750 = vmul.f32 %v2322, %v2749
          %v2751 = vsub.f32 1.0, %v2750
          %v2752 = vmul.f32 %v2749, %v2751
          %v2753 = vadd.f32 %v2749, %v2752
          %vm2754 = vweird.f32 %v2322
          %vm2755 = vweird.f32 %v2749
          %vm2756 = vmor %vm2754, %vm2755
          %v2757 = vsel %vm2756, %v2749, %v2753
          %v2758 = vand.u32 2147483647, %v2322
          %vm2759 = vcmp.eq.f32.partialorder %v2758, 8.507059e+37
          %v2760 = vand.u32 %v2322, 2147483648
          %v2761 = vor.u32 1.1754944e-38, %v2760
          %v2762 = vsel %vm2759, %v2761, %v2757
          %v2763 = vmul.f32 %v2179, %v2762
          %v2764 = vrcp.pop %v2327
          %v2765 = vmul.f32 %v2327, %v2764
          %v2766 = vsub.f32 1.0, %v2765
          %v2767 = vmul.f32 %v2764, %v2766
          %v2768 = vadd.f32 %v2764, %v2767
          %vm2769 = vweird.f32 %v2327
          %vm2770 = vweird.f32 %v2764
          %vm2771 = vmor %vm2769, %vm2770
          %v2772 = vsel %vm2771, %v2764, %v2768
          %v2773 = vand.u32 2147483647, %v2327
          %vm2774 = vcmp.eq.f32.partialorder %v2773, 8.507059e+37
          %v2775 = vand.u32 %v2327, 2147483648
          %v2776 = vor.u32 1.1754944e-38, %v2775
          %v2777 = vsel %vm2774, %v2776, %v2772
          %v2778 = vmul.f32 %v2180, %v2777
          %v2779 = vrcp.pop %v2332
          %v2780 = vmul.f32 %v2332, %v2779
          %v2781 = vsub.f32 1.0, %v2780
          %v2782 = vmul.f32 %v2779, %v2781
          %v2783 = vadd.f32 %v2779, %v2782
          %vm2784 = vweird.f32 %v2332
          %vm2785 = vweird.f32 %v2779
          %vm2786 = vmor %vm2784, %vm2785
          %v2787 = vsel %vm2786, %v2779, %v2783
          %v2788 = vand.u32 2147483647, %v2332
          %vm2789 = vcmp.eq.f32.partialorder %v2788, 8.507059e+37
          %v2790 = vand.u32 %v2332, 2147483648
          %v2791 = vor.u32 1.1754944e-38, %v2790
          %v2792 = vsel %vm2789, %v2791, %v2787
          %v2793 = vmul.f32 %v2181, %v2792
          %v2794 = vrcp.pop %v2337
          %v2795 = vmul.f32 %v2337, %v2794
          %v2796 = vsub.f32 1.0, %v2795
          %v2797 = vmul.f32 %v2794, %v2796
          %v2798 = vadd.f32 %v2794, %v2797
          %vm2799 = vweird.f32 %v2337
          %vm2800 = vweird.f32 %v2794
          %vm2801 = vmor %vm2799, %vm2800
          %v2802 = vsel %vm2801, %v2794, %v2798
          %v2803 = vand.u32 2147483647, %v2337
          %vm2804 = vcmp.eq.f32.partialorder %v2803, 8.507059e+37
          %v2805 = vand.u32 %v2337, 2147483648
          %v2806 = vor.u32 1.1754944e-38, %v2805
          %v2807 = vsel %vm2804, %v2806, %v2802
          %v2808 = vmul.f32 %v2182, %v2807
          %v2809 = vrcp.pop %v2342
          %v2810 = vmul.f32 %v2342, %v2809
          %v2811 = vsub.f32 1.0, %v2810
          %v2812 = vmul.f32 %v2809, %v2811
          %v2813 = vadd.f32 %v2809, %v2812
          %vm2814 = vweird.f32 %v2342
          %vm2815 = vweird.f32 %v2809
          %vm2816 = vmor %vm2814, %vm2815
          %v2817 = vsel %vm2816, %v2809, %v2813
          %v2818 = vand.u32 2147483647, %v2342
          %vm2819 = vcmp.eq.f32.partialorder %v2818, 8.507059e+37
          %v2820 = vand.u32 %v2342, 2147483648
          %v2821 = vor.u32 1.1754944e-38, %v2820
          %v2822 = vsel %vm2819, %v2821, %v2817
          %v2823 = vmul.f32 %v2183, %v2822
          %v2824 = vld [vmem:[%s450] sm:$0xff]
          %v2825 = vld [vmem:[%s450 + $0x8] sm:$0xff]
          %v2826 = vld [vmem:[%s450 + $0x10] sm:$0xff]
          %v2827 = vld [vmem:[%s450 + $0x18] sm:$0xff]
          %v2828 = vld [vmem:[%s450 + $0x20] sm:$0xff]
          %v2829 = vld [vmem:[%s450 + $0x28] sm:$0xff]
          %v2830 = vld [vmem:[%s450 + $0x30] sm:$0xff]
          %v2831 = vld [vmem:[%s450 + $0x38] sm:$0xff]
          %v2832 = vld [vmem:[%s450 + $0x40] sm:$0xff]
          %v2833 = vld [vmem:[%s450 + $0x48] sm:$0xff]
          %v2834 = vld [vmem:[%s450 + $0x50] sm:$0xff]
          %v2835 = vld [vmem:[%s450 + $0x58] sm:$0xff]
          %v2836 = vld [vmem:[%s450 + $0x60] sm:$0xff]
          %v2837 = vld [vmem:[%s450 + $0x68] sm:$0xff]
          %v2838 = vld [vmem:[%s450 + $0x70] sm:$0xff]
          %v2839 = vld [vmem:[%s450 + $0x78] sm:$0xff]
          %v2840 = vld [vmem:[%s450 + $0x80] sm:$0xff]
          %v2841 = vld [vmem:[%s450 + $0x88] sm:$0xff]
          %v2842 = vld [vmem:[%s450 + $0x90] sm:$0xff]
          %v2843 = vld [vmem:[%s450 + $0x98] sm:$0xff]
          %v2844 = vld [vmem:[%s450 + $0xa0] sm:$0xff]
          %v2845 = vld [vmem:[%s450 + $0xa8] sm:$0xff]
          %v2846 = vld [vmem:[%s450 + $0xb0] sm:$0xff]
          %v2847 = vld [vmem:[%s450 + $0xb8] sm:$0xff]
          %v2848 = vld [vmem:[%s450 + $0xc0] sm:$0xff]
          %v2849 = vld [vmem:[%s450 + $0xc8] sm:$0xff]
          %v2850 = vld [vmem:[%s450 + $0xd0] sm:$0xff]
          %v2851 = vld [vmem:[%s450 + $0xd8] sm:$0xff]
          %v2852 = vld [vmem:[%s450 + $0xe0] sm:$0xff]
          %v2853 = vld [vmem:[%s450 + $0xe8] sm:$0xff]
          %v2854 = vld [vmem:[%s450 + $0xf0] sm:$0xff]
          %v2855 = vld [vmem:[%s450 + $0xf8] sm:$0xff]
          %2857 = vset.pattern.permute.xlu0 0
          %2858 = vperm.xlu0 %2857, %v2824
          %v2859 = vpop.permute.xlu0 %2858
          %2862 = vset.pattern.permute.xlu0 0
          %2863 = vperm.xlu0 %2862, %v2825
          %v2864 = vpop.permute.xlu0 %2863
          %2867 = vset.pattern.permute.xlu0 0
          %2868 = vperm.xlu0 %2867, %v2826
          %v2869 = vpop.permute.xlu0 %2868
          %2872 = vset.pattern.permute.xlu0 0
          %2873 = vperm.xlu0 %2872, %v2827
          %v2874 = vpop.permute.xlu0 %2873
          %2877 = vset.pattern.permute.xlu0 0
          %2878 = vperm.xlu0 %2877, %v2828
          %v2879 = vpop.permute.xlu0 %2878
          %2882 = vset.pattern.permute.xlu0 0
          %2883 = vperm.xlu0 %2882, %v2829
          %v2884 = vpop.permute.xlu0 %2883
          %2887 = vset.pattern.permute.xlu0 0
          %2888 = vperm.xlu0 %2887, %v2830
          %v2889 = vpop.permute.xlu0 %2888
          %2892 = vset.pattern.permute.xlu0 0
          %2893 = vperm.xlu0 %2892, %v2831
          %v2894 = vpop.permute.xlu0 %2893
          %2897 = vset.pattern.permute.xlu0 0
          %2898 = vperm.xlu0 %2897, %v2832
          %v2899 = vpop.permute.xlu0 %2898
          %2902 = vset.pattern.permute.xlu0 0
          %2903 = vperm.xlu0 %2902, %v2833
          %v2904 = vpop.permute.xlu0 %2903
          %2907 = vset.pattern.permute.xlu0 0
          %2908 = vperm.xlu0 %2907, %v2834
          %v2909 = vpop.permute.xlu0 %2908
          %2912 = vset.pattern.permute.xlu0 0
          %2913 = vperm.xlu0 %2912, %v2835
          %v2914 = vpop.permute.xlu0 %2913
          %2917 = vset.pattern.permute.xlu0 0
          %2918 = vperm.xlu0 %2917, %v2836
          %v2919 = vpop.permute.xlu0 %2918
          %2922 = vset.pattern.permute.xlu0 0
          %2923 = vperm.xlu0 %2922, %v2837
          %v2924 = vpop.permute.xlu0 %2923
          %2927 = vset.pattern.permute.xlu0 0
          %2928 = vperm.xlu0 %2927, %v2838
          %v2929 = vpop.permute.xlu0 %2928
          %2932 = vset.pattern.permute.xlu0 0
          %2933 = vperm.xlu0 %2932, %v2839
          %v2934 = vpop.permute.xlu0 %2933
          %2937 = vset.pattern.permute.xlu0 0
          %2938 = vperm.xlu0 %2937, %v2840
          %v2939 = vpop.permute.xlu0 %2938
          %2942 = vset.pattern.permute.xlu0 0
          %2943 = vperm.xlu0 %2942, %v2841
          %v2944 = vpop.permute.xlu0 %2943
          %2947 = vset.pattern.permute.xlu0 0
          %2948 = vperm.xlu0 %2947, %v2842
          %v2949 = vpop.permute.xlu0 %2948
          %2952 = vset.pattern.permute.xlu0 0
          %2953 = vperm.xlu0 %2952, %v2843
          %v2954 = vpop.permute.xlu0 %2953
          %2957 = vset.pattern.permute.xlu0 0
          %2958 = vperm.xlu0 %2957, %v2844
          %v2959 = vpop.permute.xlu0 %2958
          %2962 = vset.pattern.permute.xlu0 0
          %2963 = vperm.xlu0 %2962, %v2845
          %v2964 = vpop.permute.xlu0 %2963
          %2967 = vset.pattern.permute.xlu0 0
          %2968 = vperm.xlu0 %2967, %v2846
          %v2969 = vpop.permute.xlu0 %2968
          %2972 = vset.pattern.permute.xlu0 0
          %2973 = vperm.xlu0 %2972, %v2847
          %v2974 = vpop.permute.xlu0 %2973
          %2977 = vset.pattern.permute.xlu0 0
          %2978 = vperm.xlu0 %2977, %v2848
          %v2979 = vpop.permute.xlu0 %2978
          %2982 = vset.pattern.permute.xlu0 0
          %2983 = vperm.xlu0 %2982, %v2849
          %v2984 = vpop.permute.xlu0 %2983
          %2987 = vset.pattern.permute.xlu0 0
          %2988 = vperm.xlu0 %2987, %v2850
          %v2989 = vpop.permute.xlu0 %2988
          %2992 = vset.pattern.permute.xlu0 0
          %2993 = vperm.xlu0 %2992, %v2851
          %v2994 = vpop.permute.xlu0 %2993
          %2997 = vset.pattern.permute.xlu0 0
          %2998 = vperm.xlu0 %2997, %v2852
          %v2999 = vpop.permute.xlu0 %2998
          %3002 = vset.pattern.permute.xlu0 0
          %3003 = vperm.xlu0 %3002, %v2853
          %v3004 = vpop.permute.xlu0 %3003
          %3007 = vset.pattern.permute.xlu0 0
          %3008 = vperm.xlu0 %3007, %v2854
          %v3009 = vpop.permute.xlu0 %3008
          %3012 = vset.pattern.permute.xlu0 0
          %3013 = vperm.xlu0 %3012, %v2855
          %v3014 = vpop.permute.xlu0 %3013
          %v3016 = vmul.f32 %v2859, %v2358
          %v3017 = vmul.f32 %v2864, %v2373
          %v3018 = vmul.f32 %v2869, %v2388
          %v3019 = vmul.f32 %v2874, %v2403
          %v3020 = vmul.f32 %v2879, %v2418
          %v3021 = vmul.f32 %v2884, %v2433
          %v3022 = vmul.f32 %v2889, %v2448
          %v3023 = vmul.f32 %v2894, %v2463
          %v3024 = vmul.f32 %v2899, %v2478
          %v3025 = vmul.f32 %v2904, %v2493
          %v3026 = vmul.f32 %v2909, %v2508
          %v3027 = vmul.f32 %v2914, %v2523
          %v3028 = vmul.f32 %v2919, %v2538
          %v3029 = vmul.f32 %v2924, %v2553
          %v3030 = vmul.f32 %v2929, %v2568
          %v3031 = vmul.f32 %v2934, %v2583
          %v3032 = vmul.f32 %v2939, %v2598
          %v3033 = vmul.f32 %v2944, %v2613
          %v3034 = vmul.f32 %v2949, %v2628
          %v3035 = vmul.f32 %v2954, %v2643
          %v3036 = vmul.f32 %v2959, %v2658
          %v3037 = vmul.f32 %v2964, %v2673
          %v3038 = vmul.f32 %v2969, %v2688
          %v3039 = vmul.f32 %v2974, %v2703
          %v3040 = vmul.f32 %v2979, %v2718
          %v3041 = vmul.f32 %v2984, %v2733
          %v3042 = vmul.f32 %v2989, %v2748
          %v3043 = vmul.f32 %v2994, %v2763
          %v3044 = vmul.f32 %v2999, %v2778
          %v3045 = vmul.f32 %v3004, %v2793
          %v3046 = vmul.f32 %v3009, %v2808
          %v3047 = vmul.f32 %v3014, %v2823
          %v3048 = vpack.c.bf16 %v3017, %v3016
          %v3049 = vpack.c.bf16 %v3019, %v3018
          %v3050 = vpack.c.bf16 %v3021, %v3020
          %v3051 = vpack.c.bf16 %v3023, %v3022
          %v3052 = vpack.c.bf16 %v3025, %v3024
          %v3053 = vpack.c.bf16 %v3027, %v3026
          %v3054 = vpack.c.bf16 %v3029, %v3028
          %v3055 = vpack.c.bf16 %v3031, %v3030
          %v3056 = vpack.c.bf16 %v3033, %v3032
          %v3057 = vpack.c.bf16 %v3035, %v3034
          %v3058 = vpack.c.bf16 %v3037, %v3036
          %v3059 = vpack.c.bf16 %v3039, %v3038
          %v3060 = vpack.c.bf16 %v3041, %v3040
          %v3061 = vpack.c.bf16 %v3043, %v3042
          %v3062 = vpack.c.bf16 %v3045, %v3044
          %v3063 = vpack.c.bf16 %v3047, %v3046
          %v3064 = vld [vmem:[%s381] sm:$0xf]
          %v3065 = vld [vmem:[%s381 + $0x4] sm:$0xf]
          %v3066 = vld [vmem:[%s381 + $0x8] sm:$0xf]
          %v3067 = vld [vmem:[%s381 + $0xc] sm:$0xf]
          %v3068 = vld [vmem:[%s381 + $0x10] sm:$0xf]
          %v3069 = vld [vmem:[%s381 + $0x14] sm:$0xf]
          %v3070 = vld [vmem:[%s381 + $0x18] sm:$0xf]
          %v3071 = vld [vmem:[%s381 + $0x1c] sm:$0xf]
          %v3072 = vld [vmem:[%s381 + $0x20] sm:$0xf]
          %v3073 = vld [vmem:[%s381 + $0x24] sm:$0xf]
          %v3074 = vld [vmem:[%s381 + $0x28] sm:$0xf]
          %v3075 = vld [vmem:[%s381 + $0x2c] sm:$0xf]
          %v3076 = vld [vmem:[%s381 + $0x30] sm:$0xf]
          %v3077 = vld [vmem:[%s381 + $0x34] sm:$0xf]
          %v3078 = vld [vmem:[%s381 + $0x38] sm:$0xf]
          %v3079 = vld [vmem:[%s381 + $0x3c] sm:$0xf]
          %v3080 = vld [vmem:[%s381 + $0x40] sm:$0xf]
          %v3081 = vld [vmem:[%s381 + $0x44] sm:$0xf]
          %v3082 = vld [vmem:[%s381 + $0x48] sm:$0xf]
          %v3083 = vld [vmem:[%s381 + $0x4c] sm:$0xf]
          %v3084 = vld [vmem:[%s381 + $0x50] sm:$0xf]
          %v3085 = vld [vmem:[%s381 + $0x54] sm:$0xf]
          %v3086 = vld [vmem:[%s381 + $0x58] sm:$0xf]
          %v3087 = vld [vmem:[%s381 + $0x5c] sm:$0xf]
          %v3088 = vld [vmem:[%s381 + $0x60] sm:$0xf]
          %v3089 = vld [vmem:[%s381 + $0x64] sm:$0xf]
          %v3090 = vld [vmem:[%s381 + $0x68] sm:$0xf]
          %v3091 = vld [vmem:[%s381 + $0x6c] sm:$0xf]
          %v3092 = vld [vmem:[%s381 + $0x70] sm:$0xf]
          %v3093 = vld [vmem:[%s381 + $0x74] sm:$0xf]
          %v3094 = vld [vmem:[%s381 + $0x78] sm:$0xf]
          %v3095 = vld [vmem:[%s381 + $0x7c] sm:$0xf]
          %v3128 = vunpack.c.l.b16 %v3064
          %v3129 = vunpack.c.l.b16 %v3065
          %v3130 = vunpack.c.l.b16 %v3066
          %v3131 = vunpack.c.l.b16 %v3067
          %v3132 = vunpack.c.l.b16 %v3068
          %v3133 = vunpack.c.l.b16 %v3069
          %v3134 = vunpack.c.l.b16 %v3070
          %v3135 = vunpack.c.l.b16 %v3071
          %v3136 = vunpack.c.l.b16 %v3072
          %v3137 = vunpack.c.l.b16 %v3073
          %v3138 = vunpack.c.l.b16 %v3074
          %v3139 = vunpack.c.l.b16 %v3075
          %v3140 = vunpack.c.l.b16 %v3076
          %v3141 = vunpack.c.l.b16 %v3077
          %v3142 = vunpack.c.l.b16 %v3078
          %v3143 = vunpack.c.l.b16 %v3079
          %v3144 = vunpack.c.l.b16 %v3080
          %v3145 = vunpack.c.l.b16 %v3081
          %v3146 = vunpack.c.l.b16 %v3082
          %v3147 = vunpack.c.l.b16 %v3083
          %v3148 = vunpack.c.l.b16 %v3084
          %v3149 = vunpack.c.l.b16 %v3085
          %v3150 = vunpack.c.l.b16 %v3086
          %v3151 = vunpack.c.l.b16 %v3087
          %v3152 = vunpack.c.l.b16 %v3088
          %v3153 = vunpack.c.l.b16 %v3089
          %v3154 = vunpack.c.l.b16 %v3090
          %v3155 = vunpack.c.l.b16 %v3091
          %v3156 = vunpack.c.l.b16 %v3092
          %v3157 = vunpack.c.l.b16 %v3093
          %v3158 = vunpack.c.l.b16 %v3094
          %v3159 = vunpack.c.l.b16 %v3095
          %v3160 = vpack.c.b16 %v3129, %v3128
          %v3161 = vpack.c.b16 %v3131, %v3130
          %v3162 = vpack.c.b16 %v3133, %v3132
          %v3163 = vpack.c.b16 %v3135, %v3134
          %v3164 = vpack.c.b16 %v3137, %v3136
          %v3165 = vpack.c.b16 %v3139, %v3138
          %v3166 = vpack.c.b16 %v3141, %v3140
          %v3167 = vpack.c.b16 %v3143, %v3142
          %v3168 = vpack.c.b16 %v3145, %v3144
          %v3169 = vpack.c.b16 %v3147, %v3146
          %v3170 = vpack.c.b16 %v3149, %v3148
          %v3171 = vpack.c.b16 %v3151, %v3150
          %v3172 = vpack.c.b16 %v3153, %v3152
          %v3173 = vpack.c.b16 %v3155, %v3154
          %v3174 = vpack.c.b16 %v3157, %v3156
          %v3175 = vpack.c.b16 %v3159, %v3158
          %3192 = vxpose.xlu0.c.b16.start [1/8] %v3160, 128
          %3193 = vxpose.xlu0.c.b16.cont [2/8] %v3161, 128
          %3194 = vxpose.xlu0.c.b16.cont [3/8] %v3162, 128
          %3195 = vxpose.xlu0.c.b16.cont [4/8] %v3163, 128
          %3196 = vxpose.xlu0.c.b16.cont [5/8] %v3164, 128
          %3197 = vxpose.xlu0.c.b16.cont [6/8] %v3165, 128
          %3198 = vxpose.xlu0.c.b16.cont [7/8] %v3166, 128
          %3199 = vxpose.xlu0.c.b16.end [8/8] %v3167, 128
          %v3200 = vpop.trf.xlu0
          %v3201 = vpop.trf.xlu0
          %v3202 = vpop.trf.xlu0
          %v3203 = vpop.trf.xlu0
          %v3204 = vpop.trf.xlu0
          %v3205 = vpop.trf.xlu0
          %v3206 = vpop.trf.xlu0
          %v3207 = vpop.trf.xlu0
          %3208 = vxpose.xlu0.c.b16.start [1/8] %v3168, 128
          %3209 = vxpose.xlu0.c.b16.cont [2/8] %v3169, 128
          %3210 = vxpose.xlu0.c.b16.cont [3/8] %v3170, 128
          %3211 = vxpose.xlu0.c.b16.cont [4/8] %v3171, 128
          %3212 = vxpose.xlu0.c.b16.cont [5/8] %v3172, 128
          %3213 = vxpose.xlu0.c.b16.cont [6/8] %v3173, 128
          %3214 = vxpose.xlu0.c.b16.cont [7/8] %v3174, 128
          %3215 = vxpose.xlu0.c.b16.end [8/8] %v3175, 128
          %v3216 = vpop.trf.xlu0
          %v3217 = vpop.trf.xlu0
          %v3218 = vpop.trf.xlu0
          %v3219 = vpop.trf.xlu0
          %v3220 = vpop.trf.xlu0
          %v3221 = vpop.trf.xlu0
          %v3222 = vpop.trf.xlu0
          %v3223 = vpop.trf.xlu0
          %3224 = vmatpush.bf16.msra.mxu0 %v3055
          %3225 = vmatpush.bf16.msra.mxu0 %v3054
          %3226 = vmatpush.bf16.msra.mxu0 %v3053
          %3227 = vmatpush.bf16.msra.mxu0 %v3052
          %3228 = vmatpush.bf16.msra.mxu0 %v3051
          %3229 = vmatpush.bf16.msra.mxu0 %v3050
          %3230 = vmatpush.bf16.msra.mxu0 %v3049
          %3231 = vmatpush.bf16.msra.mxu0 %v3048
          %3232 = vmatmul.bf16.gmra.mxu0 %v3200
          %v3233 = vpop.f32.mrf.mxu0
          %v3234 = vadd.f32 0.0, %v3233
          %v3235 = vpop.f32.mrf.mxu0
          %v3236 = vadd.f32 0.0, %v3235
          %3237 = vmatmul.bf16.gmra.mxu0 %v3201
          %v3238 = vpop.f32.mrf.mxu0
          %v3239 = vadd.f32 0.0, %v3238
          %v3240 = vpop.f32.mrf.mxu0
          %v3241 = vadd.f32 0.0, %v3240
          %3242 = vmatmul.bf16.gmra.mxu0 %v3202
          %v3243 = vpop.f32.mrf.mxu0
          %v3244 = vadd.f32 0.0, %v3243
          %v3245 = vpop.f32.mrf.mxu0
          %v3246 = vadd.f32 0.0, %v3245
          %3247 = vmatmul.bf16.gmra.mxu0 %v3203
          %v3248 = vpop.f32.mrf.mxu0
          %v3249 = vadd.f32 0.0, %v3248
          %v3250 = vpop.f32.mrf.mxu0
          %v3251 = vadd.f32 0.0, %v3250
          %3252 = vmatmul.bf16.gmra.mxu0 %v3204
          %v3253 = vpop.f32.mrf.mxu0
          %v3254 = vadd.f32 0.0, %v3253
          %v3255 = vpop.f32.mrf.mxu0
          %v3256 = vadd.f32 0.0, %v3255
          %3257 = vmatmul.bf16.gmra.mxu0 %v3205
          %v3258 = vpop.f32.mrf.mxu0
          %v3259 = vadd.f32 0.0, %v3258
          %v3260 = vpop.f32.mrf.mxu0
          %v3261 = vadd.f32 0.0, %v3260
          %3262 = vmatmul.bf16.gmra.mxu0 %v3206
          %v3263 = vpop.f32.mrf.mxu0
          %v3264 = vadd.f32 0.0, %v3263
          %v3265 = vpop.f32.mrf.mxu0
          %v3266 = vadd.f32 0.0, %v3265
          %3267 = vmatmul.bf16.gmra.mxu0 %v3207
          %v3268 = vpop.f32.mrf.mxu0
          %v3269 = vadd.f32 0.0, %v3268
          %v3270 = vpop.f32.mrf.mxu0
          %v3271 = vadd.f32 0.0, %v3270
          %3272 = vdwg.mxu0
          %3273 = vmatpush.bf16.msra.mxu0 %v3063
          %3274 = vmatpush.bf16.msra.mxu0 %v3062
          %3275 = vmatpush.bf16.msra.mxu0 %v3061
          %3276 = vmatpush.bf16.msra.mxu0 %v3060
          %3277 = vmatpush.bf16.msra.mxu0 %v3059
          %3278 = vmatpush.bf16.msra.mxu0 %v3058
          %3279 = vmatpush.bf16.msra.mxu0 %v3057
          %3280 = vmatpush.bf16.msra.mxu0 %v3056
          %3281 = vmatmul.bf16.gmra.mxu0 %v3216
          %v3282 = vpop.f32.mrf.mxu0
          %v3283 = vadd.f32 %v3234, %v3282
          %v3284 = vpop.f32.mrf.mxu0
          %v3285 = vadd.f32 %v3236, %v3284
          %3286 = vmatmul.bf16.gmra.mxu0 %v3217
          %v3287 = vpop.f32.mrf.mxu0
          %v3288 = vadd.f32 %v3239, %v3287
          %v3289 = vpop.f32.mrf.mxu0
          %v3290 = vadd.f32 %v3241, %v3289
          %3291 = vmatmul.bf16.gmra.mxu0 %v3218
          %v3292 = vpop.f32.mrf.mxu0
          %v3293 = vadd.f32 %v3244, %v3292
          %v3294 = vpop.f32.mrf.mxu0
          %v3295 = vadd.f32 %v3246, %v3294
          %3296 = vmatmul.bf16.gmra.mxu0 %v3219
          %v3297 = vpop.f32.mrf.mxu0
          %v3298 = vadd.f32 %v3249, %v3297
          %v3299 = vpop.f32.mrf.mxu0
          %v3300 = vadd.f32 %v3251, %v3299
          %3301 = vmatmul.bf16.gmra.mxu0 %v3220
          %v3302 = vpop.f32.mrf.mxu0
          %v3303 = vadd.f32 %v3254, %v3302
          %v3304 = vpop.f32.mrf.mxu0
          %v3305 = vadd.f32 %v3256, %v3304
          %3306 = vmatmul.bf16.gmra.mxu0 %v3221
          %v3307 = vpop.f32.mrf.mxu0
          %v3308 = vadd.f32 %v3259, %v3307
          %v3309 = vpop.f32.mrf.mxu0
          %v3310 = vadd.f32 %v3261, %v3309
          %3311 = vmatmul.bf16.gmra.mxu0 %v3222
          %v3312 = vpop.f32.mrf.mxu0
          %v3313 = vadd.f32 %v3264, %v3312
          %v3314 = vpop.f32.mrf.mxu0
          %v3315 = vadd.f32 %v3266, %v3314
          %3316 = vmatmul.bf16.gmra.mxu0 %v3223
          %v3317 = vpop.f32.mrf.mxu0
          %v3318 = vadd.f32 %v3269, %v3317
          %v3319 = vpop.f32.mrf.mxu0
          %v3320 = vadd.f32 %v3271, %v3319
          %3321 = vdwg.mxu0
          %3322 = vst [vmem:[%s435] sm:$0xff] %v3283
          %3323 = vst [vmem:[%s435 + $0x8] sm:$0xff] %v3285
          %3324 = vst [vmem:[%s435 + $0x10] sm:$0xff] %v3288
          %3325 = vst [vmem:[%s435 + $0x18] sm:$0xff] %v3290
          %3326 = vst [vmem:[%s435 + $0x20] sm:$0xff] %v3293
          %3327 = vst [vmem:[%s435 + $0x28] sm:$0xff] %v3295
          %3328 = vst [vmem:[%s435 + $0x30] sm:$0xff] %v3298
          %3329 = vst [vmem:[%s435 + $0x38] sm:$0xff] %v3300
          %3330 = vst [vmem:[%s435 + $0x40] sm:$0xff] %v3303
          %3331 = vst [vmem:[%s435 + $0x48] sm:$0xff] %v3305
          %3332 = vst [vmem:[%s435 + $0x50] sm:$0xff] %v3308
          %3333 = vst [vmem:[%s435 + $0x58] sm:$0xff] %v3310
          %3334 = vst [vmem:[%s435 + $0x60] sm:$0xff] %v3313
          %3335 = vst [vmem:[%s435 + $0x68] sm:$0xff] %v3315
          %3336 = vst [vmem:[%s435 + $0x70] sm:$0xff] %v3318
          %3337 = vst [vmem:[%s435 + $0x78] sm:$0xff] %v3320
        $region68: #{tpu_custom_call.1} parent=43 // pred_fallthru
          _
        %s3338 = sand.u32 %s205, 1
        %s3339 = scalar_lea.sflag [#allocation6], %s3338
        %s3340 = sand.u32 %s205, 1
        %s3341 = smul.addr %s3340, 128
        %s3342 = scalar_lea.vmem [#allocation12], %s3341
        // Predicated region
        $region69: #{tpu_custom_call.1} parent=43 // pred_check
          %p3343 = pneg %p215
        $region70: #{tpu_custom_call.1} parent=43 // pred_check_branch
          %3345 = sbr.rel (%p3343) target = $region72
        $region71: #{tpu_custom_call.1} parent=43 // pred_region
          %3347 = vsyncadd %s3339, 0
          %s3348 = smul.addr %s33, 16
          %s3349 = smul.addr %s3348, 8
          %s3350 = scalar_lea.hbm %s6, %s3349
          %s3351 = sshll.u32 %s3342, 4
          %s3352 = int_to_ptr.vmem [resolvable:$true] %s3351
          %s3353 = sshll.u32 %s3350, 4
          %s3354 = int_to_ptr.hbm [resolvable:$true] %s3353
          %3359 = dma.vmem_to_hbm [thread:$0]  %s3352, 2048, %s3354, %s3339, 128, 128, 8
        $region72: #{tpu_custom_call.1} parent=43 // pred_fallthru
          _
      $region44: #{tpu_custom_call.1} parent=5 // pred_fallthru
        _
      %p3360 = scmp.le.s32.totalorder 2, %s24
      // Predicated region
      $region73: #{tpu_custom_call.1} parent=5 // pred_check
        %p3361 = pneg %p3360
      $region74: #{tpu_custom_call.1} parent=5 // pred_check_branch
        %3363 = sbr.rel (%p3361) target = $region76
      $region75: #{tpu_custom_call.1} parent=5 // pred_region
        %s3364 = ssub.s32 %s24, 2
        // Predicated region
        $region77: #{tpu_custom_call.1} parent=75 // pred_check
          %p3365 = pneg %p221
        $region78: #{tpu_custom_call.1} parent=75 // pred_check_branch
          %3367 = sbr.rel (%p3365) target = $region80
        $region79: #{tpu_custom_call.1} parent=75 // pred_region
          %s3368 = sand.u32 %s206, 1
          %s3369 = scalar_lea.sflag [#allocation6], %s3368
          %s3370 = sand.u32 %s206, 1
          %s3371 = smul.addr %s3370, 128
          %s3372 = scalar_lea.vmem [#allocation12], %s3371
          %3374 = dma.done %s3369, 2048
        $region80: #{tpu_custom_call.1} parent=75 // pred_fallthru
          _
      $region76: #{tpu_custom_call.1} parent=5 // pred_fallthru
        _
    $region6: #{tpu_custom_call.1} parent=1 // loop_footer
      %s28 = sadd.s32 1, %s24
    $region7: #{tpu_custom_call.1} parent=1 // loop_footer_branch
      %23 = sbr.rel target = $region3
    $region8: #{tpu_custom_call.1} parent=1 // loop_exit
      _
    %3375 = vsyncpa [#allocation5], 1
    %s3376 = scalar_lea.sflag [#allocation5], 1
    %3377 = vsyncpa %s3376, 1
    %3378 = vsyncpa [#allocation8], 1
    %s3379 = scalar_lea.sflag [#allocation8], 1
    %3380 = vsyncpa %s3379, 1
    %3381 = vsyncpa [#allocation11], 1
    %s3382 = scalar_lea.sflag [#allocation11], 1
    %3383 = vsyncpa %s3382, 1
    %3384 = vsyncpa [#allocation6], 1
    %s3385 = scalar_lea.sflag [#allocation6], 1
    %3386 = vsyncpa %s3385, 1

</llo_original>
